<compile_context>
chip_gen: v6e
topology: v6e:2x2x1
jax: 0.10.0
libtpu: 0.0.40
codegen_flags: <defaults>
</compile_context>

<pallas_src>
import math
from functools import partial

import jax
import jax.numpy as jnp
import numpy as np
from jax.experimental import pallas as pl
from jax.experimental.pallas import tpu as pltpu


def conv_block_kernel(patches_ref, w_fused_ref, pvec_ref, w_fc1_ref, w_fc2_ref,
                      b_sa_ref, o_ref, *, nb, H, W, lane_dense_out):
    # patches_ref : (nb, H*W, 9*Cin) bf16   wrapper-built im2col patches
    # w_fused     : (9*Cin, Cout) bf16      depthwise x pointwise x BN1-scale fused weight
    # pvec        : (3, Cout) f32           [fused bias (incl. BN1 shift), BN2 scale, BN2 shift]
    # w_fc1       : (Cout, Cr), w_fc2 : (Cr, Cout)   channel-attention MLP (no bias)
    # b_sa        : (2*7*W, W) f32          banded 7x7 spatial-attention conv weight
    # o_ref       : (nb, H, W*Cout) lane-dense slab, or (nb, H, W, Cout) fallback
    Cout = pvec_ref.shape[1]
    K = patches_ref.shape[-1]
    HW = H * W

    # ---- fused depthwise/pointwise/BN1 matmul (bf16 operands, f32 accum) ----
    patches = patches_ref[...].reshape(nb * HW, K)
    y = jnp.dot(patches, w_fused_ref[...], preferred_element_type=jnp.float32)
    y = jnp.maximum(y + pvec_ref[0], 0.0)                  # (nb*HW, Cout), ReLU

    # ---- ChannelAttention: avg & max rows through one shared MLP pass -------
    y3 = y.reshape(nb, HW, Cout)
    avg_ch = jnp.mean(y3, axis=1)                          # (nb, Cout)
    max_ch = jnp.max(y3, axis=1)                           # (nb, Cout)
    stacked = jnp.concatenate([avg_ch, max_ch], axis=0)    # (2*nb, Cout)
    hidden = jnp.maximum(
        jnp.dot(stacked, w_fc1_ref[...], preferred_element_type=jnp.float32), 0.0)
    fc_out = jnp.dot(hidden, w_fc2_ref[...], preferred_element_type=jnp.float32)
    ca = jax.nn.sigmoid(fc_out[:nb] + fc_out[nb:])         # (nb, Cout)
    y3 = y3 * ca[:, None, :]
    y4 = y3.reshape(nb, H, W, Cout)

    # ---- SpatialAttention: 7x7 conv over [avg_c, max_c] as ONE matmul -------
    avg_sp = jnp.mean(y4, axis=-1)                         # (nb, H, W) -- W on lanes
    max_sp = jnp.max(y4, axis=-1)                          # (nb, H, W)

    zr = jnp.zeros((nb, 3, W), jnp.float32)                # h-padding only; column
    pa = jnp.concatenate([zr, avg_sp, zr], axis=1)         # padding is folded into b_sa
    pm = jnp.concatenate([zr, max_sp, zr], axis=1)         # (nb, H+6, W)
    slabs = ([pa[:, dy:dy + H, :] for dy in range(7)] +
             [pm[:, dy:dy + H, :] for dy in range(7)])     # order: avg dy0..6, max dy0..6
    rows = jnp.concatenate(slabs, axis=-1).reshape(nb * H, 14 * W)
    conv = jnp.dot(rows, b_sa_ref[...], preferred_element_type=jnp.float32)  # (nb*H, W)
    sa = jax.nn.sigmoid(conv).reshape(nb, H, W)
    y4 = y4 * sa[..., None]

    # ---- BN2 + ReLU + store --------------------------------------------------
    out = jnp.maximum(y4 * pvec_ref[1] + pvec_ref[2], 0.0)  # (nb, H, W, Cout)
    if lane_dense_out:
        o_ref[...] = out.reshape(nb, H, W * Cout).astype(o_ref.dtype)
    else:
        o_ref[...] = out.astype(o_ref.dtype)


def _pallas_forward(patches, w_fused, pvec, w_fc1, w_fc2, b_sa, *,
                    num_steps, nb, H, W, Cin, Cout, Cr, lane_dense_out):
    K = 9 * Cin
    if lane_dense_out:
        out_shape = jax.ShapeDtypeStruct((num_steps * nb, H, W * Cout), jnp.float32)
        out_spec = pl.BlockSpec((nb, H, W * Cout), lambda g: (g, 0, 0))
    else:
        out_shape = jax.ShapeDtypeStruct((num_steps * nb, H, W, Cout), jnp.float32)
        out_spec = pl.BlockSpec((nb, H, W, Cout), lambda g: (g, 0, 0, 0))

    grid_spec = pltpu.PrefetchScalarGridSpec(
        num_scalar_prefetch=0,
        grid=(num_steps,),
        in_specs=[
            pl.BlockSpec((nb, H * W, K), lambda g: (g, 0, 0)),      # bf16 im2col patches
            pl.BlockSpec((K, Cout), lambda g: (0, 0)),              # fused conv weight (bf16)
            pl.BlockSpec((3, Cout), lambda g: (0, 0)),              # packed per-channel params
            pl.BlockSpec((Cout, Cr), lambda g: (0, 0)),             # channel-attn fc1
            pl.BlockSpec((Cr, Cout), lambda g: (0, 0)),             # channel-attn fc2
            pl.BlockSpec((14 * W, W), lambda g: (0, 0)),            # banded 7x7 SA weight
        ],
        out_specs=out_spec,
    )

    out = pl.pallas_call(
        partial(conv_block_kernel, nb=nb, H=H, W=W, lane_dense_out=lane_dense_out),
        out_shape=out_shape,
        grid_spec=grid_spec,
        compiler_params=pltpu.CompilerParams(
            dimension_semantics=("parallel",)),
    )(patches, w_fused, pvec, w_fc1, w_fc2, b_sa)
    return out.reshape(num_steps * nb, H, W, Cout)


def _tensorcores_per_device():
    """2 for megacore chips (v4/v5p/v7x: two TensorCores behind one JAX device), else 1."""
    try:
        kind = jax.devices()[0].device_kind.lower()
    except Exception:
        return 1
    if "lite" in kind or "v5e" in kind or "v6" in kind or "v2" in kind or "v3" in kind:
        return 1
    if "v4" in kind or "v5p" in kind or "v7" in kind or "tpu7" in kind:
        return 2
    return 1


# Per-shape cache: compiled lane-dense executable, or a jitted NHWC-store fallback.
_FWD_CACHE = {}


def _get_forward_fn(kwargs, args):
    key = tuple(sorted(kwargs.items()))
    fn = _FWD_CACHE.get(key)
    if fn is None:
        structs = tuple(jax.ShapeDtypeStruct(a.shape, a.dtype) for a in args)
        dense = jax.jit(partial(_pallas_forward, lane_dense_out=True, **kwargs))
        try:
            # One-time capability check: compile the lane-dense store path ahead
            # of time; the resulting executable is reused on every call.
            fn = dense.lower(*structs).compile()
        except Exception:
            # TODO(synk): some Mosaic versions reject the minor-dim-merging reshape
            # behind the lane-dense (W*Cout) store; decide once per shape and fall
            # back to the plain NHWC store instead of probing on every call.
            fn = jax.jit(partial(_pallas_forward, lane_dense_out=False, **kwargs))
        _FWD_CACHE[key] = fn
    return fn


def conv_block_forward(x_nhwc, params, num_steps=None):
    """x_nhwc: (N, H, W, Cin) float32. Returns (N, H, W, Cout) float32."""
    N, H, W, Cin = x_nhwc.shape
    Cout = params["w_pw"].shape[1]
    Cr = params["w_fc1"].shape[1]

    # Grid steps are a serial loop on single-TC chips (v5e/v6e): use 1 step there
    # so per-step overhead is paid once and the main matmul keeps all its rows.
    # Only split the batch over 2 steps when the chip has 2 TensorCores.
    if num_steps is None:
        num_steps = 2 if (N >= 2 and _tensorcores_per_device() >= 2) else 1
    nb = -(-N // num_steps)
    n_pad = num_steps * nb
    if n_pad != N:
        x_nhwc = jnp.concatenate(
            [x_nhwc, jnp.zeros((n_pad - N, H, W, Cin), x_nhwc.dtype)], axis=0)

    # ---- lane-contiguous im2col patches built by XLA in the wrapper ---------
    # column layout: k*Cin + c with k = dy*3 + dx (matches w_fused row order).
    # bf16 halves the kernel's input DMA; all arithmetic on it is MXU-only.
    xpad = jnp.pad(x_nhwc, ((0, 0), (1, 1), (1, 1), (0, 0)))
    patches = jnp.concatenate(
        [xpad[:, dy:dy + H, dx:dx + W, :] for dy in range(3) for dx in range(3)],
        axis=-1)                                            # (n_pad, H, W, 9*Cin)
    patches = patches.reshape(n_pad, H * W, 9 * Cin).astype(jnp.bfloat16)

    # ---- fold depthwise + pointwise + BN1 into one matmul weight ------------
    # W_fused[k*Cin + c, o] = w_dw[k, c] * w_pw[c, o] * s1[o],  k = dy*3 + dx
    w_dw, b_dw = params["w_dw"], params["b_dw"]
    w_pw, b_pw = params["w_pw"], params["b_pw"]
    s1, t1 = params["s1"], params["t1"]
    w_fused = (w_dw[:, :, None] * w_pw[None, :, :]).reshape(9 * Cin, Cout)
    w_fused = (w_fused * s1).astype(jnp.bfloat16)           # bf16-native MXU operand
    b_fused = (b_dw @ w_pw + b_pw) * s1 + t1                # (1, Cout), f32
    pvec = jnp.concatenate([b_fused, params["s2"], params["t2"]], axis=0)  # (3, Cout)

    # ---- 7x7 spatial-attention conv as ONE banded matmul weight -------------
    # b_sa[(c*7+dy)*W + j, w] = w_sa[dy*7 + (j-w+3), c]  for |j - w| <= 3, else 0
    # (column zero-padding is absorbed into the band; only h-padding is in-kernel)
    shift = np.zeros((7, W, W), np.float32)
    for dx in range(7):
        for w in range(W):
            j = w + dx - 3
            if 0 <= j < W:
                shift[dx, j, w] = 1.0
    w_sa_cyd = jnp.transpose(params["w_sa"].reshape(7, 7, 2), (2, 0, 1))   # (2,7,7)
    b_sa = jnp.einsum("cyd,djw->cyjw", w_sa_cyd, jnp.asarray(shift))       # (2,7,W,W)
    b_sa = b_sa.reshape(2 * 7 * W, W)                                      # (14*W, W)

    kwargs = dict(num_steps=num_steps, nb=nb, H=H, W=W, Cin=Cin, Cout=Cout, Cr=Cr)
    args = (patches, w_fused, pvec, params["w_fc1"], params["w_fc2"], b_sa)
    fwd = _get_forward_fn(kwargs, args)
    out = fwd(*args)                                        # async; no host sync here
    return out[:N]


def init_params(key, Cin, Cout):
    """Deterministic synthetic parameters.

    Layout contracts vs. the PyTorch module (so real torch weights could be
    mapped without silent mismatches):
      * depthwise Conv2d(Cin,Cin,3,groups=Cin): torch (Cin,1,3,3) -> w_dw[k, c],
        tap order k = dy*3 + dx.
      * pointwise Conv2d(Cin,Cout,1): torch (Cout,Cin,1,1) -> w_pw[c, o] (transposed).
      * ChannelAttention fc Conv2d(Cout,Cr,1)/Conv2d(Cr,Cout,1), no bias:
        torch (Cr,Cout,1,1)/(Cout,Cr,1,1) -> w_fc1[o, r] / w_fc2[r, o].
      * SpatialAttention Conv2d(2,1,7,pad=3,no bias): torch (1,2,7,7) ->
        w_sa[k, c], k = dy*7 + dx, c: 0 = avg map, 1 = max map.
      * BatchNorm2d(Cout) x2: eval mode, running stats folded into
        scale = gamma/sqrt(var+eps), shift = beta - mean*scale.
    """
    Cr = max(Cout // 16, 1)                   # module hardcodes in_planes // 16
    ks = jax.random.split(key, 7)
    eps = 1e-5

    params = {
        "w_dw": jax.random.normal(ks[0], (9, Cin), jnp.float32) / 3.0,
        "b_dw": jax.random.normal(ks[1], (1, Cin), jnp.float32) * 0.1,
        "w_pw": jax.random.normal(ks[2], (Cin, Cout), jnp.float32) / math.sqrt(Cin),
        "b_pw": jax.random.normal(ks[3], (1, Cout), jnp.float32) * 0.1,
        "w_fc1": jax.random.normal(ks[4], (Cout, Cr), jnp.float32) / math.sqrt(Cout),
        "w_fc2": jax.random.normal(ks[5], (Cr, Cout), jnp.float32) / math.sqrt(Cr),
        "w_sa": jax.random.normal(ks[6], (49, 2), jnp.float32) / 7.0,
    }

    # Eval-mode BatchNorm with non-trivial (deterministic) running stats so the
    # scale/shift folding is actually exercised by the reference check.
    def bn_fold(phase):
        c = jnp.arange(Cout, dtype=jnp.float32)[None, :]
        gamma = 1.0 + 0.1 * jnp.sin(c + phase)
        beta = 0.1 * jnp.cos(c + phase)
        mean = 0.05 * jnp.sin(2.0 * c + phase)
        var = 1.0 + 0.1 * jnp.cos(c - phase) ** 2
        scale = gamma / jnp.sqrt(var + eps)
        return scale, beta - mean * scale

    params["s1"], params["t1"] = bn_fold(0.0)
    params["s2"], params["t2"] = bn_fold(1.0)
    return params


def conv_block_reference(x_nhwc, params):
    """Pure-JAX float32 reference used to validate the fused-weight construction."""
    N, H, W, Cin = x_nhwc.shape
    Cout = params["w_pw"].shape[1]
    dn = ("NHWC", "HWIO", "NHWC")

    w_dw = params["w_dw"].reshape(3, 3, 1, Cin)          # [dy, dx, 1, c]
    y = jax.lax.conv_general_dilated(x_nhwc, w_dw, (1, 1), "SAME",
                                     dimension_numbers=dn,
                                     feature_group_count=Cin)
    y = y + params["b_dw"].reshape(1, 1, 1, Cin)
    y = jnp.einsum("nhwc,co->nhwo", y, params["w_pw"]) + params["b_pw"].reshape(1, 1, 1, Cout)
    y = jnp.maximum(y * params["s1"].reshape(1, 1, 1, Cout)
                    + params["t1"].reshape(1, 1, 1, Cout), 0.0)

    avg = jnp.mean(y, axis=(1, 2))
    mx = jnp.max(y, axis=(1, 2))
    fc = lambda v: jnp.maximum(v @ params["w_fc1"], 0.0) @ params["w_fc2"]
    y = y * jax.nn.sigmoid(fc(avg) + fc(mx))[:, None, None, :]

    pooled = jnp.stack([jnp.mean(y, axis=-1), jnp.max(y, axis=-1)], axis=-1)  # (N,H,W,2)
    w_sa = params["w_sa"].reshape(7, 7, 2, 1)            # [dy, dx, c, 1]
    sa = jax.lax.conv_general_dilated(pooled, w_sa, (1, 1), "SAME",
                                      dimension_numbers=dn)
    y = y * jax.nn.sigmoid(sa)
    return jnp.maximum(y * params["s2"].reshape(1, 1, 1, Cout)
                       + params["t2"].reshape(1, 1, 1, Cout), 0.0)


if __name__ == "__main__":
    key = jax.random.PRNGKey(0)
    kx, kp = jax.random.split(key)

    # PyTorch-convention input: NCHW
    N, Cin, H, W = 2, 4, 16, 16
    Cout = 32
    x_nchw = jax.random.normal(kx, (N, Cin, H, W), jnp.float32)
    params = init_params(kp, Cin, Cout)

    # glue: NCHW -> NHWC (channels-last puts channels on the 128-lane axis)
    x_nhwc = jnp.transpose(x_nchw, (0, 2, 3, 1))
    out_nhwc = conv_block_forward(x_nhwc, params)
    out_nchw = jnp.transpose(out_nhwc, (0, 3, 1, 2))
    out_nchw = jax.block_until_ready(out_nchw)

    assert out_nchw.shape == (N, Cout, H, W)
    assert bool(jnp.all(jnp.isfinite(out_nchw)))

    # Validate the fused dw+pw+BN1 weights and attention plumbing against a
    # pure-JAX f32 reference (the kernel's conv matmul runs in bf16, hence the
    # tolerance; layout/ordering bugs would produce O(1) errors).
    ref_nhwc = conv_block_reference(x_nhwc, params)
    max_err = float(jnp.max(jnp.abs(out_nhwc - ref_nhwc)))
    assert max_err < 0.15, f"kernel deviates from reference: max|err|={max_err}"

    print("KERNEL_OK")
</pallas_src>

<mosaic_0001>
module attributes {stable_mosaic.version = 11 : i64} {
  func.func @conv_block_kernel(%arg0: i32, %arg1: memref<2x256x36xbf16, #tpu.memory_space<vmem>>, %arg2: memref<36x32xbf16, #tpu.memory_space<vmem>>, %arg3: memref<3x32xf32, #tpu.memory_space<vmem>>, %arg4: memref<32x2xf32, #tpu.memory_space<vmem>>, %arg5: memref<2x32xf32, #tpu.memory_space<vmem>>, %arg6: memref<224x16xf32, #tpu.memory_space<vmem>>, %arg7: memref<2x16x16x32xf32, #tpu.memory_space<vmem>>) attributes {dimension_semantics = [#tpu.dimension_semantics<parallel>], iteration_bounds = array<i64: 1>, scalar_prefetch = 0 : i64, scratch_operands = 0 : i64, tpu.core_type = #tpu.core_type<tc>, window_params = [{transform_indices = @transform_0, window_bounds = array<i64: 2, 256, 36>}, {pipeline_mode = #tpu.pipeline_mode<synchronous>, transform_indices = @transform_1, window_bounds = array<i64: 36, 32>}, {pipeline_mode = #tpu.pipeline_mode<synchronous>, transform_indices = @transform_2, window_bounds = array<i64: 3, 32>}, {pipeline_mode = #tpu.pipeline_mode<synchronous>, transform_indices = @transform_3, window_bounds = array<i64: 32, 2>}, {pipeline_mode = #tpu.pipeline_mode<synchronous>, transform_indices = @transform_4, window_bounds = array<i64: 2, 32>}, {pipeline_mode = #tpu.pipeline_mode<synchronous>, transform_indices = @transform_5, window_bounds = array<i64: 224, 16>}, {transform_indices = @transform_6, window_bounds = array<i64: 2, 16, 16, 32>}]} {
    %c0 = arith.constant 0 : index
    %c0_0 = arith.constant 0 : index
    %c0_1 = arith.constant 0 : index
    %0 = vector.load %arg1[%c0, %c0_0, %c0_1] : memref<2x256x36xbf16, #tpu.memory_space<vmem>>, vector<2x256x36xbf16>
    %1 = vector.shape_cast %0 : vector<2x256x36xbf16> to vector<512x36xbf16>
    %c0_2 = arith.constant 0 : index
    %c0_3 = arith.constant 0 : index
    %2 = vector.load %arg2[%c0_2, %c0_3] : memref<36x32xbf16, #tpu.memory_space<vmem>>, vector<36x32xbf16>
    %cst = arith.constant dense<0.000000e+00> : vector<512x32xf32>
    %3 = tpu.matmul %1, %2, %cst {dimension_numbers = #tpu.dot_dimension_numbers<[1], [0], [0], [1], [0, 0, 1, 1], [], []>} : vector<512x36xbf16>, vector<36x32xbf16>, vector<512x32xf32> -> vector<512x32xf32>
    %c0_4 = arith.constant 0 : index
    %c0_5 = arith.constant 0 : index
    %4 = vector.load %arg3[%c0_4, %c0_5] : memref<3x32xf32, #tpu.memory_space<vmem>>, vector<1x32xf32>
    %5 = vector.shape_cast %4 : vector<1x32xf32> to vector<32xf32>
    %6 = vector.shape_cast %5 : vector<32xf32> to vector<1x32xf32>
    %7 = vector.broadcast %6 : vector<1x32xf32> to vector<512x32xf32>
    %8 = arith.addf %3, %7 : vector<512x32xf32>
    %cst_6 = arith.constant 0.000000e+00 : f32
    %9 = vector.broadcast %cst_6 : f32 to vector<512x32xf32>
    %10 = arith.maximumf %8, %9 : vector<512x32xf32>
    %11 = vector.shape_cast %10 : vector<512x32xf32> to vector<2x256x32xf32>
    %cst_7 = arith.constant dense<0.000000e+00> : vector<2x32xf32>
    %12 = vector.multi_reduction <add>, %11, %cst_7 [1] : vector<2x256x32xf32> to vector<2x32xf32>
    %cst_8 = arith.constant 2.560000e+02 : f32
    %13 = vector.broadcast %cst_8 : f32 to vector<2x32xf32>
    %14 = arith.divf %12, %13 : vector<2x32xf32>
    %cst_9 = arith.constant dense<0xFF800000> : vector<2x32xf32>
    %15 = vector.multi_reduction <maximumf>, %11, %cst_9 [1] : vector<2x256x32xf32> to vector<2x32xf32>
    %16 = tpu.concatenate %14, %15 in 0 : vector<2x32xf32>, vector<2x32xf32> -> vector<4x32xf32>
    %c0_10 = arith.constant 0 : index
    %c0_11 = arith.constant 0 : index
    %17 = vector.load %arg4[%c0_10, %c0_11] : memref<32x2xf32, #tpu.memory_space<vmem>>, vector<32x2xf32>
    %cst_12 = arith.constant dense<0.000000e+00> : vector<4x2xf32>
    %18 = tpu.matmul %16, %17, %cst_12 {dimension_numbers = #tpu.dot_dimension_numbers<[1], [0], [0], [1], [0, 0, 1, 1], [], []>} : vector<4x32xf32>, vector<32x2xf32>, vector<4x2xf32> -> vector<4x2xf32>
    %cst_13 = arith.constant 0.000000e+00 : f32
    %19 = vector.broadcast %cst_13 : f32 to vector<4x2xf32>
    %20 = arith.maximumf %18, %19 : vector<4x2xf32>
    %c0_14 = arith.constant 0 : index
    %c0_15 = arith.constant 0 : index
    %21 = vector.load %arg5[%c0_14, %c0_15] : memref<2x32xf32, #tpu.memory_space<vmem>>, vector<2x32xf32>
    %cst_16 = arith.constant dense<0.000000e+00> : vector<4x32xf32>
    %22 = tpu.matmul %20, %21, %cst_16 {dimension_numbers = #tpu.dot_dimension_numbers<[1], [0], [0], [1], [0, 0, 1, 1], [], []>} : vector<4x2xf32>, vector<2x32xf32>, vector<4x32xf32> -> vector<4x32xf32>
    %23 = vector.extract_strided_slice %22 {offsets = [0, 0], sizes = [2, 32], strides = [1, 1]} : vector<4x32xf32> to vector<2x32xf32>
    %24 = vector.extract_strided_slice %22 {offsets = [2, 0], sizes = [2, 32], strides = [1, 1]} : vector<4x32xf32> to vector<2x32xf32>
    %25 = arith.addf %23, %24 : vector<2x32xf32>
    %26 = arith.negf %25 : vector<2x32xf32>
    %27 = math.exp %26 : vector<2x32xf32>
    %cst_17 = arith.constant 1.000000e+00 : f32
    %28 = vector.broadcast %cst_17 : f32 to vector<2x32xf32>
    %29 = arith.addf %28, %27 : vector<2x32xf32>
    %30 = arith.divf %28, %29 : vector<2x32xf32>
    %31 = vector.shape_cast %30 : vector<2x32xf32> to vector<2x1x32xf32>
    %32 = vector.broadcast %31 : vector<2x1x32xf32> to vector<2x256x32xf32>
    %33 = arith.mulf %11, %32 : vector<2x256x32xf32>
    %34 = vector.shape_cast %33 : vector<2x256x32xf32> to vector<2x16x16x32xf32>
    %cst_18 = arith.constant dense<0.000000e+00> : vector<2x16x16xf32>
    %35 = vector.multi_reduction <add>, %34, %cst_18 [3] : vector<2x16x16x32xf32> to vector<2x16x16xf32>
    %cst_19 = arith.constant 3.200000e+01 : f32
    %36 = vector.broadcast %cst_19 : f32 to vector<2x16x16xf32>
    %37 = arith.divf %35, %36 : vector<2x16x16xf32>
    %cst_20 = arith.constant dense<0xFF800000> : vector<2x16x16xf32>
    %38 = vector.multi_reduction <maximumf>, %34, %cst_20 [3] : vector<2x16x16x32xf32> to vector<2x16x16xf32>
    %cst_21 = arith.constant 0.000000e+00 : f32
    %39 = vector.broadcast %cst_21 : f32 to vector<2x3x16xf32>
    %40 = tpu.concatenate %39, %37, %39 in 1 : vector<2x3x16xf32>, vector<2x16x16xf32>, vector<2x3x16xf32> -> vector<2x22x16xf32>
    %41 = tpu.concatenate %39, %38, %39 in 1 : vector<2x3x16xf32>, vector<2x16x16xf32>, vector<2x3x16xf32> -> vector<2x22x16xf32>
    %42 = vector.extract_strided_slice %40 {offsets = [0, 0, 0], sizes = [2, 16, 16], strides = [1, 1, 1]} : vector<2x22x16xf32> to vector<2x16x16xf32>
    %43 = vector.extract_strided_slice %40 {offsets = [0, 1, 0], sizes = [2, 16, 16], strides = [1, 1, 1]} : vector<2x22x16xf32> to vector<2x16x16xf32>
    %44 = vector.extract_strided_slice %40 {offsets = [0, 2, 0], sizes = [2, 16, 16], strides = [1, 1, 1]} : vector<2x22x16xf32> to vector<2x16x16xf32>
    %45 = vector.extract_strided_slice %40 {offsets = [0, 3, 0], sizes = [2, 16, 16], strides = [1, 1, 1]} : vector<2x22x16xf32> to vector<2x16x16xf32>
    %46 = vector.extract_strided_slice %40 {offsets = [0, 4, 0], sizes = [2, 16, 16], strides = [1, 1, 1]} : vector<2x22x16xf32> to vector<2x16x16xf32>
    %47 = vector.extract_strided_slice %40 {offsets = [0, 5, 0], sizes = [2, 16, 16], strides = [1, 1, 1]} : vector<2x22x16xf32> to vector<2x16x16xf32>
    %48 = vector.extract_strided_slice %40 {offsets = [0, 6, 0], sizes = [2, 16, 16], strides = [1, 1, 1]} : vector<2x22x16xf32> to vector<2x16x16xf32>
    %49 = vector.extract_strided_slice %41 {offsets = [0, 0, 0], sizes = [2, 16, 16], strides = [1, 1, 1]} : vector<2x22x16xf32> to vector<2x16x16xf32>
    %50 = vector.extract_strided_slice %41 {offsets = [0, 1, 0], sizes = [2, 16, 16], strides = [1, 1, 1]} : vector<2x22x16xf32> to vector<2x16x16xf32>
    %51 = vector.extract_strided_slice %41 {offsets = [0, 2, 0], sizes = [2, 16, 16], strides = [1, 1, 1]} : vector<2x22x16xf32> to vector<2x16x16xf32>
    %52 = vector.extract_strided_slice %41 {offsets = [0, 3, 0], sizes = [2, 16, 16], strides = [1, 1, 1]} : vector<2x22x16xf32> to vector<2x16x16xf32>
    %53 = vector.extract_strided_slice %41 {offsets = [0, 4, 0], sizes = [2, 16, 16], strides = [1, 1, 1]} : vector<2x22x16xf32> to vector<2x16x16xf32>
    %54 = vector.extract_strided_slice %41 {offsets = [0, 5, 0], sizes = [2, 16, 16], strides = [1, 1, 1]} : vector<2x22x16xf32> to vector<2x16x16xf32>
    %55 = vector.extract_strided_slice %41 {offsets = [0, 6, 0], sizes = [2, 16, 16], strides = [1, 1, 1]} : vector<2x22x16xf32> to vector<2x16x16xf32>
    %56 = tpu.concatenate %42, %43, %44, %45, %46, %47, %48, %49, %50, %51, %52, %53, %54, %55 in 2 : vector<2x16x16xf32>, vector<2x16x16xf32>, vector<2x16x16xf32>, vector<2x16x16xf32>, vector<2x16x16xf32>, vector<2x16x16xf32>, vector<2x16x16xf32>, vector<2x16x16xf32>, vector<2x16x16xf32>, vector<2x16x16xf32>, vector<2x16x16xf32>, vector<2x16x16xf32>, vector<2x16x16xf32>, vector<2x16x16xf32> -> vector<2x16x224xf32>
    %57 = vector.shape_cast %56 : vector<2x16x224xf32> to vector<32x224xf32>
    %c0_22 = arith.constant 0 : index
    %c0_23 = arith.constant 0 : index
    %58 = vector.load %arg6[%c0_22, %c0_23] : memref<224x16xf32, #tpu.memory_space<vmem>>, vector<224x16xf32>
    %cst_24 = arith.constant dense<0.000000e+00> : vector<32x16xf32>
    %59 = tpu.matmul %57, %58, %cst_24 {dimension_numbers = #tpu.dot_dimension_numbers<[1], [0], [0], [1], [0, 0, 1, 1], [], []>} : vector<32x224xf32>, vector<224x16xf32>, vector<32x16xf32> -> vector<32x16xf32>
    %60 = arith.negf %59 : vector<32x16xf32>
    %61 = math.exp %60 : vector<32x16xf32>
    %cst_25 = arith.constant 1.000000e+00 : f32
    %62 = vector.broadcast %cst_25 : f32 to vector<32x16xf32>
    %63 = arith.addf %62, %61 : vector<32x16xf32>
    %64 = arith.divf %62, %63 : vector<32x16xf32>
    %65 = vector.shape_cast %64 : vector<32x16xf32> to vector<2x16x16xf32>
    %66 = vector.shape_cast %65 : vector<2x16x16xf32> to vector<2x16x16x1xf32>
    %67 = vector.broadcast %66 : vector<2x16x16x1xf32> to vector<2x16x16x32xf32>
    %68 = arith.mulf %34, %67 : vector<2x16x16x32xf32>
    %c1 = arith.constant 1 : index
    %c0_26 = arith.constant 0 : index
    %69 = vector.load %arg3[%c1, %c0_26] : memref<3x32xf32, #tpu.memory_space<vmem>>, vector<1x32xf32>
    %70 = vector.shape_cast %69 : vector<1x32xf32> to vector<32xf32>
    %71 = vector.shape_cast %70 : vector<32xf32> to vector<1x1x1x32xf32>
    %72 = vector.broadcast %71 : vector<1x1x1x32xf32> to vector<2x16x16x32xf32>
    %73 = arith.mulf %68, %72 : vector<2x16x16x32xf32>
    %c2 = arith.constant 2 : index
    %c0_27 = arith.constant 0 : index
    %74 = vector.load %arg3[%c2, %c0_27] : memref<3x32xf32, #tpu.memory_space<vmem>>, vector<1x32xf32>
    %75 = vector.shape_cast %74 : vector<1x32xf32> to vector<32xf32>
    %76 = vector.shape_cast %75 : vector<32xf32> to vector<1x1x1x32xf32>
    %77 = vector.broadcast %76 : vector<1x1x1x32xf32> to vector<2x16x16x32xf32>
    %78 = arith.addf %73, %77 : vector<2x16x16x32xf32>
    %cst_28 = arith.constant 0.000000e+00 : f32
    %79 = vector.broadcast %cst_28 : f32 to vector<2x16x16x32xf32>
    %80 = arith.maximumf %78, %79 : vector<2x16x16x32xf32>
    %c0_29 = arith.constant 0 : index
    %c0_30 = arith.constant 0 : index
    %c0_31 = arith.constant 0 : index
    %c0_32 = arith.constant 0 : index
    %81 = vector.load %arg7[%c0_29, %c0_30, %c0_31, %c0_32] : memref<2x16x16x32xf32, #tpu.memory_space<vmem>>, vector<2x16x16x32xf32>
    tpu.vector_store %arg7[%c0_29, %c0_30, %c0_31, %c0_32], %80 {strides = array<i32>} : memref<2x16x16x32xf32, #tpu.memory_space<vmem>>, vector<2x16x16x32xf32>,
    return
  }
  func.func @transform_0(%arg0: i32) -> (i32, i32, i32) {
    %c0_i32 = arith.constant 0 : i32
    %c0_i32_0 = arith.constant 0 : i32
    %c0_i32_1 = arith.constant 0 : i32
    return %arg0, %c0_i32, %c0_i32_0 : i32, i32, i32
  }
  func.func @transform_1(%arg0: i32) -> (i32, i32) {
    %c0_i32 = arith.constant 0 : i32
    %c0_i32_0 = arith.constant 0 : i32
    %c0_i32_1 = arith.constant 0 : i32
    return %c0_i32, %c0_i32_0 : i32, i32
  }
  func.func @transform_2(%arg0: i32) -> (i32, i32) {
    %c0_i32 = arith.constant 0 : i32
    %c0_i32_0 = arith.constant 0 : i32
    %c0_i32_1 = arith.constant 0 : i32
    return %c0_i32, %c0_i32_0 : i32, i32
  }
  func.func @transform_3(%arg0: i32) -> (i32, i32) {
    %c0_i32 = arith.constant 0 : i32
    %c0_i32_0 = arith.constant 0 : i32
    %c0_i32_1 = arith.constant 0 : i32
    return %c0_i32, %c0_i32_0 : i32, i32
  }
  func.func @transform_4(%arg0: i32) -> (i32, i32) {
    %c0_i32 = arith.constant 0 : i32
    %c0_i32_0 = arith.constant 0 : i32
    %c0_i32_1 = arith.constant 0 : i32
    return %c0_i32, %c0_i32_0 : i32, i32
  }
  func.func @transform_5(%arg0: i32) -> (i32, i32) {
    %c0_i32 = arith.constant 0 : i32
    %c0_i32_0 = arith.constant 0 : i32
    %c0_i32_1 = arith.constant 0 : i32
    return %c0_i32, %c0_i32_0 : i32, i32
  }
  func.func @transform_6(%arg0: i32) -> (i32, i32, i32, i32) {
    %c0_i32 = arith.constant 0 : i32
    %c0_i32_0 = arith.constant 0 : i32
    %c0_i32_1 = arith.constant 0 : i32
    %c0_i32_2 = arith.constant 0 : i32
    return %arg0, %c0_i32, %c0_i32_0, %c0_i32_1 : i32, i32, i32, i32
  }
}

</mosaic_0001>

<llo_original>
// kernel: _pallas_forward.1
$region0: #{_pallas_forward.1}
  #allocation0 [shape = 'u32[]', space=smem, size = 0x4, offset = 0x4, fixed_abs, tag = 'smem constant byte address 0x4 - core index']
  #allocation1 [shape = 'u32[144,128]{1,0:T(1,128)}', space=vmem, size = 0x12000, scoped, tag = 'internal scratch']
  %s0 = inlined_call_operand.vmem [shape: bf16[2,256,36], index: 0, kind: input, shape index: {}]
  %s1 = inlined_call_operand.vmem [shape: bf16[36,32], index: 1, kind: input, shape index: {}]
  %s2 = inlined_call_operand.vmem [shape: f32[3,32], index: 2, kind: input, shape index: {}]
  %s3 = inlined_call_operand.vmem [shape: f32[32,2], index: 3, kind: input, shape index: {}]
  %s4 = inlined_call_operand.vmem [shape: f32[2,32], index: 4, kind: input, shape index: {}]
  %s5 = inlined_call_operand.vmem [shape: f32[224,16], index: 5, kind: input, shape index: {}]
  %s6 = inlined_call_operand.hbm [shape: f32[2,16,16,32], index: 6, kind: output, shape index: {}]
  %s7 = sld [smem:[#allocation0]]
  $region34: #{_pallas_forward.1} parent=0
    _
  %s9 = ssub.s32 1, %s7
  %s10 = scalar_select 0, %s9, %s7
  $region1: #{_pallas_forward.1} parent=0
    #allocation2 [shape = 'u8[262144]{0}', space=vmem, size = 0x40000, scoped, tag = 'output window, operand 0, single buffered']
    #allocation3 [shape = 's32[1]{0}', space=sflag, size = 0x4, scoped, tag = 'scoped memory for _pallas_forward.1']
    %11 = vsyncpa [#allocation3], 0
    // Predicated region
    $region2: #{_pallas_forward.1} parent=1 // pred_check
      _
    $region3: #{_pallas_forward.1} parent=1 // pred_check_branch
      %13 = sbr.rel (0) target = $region5
    $region4: #{_pallas_forward.1} parent=1 // pred_region
      _
    $region5: #{_pallas_forward.1} parent=1 // pred_fallthru
      _
    // Predicated region
    $region6: #{_pallas_forward.1} parent=1 // pred_check
      _
    $region7: #{_pallas_forward.1} parent=1 // pred_check_branch
      %15 = sbr.rel (0) target = $region9
    $region8: #{_pallas_forward.1} parent=1 // pred_region
      _
    $region9: #{_pallas_forward.1} parent=1 // pred_fallthru
      _
    // Predicated region
    $region10: #{_pallas_forward.1} parent=1 // pred_check
      _
    $region11: #{_pallas_forward.1} parent=1 // pred_check_branch
      %17 = sbr.rel (0) target = $region13
    $region12: #{_pallas_forward.1} parent=1 // pred_region
      _
    $region13: #{_pallas_forward.1} parent=1 // pred_fallthru
      _
    // Predicated region
    $region14: #{_pallas_forward.1} parent=1 // pred_check
      _
    $region15: #{_pallas_forward.1} parent=1 // pred_check_branch
      %19 = sbr.rel (0) target = $region17
    $region16: #{_pallas_forward.1} parent=1 // pred_region
      _
    $region17: #{_pallas_forward.1} parent=1 // pred_fallthru
      _
    // Predicated region
    $region18: #{_pallas_forward.1} parent=1 // pred_check
      _
    $region19: #{_pallas_forward.1} parent=1 // pred_check_branch
      %21 = sbr.rel (0) target = $region21
    $region20: #{_pallas_forward.1} parent=1 // pred_region
      _
    $region21: #{_pallas_forward.1} parent=1 // pred_fallthru
      _
    // Predicated region
    $region22: #{_pallas_forward.1} parent=1 // pred_check
      _
    $region23: #{_pallas_forward.1} parent=1 // pred_check_branch
      %23 = sbr.rel (0) target = $region25
    $region24: #{_pallas_forward.1} parent=1 // pred_region
      _
    $region25: #{_pallas_forward.1} parent=1 // pred_fallthru
      _
    %v25 = vld [vmem:[%s0] sm:$0xf]
    %v26 = vld [vmem:[%s0 + $0x4] sm:$0xf]
    %v27 = vld [vmem:[%s0 + $0x8] sm:$0xf]
    %v28 = vld [vmem:[%s0 + $0xc] sm:$0xf]
    %v29 = vld [vmem:[%s0 + $0x10] sm:$0xf]
    %v30 = vld [vmem:[%s0 + $0x14] sm:$0xf]
    %v31 = vld [vmem:[%s0 + $0x18] sm:$0xf]
    %v32 = vld [vmem:[%s0 + $0x1c] sm:$0xf]
    %v33 = vld [vmem:[%s0 + $0x20] sm:$0xf]
    %v34 = vld [vmem:[%s0 + $0x24] sm:$0xf]
    %v35 = vld [vmem:[%s0 + $0x28] sm:$0xf]
    %v36 = vld [vmem:[%s0 + $0x2c] sm:$0xf]
    %v37 = vld [vmem:[%s0 + $0x30] sm:$0xf]
    %v38 = vld [vmem:[%s0 + $0x34] sm:$0xf]
    %v39 = vld [vmem:[%s0 + $0x38] sm:$0xf]
    %v40 = vld [vmem:[%s0 + $0x3c] sm:$0xf]
    %v41 = vld [vmem:[%s0 + $0x40] sm:$0xf]
    %v42 = vld [vmem:[%s0 + $0x44] sm:$0xf]
    %v43 = vld [vmem:[%s0 + $0x48] sm:$0xf]
    %v44 = vld [vmem:[%s0 + $0x4c] sm:$0xf]
    %v45 = vld [vmem:[%s0 + $0x50] sm:$0xf]
    %v46 = vld [vmem:[%s0 + $0x54] sm:$0xf]
    %v47 = vld [vmem:[%s0 + $0x58] sm:$0xf]
    %v48 = vld [vmem:[%s0 + $0x5c] sm:$0xf]
    %v49 = vld [vmem:[%s0 + $0x60] sm:$0xf]
    %v50 = vld [vmem:[%s0 + $0x64] sm:$0xf]
    %v51 = vld [vmem:[%s0 + $0x68] sm:$0xf]
    %v52 = vld [vmem:[%s0 + $0x6c] sm:$0xf]
    %v53 = vld [vmem:[%s0 + $0x70] sm:$0xf]
    %v54 = vld [vmem:[%s0 + $0x74] sm:$0xf]
    %v55 = vld [vmem:[%s0 + $0x78] sm:$0xf]
    %v56 = vld [vmem:[%s0 + $0x7c] sm:$0xf]
    %v57 = vld [vmem:[%s0 + $0x80] sm:$0xf]
    %v58 = vld [vmem:[%s0 + $0x84] sm:$0xf]
    %v59 = vld [vmem:[%s0 + $0x88] sm:$0xf]
    %v60 = vld [vmem:[%s0 + $0x8c] sm:$0xf]
    %v61 = vld [vmem:[%s0 + $0x90] sm:$0xf]
    %v62 = vld [vmem:[%s0 + $0x94] sm:$0xf]
    %v63 = vld [vmem:[%s0 + $0x98] sm:$0xf]
    %v64 = vld [vmem:[%s0 + $0x9c] sm:$0xf]
    %v65 = vld [vmem:[%s0 + $0xa0] sm:$0xf]
    %v66 = vld [vmem:[%s0 + $0xa4] sm:$0xf]
    %v67 = vld [vmem:[%s0 + $0xa8] sm:$0xf]
    %v68 = vld [vmem:[%s0 + $0xac] sm:$0xf]
    %v69 = vld [vmem:[%s0 + $0xb0] sm:$0xf]
    %v70 = vld [vmem:[%s0 + $0xb4] sm:$0xf]
    %v71 = vld [vmem:[%s0 + $0xb8] sm:$0xf]
    %v72 = vld [vmem:[%s0 + $0xbc] sm:$0xf]
    %v73 = vld [vmem:[%s0 + $0xc0] sm:$0xf]
    %v74 = vld [vmem:[%s0 + $0xc4] sm:$0xf]
    %v75 = vld [vmem:[%s0 + $0xc8] sm:$0xf]
    %v76 = vld [vmem:[%s0 + $0xcc] sm:$0xf]
    %v77 = vld [vmem:[%s0 + $0xd0] sm:$0xf]
    %v78 = vld [vmem:[%s0 + $0xd4] sm:$0xf]
    %v79 = vld [vmem:[%s0 + $0xd8] sm:$0xf]
    %v80 = vld [vmem:[%s0 + $0xdc] sm:$0xf]
    %v81 = vld [vmem:[%s0 + $0xe0] sm:$0xf]
    %v82 = vld [vmem:[%s0 + $0xe4] sm:$0xf]
    %v83 = vld [vmem:[%s0 + $0xe8] sm:$0xf]
    %v84 = vld [vmem:[%s0 + $0xec] sm:$0xf]
    %v85 = vld [vmem:[%s0 + $0xf0] sm:$0xf]
    %v86 = vld [vmem:[%s0 + $0xf4] sm:$0xf]
    %v87 = vld [vmem:[%s0 + $0xf8] sm:$0xf]
    %v88 = vld [vmem:[%s0 + $0xfc] sm:$0xf]
    %v89 = vld [vmem:[%s1] sm:$0xf]
    %v90 = vld [vmem:[%s1 + $0x4] sm:$0xf]
    %v91 = vld [vmem:[%s1 + $0x8] sm:$0xf]
    %v92 = vld [vmem:[%s1 + $0xc] sm:$0xf]
    %v93 = vld [vmem:[%s1 + $0x10] sm:$0x3]
    %v94 = vld [vmem:[%s2] sm:$0x1]
    %v95 = vlaneseq
    %v96 = vshrl.u32 %v95, 7
    %v97 = vsub.s32 0, %v96
    %v98 = vrot.slane %v94, %v97
    %v163 = vunpack.c.l.b16 %v25
    %v164 = vunpack.c.l.b16 %v26
    %v165 = vunpack.c.l.b16 %v27
    %v166 = vunpack.c.l.b16 %v28
    %v167 = vunpack.c.l.b16 %v29
    %v168 = vunpack.c.l.b16 %v30
    %v169 = vunpack.c.l.b16 %v31
    %v170 = vunpack.c.l.b16 %v32
    %v171 = vunpack.c.l.b16 %v33
    %v172 = vunpack.c.l.b16 %v34
    %v173 = vunpack.c.l.b16 %v35
    %v174 = vunpack.c.l.b16 %v36
    %v175 = vunpack.c.l.b16 %v37
    %v176 = vunpack.c.l.b16 %v38
    %v177 = vunpack.c.l.b16 %v39
    %v178 = vunpack.c.l.b16 %v40
    %v179 = vunpack.c.l.b16 %v41
    %v180 = vunpack.c.l.b16 %v42
    %v181 = vunpack.c.l.b16 %v43
    %v182 = vunpack.c.l.b16 %v44
    %v183 = vunpack.c.l.b16 %v45
    %v184 = vunpack.c.l.b16 %v46
    %v185 = vunpack.c.l.b16 %v47
    %v186 = vunpack.c.l.b16 %v48
    %v187 = vunpack.c.l.b16 %v49
    %v188 = vunpack.c.l.b16 %v50
    %v189 = vunpack.c.l.b16 %v51
    %v190 = vunpack.c.l.b16 %v52
    %v191 = vunpack.c.l.b16 %v53
    %v192 = vunpack.c.l.b16 %v54
    %v193 = vunpack.c.l.b16 %v55
    %v194 = vunpack.c.l.b16 %v56
    %v195 = vunpack.c.l.b16 %v57
    %v196 = vunpack.c.l.b16 %v58
    %v197 = vunpack.c.l.b16 %v59
    %v198 = vunpack.c.l.b16 %v60
    %v199 = vunpack.c.l.b16 %v61
    %v200 = vunpack.c.l.b16 %v62
    %v201 = vunpack.c.l.b16 %v63
    %v202 = vunpack.c.l.b16 %v64
    %v203 = vunpack.c.l.b16 %v65
    %v204 = vunpack.c.l.b16 %v66
    %v205 = vunpack.c.l.b16 %v67
    %v206 = vunpack.c.l.b16 %v68
    %v207 = vunpack.c.l.b16 %v69
    %v208 = vunpack.c.l.b16 %v70
    %v209 = vunpack.c.l.b16 %v71
    %v210 = vunpack.c.l.b16 %v72
    %v211 = vunpack.c.l.b16 %v73
    %v212 = vunpack.c.l.b16 %v74
    %v213 = vunpack.c.l.b16 %v75
    %v214 = vunpack.c.l.b16 %v76
    %v215 = vunpack.c.l.b16 %v77
    %v216 = vunpack.c.l.b16 %v78
    %v217 = vunpack.c.l.b16 %v79
    %v218 = vunpack.c.l.b16 %v80
    %v219 = vunpack.c.l.b16 %v81
    %v220 = vunpack.c.l.b16 %v82
    %v221 = vunpack.c.l.b16 %v83
    %v222 = vunpack.c.l.b16 %v84
    %v223 = vunpack.c.l.b16 %v85
    %v224 = vunpack.c.l.b16 %v86
    %v225 = vunpack.c.l.b16 %v87
    %v226 = vunpack.c.l.b16 %v88
    %v227 = vpack.c.b16 %v164, %v163
    %v228 = vpack.c.b16 %v166, %v165
    %v229 = vpack.c.b16 %v168, %v167
    %v230 = vpack.c.b16 %v170, %v169
    %v231 = vpack.c.b16 %v172, %v171
    %v232 = vpack.c.b16 %v174, %v173
    %v233 = vpack.c.b16 %v176, %v175
    %v234 = vpack.c.b16 %v178, %v177
    %v235 = vpack.c.b16 %v180, %v179
    %v236 = vpack.c.b16 %v182, %v181
    %v237 = vpack.c.b16 %v184, %v183
    %v238 = vpack.c.b16 %v186, %v185
    %v239 = vpack.c.b16 %v188, %v187
    %v240 = vpack.c.b16 %v190, %v189
    %v241 = vpack.c.b16 %v192, %v191
    %v242 = vpack.c.b16 %v194, %v193
    %v243 = vpack.c.b16 %v196, %v195
    %v244 = vpack.c.b16 %v198, %v197
    %v245 = vpack.c.b16 %v200, %v199
    %v246 = vpack.c.b16 %v202, %v201
    %v247 = vpack.c.b16 %v204, %v203
    %v248 = vpack.c.b16 %v206, %v205
    %v249 = vpack.c.b16 %v208, %v207
    %v250 = vpack.c.b16 %v210, %v209
    %v251 = vpack.c.b16 %v212, %v211
    %v252 = vpack.c.b16 %v214, %v213
    %v253 = vpack.c.b16 %v216, %v215
    %v254 = vpack.c.b16 %v218, %v217
    %v255 = vpack.c.b16 %v220, %v219
    %v256 = vpack.c.b16 %v222, %v221
    %v257 = vpack.c.b16 %v224, %v223
    %v258 = vpack.c.b16 %v226, %v225
    %v264 = vunpack.c.l.b16 %v89
    %v265 = vunpack.c.l.b16 %v90
    %v266 = vunpack.c.l.b16 %v91
    %v267 = vunpack.c.l.b16 %v92
    %v268 = vunpack.c.l.b16 %v93
    %v269 = vpack.c.b16 %v265, %v264
    %v270 = vpack.c.b16 %v267, %v266
    %v271 = vpack.c.b16 %v268, %v268
    %vm274 = vcmask 293888
    %v276 = vsel %vm274, %v227, 0
    %v279 = vsel %vm274, %v228, 0
    %v282 = vsel %vm274, %v229, 0
    %v285 = vsel %vm274, %v230, 0
    %v288 = vsel %vm274, %v231, 0
    %v291 = vsel %vm274, %v232, 0
    %v294 = vsel %vm274, %v233, 0
    %v297 = vsel %vm274, %v234, 0
    %v300 = vsel %vm274, %v235, 0
    %v303 = vsel %vm274, %v236, 0
    %v306 = vsel %vm274, %v237, 0
    %v309 = vsel %vm274, %v238, 0
    %v312 = vsel %vm274, %v239, 0
    %v315 = vsel %vm274, %v240, 0
    %v318 = vsel %vm274, %v241, 0
    %v321 = vsel %vm274, %v242, 0
    %v324 = vsel %vm274, %v243, 0
    %v327 = vsel %vm274, %v244, 0
    %v330 = vsel %vm274, %v245, 0
    %v333 = vsel %vm274, %v246, 0
    %v336 = vsel %vm274, %v247, 0
    %v339 = vsel %vm274, %v248, 0
    %v342 = vsel %vm274, %v249, 0
    %v345 = vsel %vm274, %v250, 0
    %v348 = vsel %vm274, %v251, 0
    %v351 = vsel %vm274, %v252, 0
    %v354 = vsel %vm274, %v253, 0
    %v357 = vsel %vm274, %v254, 0
    %v360 = vsel %vm274, %v255, 0
    %v363 = vsel %vm274, %v256, 0
    %v366 = vsel %vm274, %v257, 0
    %v369 = vsel %vm274, %v258, 0
    %vm371 = vcmask 1041408
    %v373 = vsel %vm371, %v271, 0
    %375 = vmatprep.subr.bf16.mxu0 0
    %376 = vmatpush1.bf16.msra.mxu0 0
    %377 = vmatprep.subr.bf16.mxu0 0
    %378 = vmatpush1.bf16.msra.mxu0 0
    %379 = vmatprep.subr.bf16.mxu0 0
    %380 = vmatpush1.bf16.msra.mxu0 0
    %381 = vmatprep.subr.bf16.mxu0 0
    %382 = vmatpush1.bf16.msra.mxu0 0
    %383 = vmatprep.subr.bf16.mxu0 0
    %384 = vmatpush1.bf16.msra.mxu0 0
    %385 = vmatprep.subr.bf16.mxu0 0
    %386 = vmatpush1.bf16.msra.mxu0 %v373
    %387 = vmatprep.subr.bf16.mxu0 0
    %388 = vmatpush1.bf16.msra.mxu0 %v270
    %389 = vmatprep.subr.bf16.mxu0 0
    %390 = vmatpush1.bf16.msra.mxu0 %v269
    %391 = vmatprep.subr.bf16.mxu0 0
    %392 = vmatpush2.bf16.msra.mxu0 0
    %393 = vmatprep.subr.bf16.mxu0 0
    %394 = vmatpush2.bf16.msra.mxu0 0
    %395 = vmatprep.subr.bf16.mxu0 0
    %396 = vmatpush2.bf16.msra.mxu0 0
    %397 = vmatprep.subr.bf16.mxu0 0
    %398 = vmatpush2.bf16.msra.mxu0 0
    %399 = vmatprep.subr.bf16.mxu0 0
    %400 = vmatpush2.bf16.msra.mxu0 0
    %401 = vmatprep.subr.bf16.mxu0 0
    %402 = vmatpush2.bf16.msra.mxu0 0
    %403 = vmatprep.subr.bf16.mxu0 0
    %404 = vmatpush2.bf16.msra.mxu0 0
    %405 = vmatprep.subr.bf16.mxu0 0
    %406 = vmatpush2.bf16.msra.mxu0 0
    %407 = vmatprep.mubr.bf16.mxu0 0
    %408 = vmatmul.mubr.bf16.gmra.mxu0 %v276
    %v409 = vpop.f32.mrf.mxu0
    %v410 = vadd.f32 %v98, %v409
    %v411 = vpop.f32.mrf.mxu0
    %v412 = vpop.f32.mrf.mxu0
    %v413 = vadd.f32 %v98, %v412
    %v414 = vpop.f32.mrf.mxu0
    %415 = vmatprep.mubr.bf16.mxu0 0
    %416 = vmatmul.mubr.bf16.gmra.mxu0 %v279
    %v417 = vpop.f32.mrf.mxu0
    %v418 = vadd.f32 %v98, %v417
    %v419 = vpop.f32.mrf.mxu0
    %v420 = vpop.f32.mrf.mxu0
    %v421 = vadd.f32 %v98, %v420
    %v422 = vpop.f32.mrf.mxu0
    %423 = vmatprep.mubr.bf16.mxu0 0
    %424 = vmatmul.mubr.bf16.gmra.mxu0 %v282
    %v425 = vpop.f32.mrf.mxu0
    %v426 = vadd.f32 %v98, %v425
    %v427 = vpop.f32.mrf.mxu0
    %v428 = vpop.f32.mrf.mxu0
    %v429 = vadd.f32 %v98, %v428
    %v430 = vpop.f32.mrf.mxu0
    %431 = vmatprep.mubr.bf16.mxu0 0
    %432 = vmatmul.mubr.bf16.gmra.mxu0 %v285
    %v433 = vpop.f32.mrf.mxu0
    %v434 = vadd.f32 %v98, %v433
    %v435 = vpop.f32.mrf.mxu0
    %v436 = vpop.f32.mrf.mxu0
    %v437 = vadd.f32 %v98, %v436
    %v438 = vpop.f32.mrf.mxu0
    %439 = vmatprep.mubr.bf16.mxu0 0
    %440 = vmatmul.mubr.bf16.gmra.mxu0 %v288
    %v441 = vpop.f32.mrf.mxu0
    %v442 = vadd.f32 %v98, %v441
    %v443 = vpop.f32.mrf.mxu0
    %v444 = vpop.f32.mrf.mxu0
    %v445 = vadd.f32 %v98, %v444
    %v446 = vpop.f32.mrf.mxu0
    %447 = vmatprep.mubr.bf16.mxu0 0
    %448 = vmatmul.mubr.bf16.gmra.mxu0 %v291
    %v449 = vpop.f32.mrf.mxu0
    %v450 = vadd.f32 %v98, %v449
    %v451 = vpop.f32.mrf.mxu0
    %v452 = vpop.f32.mrf.mxu0
    %v453 = vadd.f32 %v98, %v452
    %v454 = vpop.f32.mrf.mxu0
    %455 = vmatprep.mubr.bf16.mxu0 0
    %456 = vmatmul.mubr.bf16.gmra.mxu0 %v294
    %v457 = vpop.f32.mrf.mxu0
    %v458 = vadd.f32 %v98, %v457
    %v459 = vpop.f32.mrf.mxu0
    %v460 = vpop.f32.mrf.mxu0
    %v461 = vadd.f32 %v98, %v460
    %v462 = vpop.f32.mrf.mxu0
    %463 = vmatprep.mubr.bf16.mxu0 0
    %464 = vmatmul.mubr.bf16.gmra.mxu0 %v297
    %v465 = vpop.f32.mrf.mxu0
    %v466 = vadd.f32 %v98, %v465
    %v467 = vpop.f32.mrf.mxu0
    %v468 = vpop.f32.mrf.mxu0
    %v469 = vadd.f32 %v98, %v468
    %v470 = vpop.f32.mrf.mxu0
    %471 = vmatprep.mubr.bf16.mxu0 0
    %472 = vmatmul.mubr.bf16.gmra.mxu0 %v300
    %v473 = vpop.f32.mrf.mxu0
    %v474 = vadd.f32 %v98, %v473
    %v475 = vpop.f32.mrf.mxu0
    %v476 = vpop.f32.mrf.mxu0
    %v477 = vadd.f32 %v98, %v476
    %v478 = vpop.f32.mrf.mxu0
    %479 = vmatprep.mubr.bf16.mxu0 0
    %480 = vmatmul.mubr.bf16.gmra.mxu0 %v303
    %v481 = vpop.f32.mrf.mxu0
    %v482 = vadd.f32 %v98, %v481
    %v483 = vpop.f32.mrf.mxu0
    %v484 = vpop.f32.mrf.mxu0
    %v485 = vadd.f32 %v98, %v484
    %v486 = vpop.f32.mrf.mxu0
    %487 = vmatprep.mubr.bf16.mxu0 0
    %488 = vmatmul.mubr.bf16.gmra.mxu0 %v306
    %v489 = vpop.f32.mrf.mxu0
    %v490 = vadd.f32 %v98, %v489
    %v491 = vpop.f32.mrf.mxu0
    %v492 = vpop.f32.mrf.mxu0
    %v493 = vadd.f32 %v98, %v492
    %v494 = vpop.f32.mrf.mxu0
    %495 = vmatprep.mubr.bf16.mxu0 0
    %496 = vmatmul.mubr.bf16.gmra.mxu0 %v309
    %v497 = vpop.f32.mrf.mxu0
    %v498 = vadd.f32 %v98, %v497
    %v499 = vpop.f32.mrf.mxu0
    %v500 = vpop.f32.mrf.mxu0
    %v501 = vadd.f32 %v98, %v500
    %v502 = vpop.f32.mrf.mxu0
    %503 = vmatprep.mubr.bf16.mxu0 0
    %504 = vmatmul.mubr.bf16.gmra.mxu0 %v312
    %v505 = vpop.f32.mrf.mxu0
    %v506 = vadd.f32 %v98, %v505
    %v507 = vpop.f32.mrf.mxu0
    %v508 = vpop.f32.mrf.mxu0
    %v509 = vadd.f32 %v98, %v508
    %v510 = vpop.f32.mrf.mxu0
    %511 = vmatprep.mubr.bf16.mxu0 0
    %512 = vmatmul.mubr.bf16.gmra.mxu0 %v315
    %v513 = vpop.f32.mrf.mxu0
    %v514 = vadd.f32 %v98, %v513
    %v515 = vpop.f32.mrf.mxu0
    %v516 = vpop.f32.mrf.mxu0
    %v517 = vadd.f32 %v98, %v516
    %v518 = vpop.f32.mrf.mxu0
    %519 = vmatprep.mubr.bf16.mxu0 0
    %520 = vmatmul.mubr.bf16.gmra.mxu0 %v318
    %v521 = vpop.f32.mrf.mxu0
    %v522 = vadd.f32 %v98, %v521
    %v523 = vpop.f32.mrf.mxu0
    %v524 = vpop.f32.mrf.mxu0
    %v525 = vadd.f32 %v98, %v524
    %v526 = vpop.f32.mrf.mxu0
    %527 = vmatprep.mubr.bf16.mxu0 0
    %528 = vmatmul.mubr.bf16.gmra.mxu0 %v321
    %v529 = vpop.f32.mrf.mxu0
    %v530 = vadd.f32 %v98, %v529
    %v531 = vpop.f32.mrf.mxu0
    %v532 = vpop.f32.mrf.mxu0
    %v533 = vadd.f32 %v98, %v532
    %v534 = vpop.f32.mrf.mxu0
    %535 = vmatprep.mubr.bf16.mxu0 0
    %536 = vmatmul.mubr.bf16.gmra.mxu0 %v324
    %v537 = vpop.f32.mrf.mxu0
    %v538 = vadd.f32 %v98, %v537
    %v539 = vpop.f32.mrf.mxu0
    %v540 = vpop.f32.mrf.mxu0
    %v541 = vadd.f32 %v98, %v540
    %v542 = vpop.f32.mrf.mxu0
    %543 = vmatprep.mubr.bf16.mxu0 0
    %544 = vmatmul.mubr.bf16.gmra.mxu0 %v327
    %v545 = vpop.f32.mrf.mxu0
    %v546 = vadd.f32 %v98, %v545
    %v547 = vpop.f32.mrf.mxu0
    %v548 = vpop.f32.mrf.mxu0
    %v549 = vadd.f32 %v98, %v548
    %v550 = vpop.f32.mrf.mxu0
    %551 = vmatprep.mubr.bf16.mxu0 0
    %552 = vmatmul.mubr.bf16.gmra.mxu0 %v330
    %v553 = vpop.f32.mrf.mxu0
    %v554 = vadd.f32 %v98, %v553
    %v555 = vpop.f32.mrf.mxu0
    %v556 = vpop.f32.mrf.mxu0
    %v557 = vadd.f32 %v98, %v556
    %v558 = vpop.f32.mrf.mxu0
    %559 = vmatprep.mubr.bf16.mxu0 0
    %560 = vmatmul.mubr.bf16.gmra.mxu0 %v333
    %v561 = vpop.f32.mrf.mxu0
    %v562 = vadd.f32 %v98, %v561
    %v563 = vpop.f32.mrf.mxu0
    %v564 = vpop.f32.mrf.mxu0
    %v565 = vadd.f32 %v98, %v564
    %v566 = vpop.f32.mrf.mxu0
    %567 = vmatprep.mubr.bf16.mxu0 0
    %568 = vmatmul.mubr.bf16.gmra.mxu0 %v336
    %v569 = vpop.f32.mrf.mxu0
    %v570 = vadd.f32 %v98, %v569
    %v571 = vpop.f32.mrf.mxu0
    %v572 = vpop.f32.mrf.mxu0
    %v573 = vadd.f32 %v98, %v572
    %v574 = vpop.f32.mrf.mxu0
    %575 = vmatprep.mubr.bf16.mxu0 0
    %576 = vmatmul.mubr.bf16.gmra.mxu0 %v339
    %v577 = vpop.f32.mrf.mxu0
    %v578 = vadd.f32 %v98, %v577
    %v579 = vpop.f32.mrf.mxu0
    %v580 = vpop.f32.mrf.mxu0
    %v581 = vadd.f32 %v98, %v580
    %v582 = vpop.f32.mrf.mxu0
    %583 = vmatprep.mubr.bf16.mxu0 0
    %584 = vmatmul.mubr.bf16.gmra.mxu0 %v342
    %v585 = vpop.f32.mrf.mxu0
    %v586 = vadd.f32 %v98, %v585
    %v587 = vpop.f32.mrf.mxu0
    %v588 = vpop.f32.mrf.mxu0
    %v589 = vadd.f32 %v98, %v588
    %v590 = vpop.f32.mrf.mxu0
    %591 = vmatprep.mubr.bf16.mxu0 0
    %592 = vmatmul.mubr.bf16.gmra.mxu0 %v345
    %v593 = vpop.f32.mrf.mxu0
    %v594 = vadd.f32 %v98, %v593
    %v595 = vpop.f32.mrf.mxu0
    %v596 = vpop.f32.mrf.mxu0
    %v597 = vadd.f32 %v98, %v596
    %v598 = vpop.f32.mrf.mxu0
    %599 = vmatprep.mubr.bf16.mxu0 0
    %600 = vmatmul.mubr.bf16.gmra.mxu0 %v348
    %v601 = vpop.f32.mrf.mxu0
    %v602 = vadd.f32 %v98, %v601
    %v603 = vpop.f32.mrf.mxu0
    %v604 = vpop.f32.mrf.mxu0
    %v605 = vadd.f32 %v98, %v604
    %v606 = vpop.f32.mrf.mxu0
    %607 = vmatprep.mubr.bf16.mxu0 0
    %608 = vmatmul.mubr.bf16.gmra.mxu0 %v351
    %v609 = vpop.f32.mrf.mxu0
    %v610 = vadd.f32 %v98, %v609
    %v611 = vpop.f32.mrf.mxu0
    %v612 = vpop.f32.mrf.mxu0
    %v613 = vadd.f32 %v98, %v612
    %v614 = vpop.f32.mrf.mxu0
    %615 = vmatprep.mubr.bf16.mxu0 0
    %616 = vmatmul.mubr.bf16.gmra.mxu0 %v354
    %v617 = vpop.f32.mrf.mxu0
    %v618 = vadd.f32 %v98, %v617
    %v619 = vpop.f32.mrf.mxu0
    %v620 = vpop.f32.mrf.mxu0
    %v621 = vadd.f32 %v98, %v620
    %v622 = vpop.f32.mrf.mxu0
    %623 = vmatprep.mubr.bf16.mxu0 0
    %624 = vmatmul.mubr.bf16.gmra.mxu0 %v357
    %v625 = vpop.f32.mrf.mxu0
    %v626 = vadd.f32 %v98, %v625
    %v627 = vpop.f32.mrf.mxu0
    %v628 = vpop.f32.mrf.mxu0
    %v629 = vadd.f32 %v98, %v628
    %v630 = vpop.f32.mrf.mxu0
    %631 = vmatprep.mubr.bf16.mxu0 0
    %632 = vmatmul.mubr.bf16.gmra.mxu0 %v360
    %v633 = vpop.f32.mrf.mxu0
    %v634 = vadd.f32 %v98, %v633
    %v635 = vpop.f32.mrf.mxu0
    %v636 = vpop.f32.mrf.mxu0
    %v637 = vadd.f32 %v98, %v636
    %v638 = vpop.f32.mrf.mxu0
    %639 = vmatprep.mubr.bf16.mxu0 0
    %640 = vmatmul.mubr.bf16.gmra.mxu0 %v363
    %v641 = vpop.f32.mrf.mxu0
    %v642 = vadd.f32 %v98, %v641
    %v643 = vpop.f32.mrf.mxu0
    %v644 = vpop.f32.mrf.mxu0
    %v645 = vadd.f32 %v98, %v644
    %v646 = vpop.f32.mrf.mxu0
    %647 = vmatprep.mubr.bf16.mxu0 0
    %648 = vmatmul.mubr.bf16.gmra.mxu0 %v366
    %v649 = vpop.f32.mrf.mxu0
    %v650 = vadd.f32 %v98, %v649
    %v651 = vpop.f32.mrf.mxu0
    %v652 = vpop.f32.mrf.mxu0
    %v653 = vadd.f32 %v98, %v652
    %v654 = vpop.f32.mrf.mxu0
    %655 = vmatprep.mubr.bf16.mxu0 0
    %656 = vmatmul.mubr.bf16.gmra.mxu0 %v369
    %v657 = vpop.f32.mrf.mxu0
    %v658 = vadd.f32 %v98, %v657
    %v659 = vpop.f32.mrf.mxu0
    %v660 = vpop.f32.mrf.mxu0
    %v661 = vadd.f32 %v98, %v660
    %v662 = vpop.f32.mrf.mxu0
    %663 = vdwg.mxu0
    %v664 = vmax.f32 %v410, 0.0
    %v665 = vmax.f32 %v413, 0.0
    %v666 = vmax.f32 %v418, 0.0
    %v667 = vmax.f32 %v421, 0.0
    %v668 = vmax.f32 %v426, 0.0
    %v669 = vmax.f32 %v429, 0.0
    %v670 = vmax.f32 %v434, 0.0
    %v671 = vmax.f32 %v437, 0.0
    %v672 = vmax.f32 %v442, 0.0
    %v673 = vmax.f32 %v445, 0.0
    %v674 = vmax.f32 %v450, 0.0
    %v675 = vmax.f32 %v453, 0.0
    %v676 = vmax.f32 %v458, 0.0
    %v677 = vmax.f32 %v461, 0.0
    %v678 = vmax.f32 %v466, 0.0
    %v679 = vmax.f32 %v469, 0.0
    %v680 = vmax.f32 %v474, 0.0
    %v681 = vmax.f32 %v477, 0.0
    %v682 = vmax.f32 %v482, 0.0
    %v683 = vmax.f32 %v485, 0.0
    %v684 = vmax.f32 %v490, 0.0
    %v685 = vmax.f32 %v493, 0.0
    %v686 = vmax.f32 %v498, 0.0
    %v687 = vmax.f32 %v501, 0.0
    %v688 = vmax.f32 %v506, 0.0
    %v689 = vmax.f32 %v509, 0.0
    %v690 = vmax.f32 %v514, 0.0
    %v691 = vmax.f32 %v517, 0.0
    %v692 = vmax.f32 %v522, 0.0
    %v693 = vmax.f32 %v525, 0.0
    %v694 = vmax.f32 %v530, 0.0
    %v695 = vmax.f32 %v533, 0.0
    %v696 = vmax.f32 %v538, 0.0
    %v697 = vmax.f32 %v541, 0.0
    %v698 = vmax.f32 %v546, 0.0
    %v699 = vmax.f32 %v549, 0.0
    %v700 = vmax.f32 %v554, 0.0
    %v701 = vmax.f32 %v557, 0.0
    %v702 = vmax.f32 %v562, 0.0
    %v703 = vmax.f32 %v565, 0.0
    %v704 = vmax.f32 %v570, 0.0
    %v705 = vmax.f32 %v573, 0.0
    %v706 = vmax.f32 %v578, 0.0
    %v707 = vmax.f32 %v581, 0.0
    %v708 = vmax.f32 %v586, 0.0
    %v709 = vmax.f32 %v589, 0.0
    %v710 = vmax.f32 %v594, 0.0
    %v711 = vmax.f32 %v597, 0.0
    %v712 = vmax.f32 %v602, 0.0
    %v713 = vmax.f32 %v605, 0.0
    %v714 = vmax.f32 %v610, 0.0
    %v715 = vmax.f32 %v613, 0.0
    %v716 = vmax.f32 %v618, 0.0
    %v717 = vmax.f32 %v621, 0.0
    %v718 = vmax.f32 %v626, 0.0
    %v719 = vmax.f32 %v629, 0.0
    %v720 = vmax.f32 %v634, 0.0
    %v721 = vmax.f32 %v637, 0.0
    %v722 = vmax.f32 %v642, 0.0
    %v723 = vmax.f32 %v645, 0.0
    %v724 = vmax.f32 %v650, 0.0
    %v725 = vmax.f32 %v653, 0.0
    %v726 = vmax.f32 %v658, 0.0
    %v727 = vmax.f32 %v661, 0.0
    %vm728 = vcmask 261120
    %v729 = vsel %vm728, %v664, 0.0
    %v730 = vsel %vm728, %v665, 0.0
    %v731 = vadd.f32 %v729, %v730
    %v732 = vsel %vm728, %v666, 0.0
    %v733 = vadd.f32 %v731, %v732
    %v734 = vsel %vm728, %v667, 0.0
    %v735 = vadd.f32 %v733, %v734
    %v736 = vsel %vm728, %v668, 0.0
    %v737 = vadd.f32 %v735, %v736
    %v738 = vsel %vm728, %v669, 0.0
    %v739 = vadd.f32 %v737, %v738
    %v740 = vsel %vm728, %v670, 0.0
    %v741 = vadd.f32 %v739, %v740
    %v742 = vsel %vm728, %v671, 0.0
    %v743 = vadd.f32 %v741, %v742
    %v744 = vsel %vm728, %v672, 0.0
    %v745 = vadd.f32 %v743, %v744
    %v746 = vsel %vm728, %v673, 0.0
    %v747 = vadd.f32 %v745, %v746
    %v748 = vsel %vm728, %v674, 0.0
    %v749 = vadd.f32 %v747, %v748
    %v750 = vsel %vm728, %v675, 0.0
    %v751 = vadd.f32 %v749, %v750
    %v752 = vsel %vm728, %v676, 0.0
    %v753 = vadd.f32 %v751, %v752
    %v754 = vsel %vm728, %v677, 0.0
    %v755 = vadd.f32 %v753, %v754
    %v756 = vsel %vm728, %v678, 0.0
    %v757 = vadd.f32 %v755, %v756
    %v758 = vsel %vm728, %v679, 0.0
    %v759 = vadd.f32 %v757, %v758
    %v760 = vsel %vm728, %v680, 0.0
    %v761 = vadd.f32 %v759, %v760
    %v762 = vsel %vm728, %v681, 0.0
    %v763 = vadd.f32 %v761, %v762
    %v764 = vsel %vm728, %v682, 0.0
    %v765 = vadd.f32 %v763, %v764
    %v766 = vsel %vm728, %v683, 0.0
    %v767 = vadd.f32 %v765, %v766
    %v768 = vsel %vm728, %v684, 0.0
    %v769 = vadd.f32 %v767, %v768
    %v770 = vsel %vm728, %v685, 0.0
    %v771 = vadd.f32 %v769, %v770
    %v772 = vsel %vm728, %v686, 0.0
    %v773 = vadd.f32 %v771, %v772
    %v774 = vsel %vm728, %v687, 0.0
    %v775 = vadd.f32 %v773, %v774
    %v776 = vsel %vm728, %v688, 0.0
    %v777 = vadd.f32 %v775, %v776
    %v778 = vsel %vm728, %v689, 0.0
    %v779 = vadd.f32 %v777, %v778
    %v780 = vsel %vm728, %v690, 0.0
    %v781 = vadd.f32 %v779, %v780
    %v782 = vsel %vm728, %v691, 0.0
    %v783 = vadd.f32 %v781, %v782
    %v784 = vsel %vm728, %v692, 0.0
    %v785 = vadd.f32 %v783, %v784
    %v786 = vsel %vm728, %v693, 0.0
    %v787 = vadd.f32 %v785, %v786
    %v788 = vsel %vm728, %v694, 0.0
    %v789 = vadd.f32 %v787, %v788
    %v790 = vsel %vm728, %v695, 0.0
    %v791 = vadd.f32 %v789, %v790
    %v792 = vrot.slane %v791, 4
    %v793 = vadd.f32 %v791, %v792
    %v794 = vrot.slane %v793, 2
    %v795 = vadd.f32 %v793, %v794
    %v796 = vrot.slane %v795, 1
    %v797 = vadd.f32 %v795, %v796
    %v798 = vsel %vm728, %v696, 0.0
    %v799 = vsel %vm728, %v697, 0.0
    %v800 = vadd.f32 %v798, %v799
    %v801 = vsel %vm728, %v698, 0.0
    %v802 = vadd.f32 %v800, %v801
    %v803 = vsel %vm728, %v699, 0.0
    %v804 = vadd.f32 %v802, %v803
    %v805 = vsel %vm728, %v700, 0.0
    %v806 = vadd.f32 %v804, %v805
    %v807 = vsel %vm728, %v701, 0.0
    %v808 = vadd.f32 %v806, %v807
    %v809 = vsel %vm728, %v702, 0.0
    %v810 = vadd.f32 %v808, %v809
    %v811 = vsel %vm728, %v703, 0.0
    %v812 = vadd.f32 %v810, %v811
    %v813 = vsel %vm728, %v704, 0.0
    %v814 = vadd.f32 %v812, %v813
    %v815 = vsel %vm728, %v705, 0.0
    %v816 = vadd.f32 %v814, %v815
    %v817 = vsel %vm728, %v706, 0.0
    %v818 = vadd.f32 %v816, %v817
    %v819 = vsel %vm728, %v707, 0.0
    %v820 = vadd.f32 %v818, %v819
    %v821 = vsel %vm728, %v708, 0.0
    %v822 = vadd.f32 %v820, %v821
    %v823 = vsel %vm728, %v709, 0.0
    %v824 = vadd.f32 %v822, %v823
    %v825 = vsel %vm728, %v710, 0.0
    %v826 = vadd.f32 %v824, %v825
    %v827 = vsel %vm728, %v711, 0.0
    %v828 = vadd.f32 %v826, %v827
    %v829 = vsel %vm728, %v712, 0.0
    %v830 = vadd.f32 %v828, %v829
    %v831 = vsel %vm728, %v713, 0.0
    %v832 = vadd.f32 %v830, %v831
    %v833 = vsel %vm728, %v714, 0.0
    %v834 = vadd.f32 %v832, %v833
    %v835 = vsel %vm728, %v715, 0.0
    %v836 = vadd.f32 %v834, %v835
    %v837 = vsel %vm728, %v716, 0.0
    %v838 = vadd.f32 %v836, %v837
    %v839 = vsel %vm728, %v717, 0.0
    %v840 = vadd.f32 %v838, %v839
    %v841 = vsel %vm728, %v718, 0.0
    %v842 = vadd.f32 %v840, %v841
    %v843 = vsel %vm728, %v719, 0.0
    %v844 = vadd.f32 %v842, %v843
    %v845 = vsel %vm728, %v720, 0.0
    %v846 = vadd.f32 %v844, %v845
    %v847 = vsel %vm728, %v721, 0.0
    %v848 = vadd.f32 %v846, %v847
    %v849 = vsel %vm728, %v722, 0.0
    %v850 = vadd.f32 %v848, %v849
    %v851 = vsel %vm728, %v723, 0.0
    %v852 = vadd.f32 %v850, %v851
    %v853 = vsel %vm728, %v724, 0.0
    %v854 = vadd.f32 %v852, %v853
    %v855 = vsel %vm728, %v725, 0.0
    %v856 = vadd.f32 %v854, %v855
    %v857 = vsel %vm728, %v726, 0.0
    %v858 = vadd.f32 %v856, %v857
    %v859 = vsel %vm728, %v727, 0.0
    %v860 = vadd.f32 %v858, %v859
    %v861 = vrot.slane %v860, 4
    %v862 = vadd.f32 %v860, %v861
    %v863 = vrot.slane %v862, 2
    %v864 = vadd.f32 %v862, %v863
    %v865 = vrot.slane %v864, 1
    %v866 = vadd.f32 %v864, %v865
    %v867 = vrcp.pop 256.0
    %v868 = vmul.f32 %v797, %v867
    %v869 = vmul.f32 %v866, %v867
    %v870 = vsel %vm728, %v664, -inf
    %v871 = vsel %vm728, %v665, -inf
    %v872 = vsel %vm728, %v666, -inf
    %v873 = vmax.f32 %v870, %v872
    %v874 = vsel %vm728, %v667, -inf
    %v875 = vmax.f32 %v871, %v874
    %v876 = vsel %vm728, %v668, -inf
    %v877 = vmax.f32 %v873, %v876
    %v878 = vsel %vm728, %v669, -inf
    %v879 = vmax.f32 %v875, %v878
    %v880 = vsel %vm728, %v670, -inf
    %v881 = vmax.f32 %v877, %v880
    %v882 = vsel %vm728, %v671, -inf
    %v883 = vmax.f32 %v879, %v882
    %v884 = vsel %vm728, %v672, -inf
    %v885 = vmax.f32 %v881, %v884
    %v886 = vsel %vm728, %v673, -inf
    %v887 = vmax.f32 %v883, %v886
    %v888 = vsel %vm728, %v674, -inf
    %v889 = vmax.f32 %v885, %v888
    %v890 = vsel %vm728, %v675, -inf
    %v891 = vmax.f32 %v887, %v890
    %v892 = vsel %vm728, %v676, -inf
    %v893 = vmax.f32 %v889, %v892
    %v894 = vsel %vm728, %v677, -inf
    %v895 = vmax.f32 %v891, %v894
    %v896 = vsel %vm728, %v678, -inf
    %v897 = vmax.f32 %v893, %v896
    %v898 = vsel %vm728, %v679, -inf
    %v899 = vmax.f32 %v895, %v898
    %v900 = vsel %vm728, %v680, -inf
    %v901 = vmax.f32 %v897, %v900
    %v902 = vsel %vm728, %v681, -inf
    %v903 = vmax.f32 %v899, %v902
    %v904 = vsel %vm728, %v682, -inf
    %v905 = vmax.f32 %v901, %v904
    %v906 = vsel %vm728, %v683, -inf
    %v907 = vmax.f32 %v903, %v906
    %v908 = vsel %vm728, %v684, -inf
    %v909 = vmax.f32 %v905, %v908
    %v910 = vsel %vm728, %v685, -inf
    %v911 = vmax.f32 %v907, %v910
    %v912 = vsel %vm728, %v686, -inf
    %v913 = vmax.f32 %v909, %v912
    %v914 = vsel %vm728, %v687, -inf
    %v915 = vmax.f32 %v911, %v914
    %v916 = vsel %vm728, %v688, -inf
    %v917 = vmax.f32 %v913, %v916
    %v918 = vsel %vm728, %v689, -inf
    %v919 = vmax.f32 %v915, %v918
    %v920 = vsel %vm728, %v690, -inf
    %v921 = vmax.f32 %v917, %v920
    %v922 = vsel %vm728, %v691, -inf
    %v923 = vmax.f32 %v919, %v922
    %v924 = vsel %vm728, %v692, -inf
    %v925 = vmax.f32 %v921, %v924
    %v926 = vsel %vm728, %v693, -inf
    %v927 = vmax.f32 %v923, %v926
    %v928 = vsel %vm728, %v694, -inf
    %v929 = vmax.f32 %v925, %v928
    %v930 = vsel %vm728, %v695, -inf
    %v931 = vmax.f32 %v927, %v930
    %v932 = vmax.f32 %v929, %v931
    %v933 = vrot.slane %v932, 4
    %v934 = vmax.f32 %v932, %v933
    %v935 = vrot.slane %v934, 2
    %v936 = vmax.f32 %v934, %v935
    %v937 = vrot.slane %v936, 1
    %v938 = vmax.f32 %v936, %v937
    %v939 = vsel %vm728, %v696, -inf
    %v940 = vsel %vm728, %v697, -inf
    %v941 = vsel %vm728, %v698, -inf
    %v942 = vmax.f32 %v939, %v941
    %v943 = vsel %vm728, %v699, -inf
    %v944 = vmax.f32 %v940, %v943
    %v945 = vsel %vm728, %v700, -inf
    %v946 = vmax.f32 %v942, %v945
    %v947 = vsel %vm728, %v701, -inf
    %v948 = vmax.f32 %v944, %v947
    %v949 = vsel %vm728, %v702, -inf
    %v950 = vmax.f32 %v946, %v949
    %v951 = vsel %vm728, %v703, -inf
    %v952 = vmax.f32 %v948, %v951
    %v953 = vsel %vm728, %v704, -inf
    %v954 = vmax.f32 %v950, %v953
    %v955 = vsel %vm728, %v705, -inf
    %v956 = vmax.f32 %v952, %v955
    %v957 = vsel %vm728, %v706, -inf
    %v958 = vmax.f32 %v954, %v957
    %v959 = vsel %vm728, %v707, -inf
    %v960 = vmax.f32 %v956, %v959
    %v961 = vsel %vm728, %v708, -inf
    %v962 = vmax.f32 %v958, %v961
    %v963 = vsel %vm728, %v709, -inf
    %v964 = vmax.f32 %v960, %v963
    %v965 = vsel %vm728, %v710, -inf
    %v966 = vmax.f32 %v962, %v965
    %v967 = vsel %vm728, %v711, -inf
    %v968 = vmax.f32 %v964, %v967
    %v969 = vsel %vm728, %v712, -inf
    %v970 = vmax.f32 %v966, %v969
    %v971 = vsel %vm728, %v713, -inf
    %v972 = vmax.f32 %v968, %v971
    %v973 = vsel %vm728, %v714, -inf
    %v974 = vmax.f32 %v970, %v973
    %v975 = vsel %vm728, %v715, -inf
    %v976 = vmax.f32 %v972, %v975
    %v977 = vsel %vm728, %v716, -inf
    %v978 = vmax.f32 %v974, %v977
    %v979 = vsel %vm728, %v717, -inf
    %v980 = vmax.f32 %v976, %v979
    %v981 = vsel %vm728, %v718, -inf
    %v982 = vmax.f32 %v978, %v981
    %v983 = vsel %vm728, %v719, -inf
    %v984 = vmax.f32 %v980, %v983
    %v985 = vsel %vm728, %v720, -inf
    %v986 = vmax.f32 %v982, %v985
    %v987 = vsel %vm728, %v721, -inf
    %v988 = vmax.f32 %v984, %v987
    %v989 = vsel %vm728, %v722, -inf
    %v990 = vmax.f32 %v986, %v989
    %v991 = vsel %vm728, %v723, -inf
    %v992 = vmax.f32 %v988, %v991
    %v993 = vsel %vm728, %v724, -inf
    %v994 = vmax.f32 %v990, %v993
    %v995 = vsel %vm728, %v725, -inf
    %v996 = vmax.f32 %v992, %v995
    %v997 = vsel %vm728, %v726, -inf
    %v998 = vmax.f32 %v994, %v997
    %v999 = vsel %vm728, %v727, -inf
    %v1000 = vmax.f32 %v996, %v999
    %v1001 = vmax.f32 %v998, %v1000
    %v1002 = vrot.slane %v1001, 4
    %v1003 = vmax.f32 %v1001, %v1002
    %v1004 = vrot.slane %v1003, 2
    %v1005 = vmax.f32 %v1003, %v1004
    %v1006 = vrot.slane %v1005, 1
    %v1007 = vmax.f32 %v1005, %v1006
    %vm1010 = vcmask 1041409
    %v1011 = vsel %vm1010, %v869, %v868
    %vm1015 = vcmask 1043459
    %v1016 = vsel %vm1015, %v1007, %v938
    %v1018 = vsel %vm371, %v1011, %v1016
    %v1019 = vld [vmem:[%s3] sm:$0xff]
    %v1020 = vld [vmem:[%s3 + $0x8] sm:$0xff]
    %v1021 = vld [vmem:[%s3 + $0x10] sm:$0xff]
    %v1022 = vld [vmem:[%s3 + $0x18] sm:$0xff]
    %v1024 = vsel %vm728, %v1018, 0
    %1026 = vmatprep.subr.mxu0 0.0
    %1027 = vmatpush1.msra.mxu0 0.0
    %1028 = vmatprep.subr.mxu0 0.0
    %1029 = vmatpush1.msra.mxu0 0.0
    %1030 = vmatprep.subr.mxu0 0.0
    %1031 = vmatpush1.msra.mxu0 0.0
    %1032 = vmatprep.subr.mxu0 0.0
    %1033 = vmatpush1.msra.mxu0 0.0
    %1034 = vmatprep.subr.mxu0 0.0
    %1035 = vmatpush1.msra.mxu0 0.0
    %1036 = vmatprep.subr.mxu0 0.0
    %1037 = vmatpush1.msra.mxu0 0.0
    %1038 = vmatprep.subr.mxu0 0.0
    %1039 = vmatpush1.msra.mxu0 0.0
    %1040 = vmatprep.subr.mxu0 0.0
    %1041 = vmatpush1.msra.mxu0 0.0
    %1042 = vmatprep.subr.mxu0 0.0
    %1043 = vmatpush1.msra.mxu0 0.0
    %1044 = vmatprep.subr.mxu0 0.0
    %1045 = vmatpush1.msra.mxu0 0.0
    %1046 = vmatprep.subr.mxu0 0.0
    %1047 = vmatpush1.msra.mxu0 0.0
    %1048 = vmatprep.subr.mxu0 0.0
    %1049 = vmatpush1.msra.mxu0 0.0
    %1050 = vmatprep.subr.mxu0 0.0
    %1051 = vmatpush1.msra.mxu0 %v1022
    %1052 = vmatprep.subr.mxu0 0.0
    %1053 = vmatpush1.msra.mxu0 %v1021
    %1054 = vmatprep.subr.mxu0 0.0
    %1055 = vmatpush1.msra.mxu0 %v1020
    %1056 = vmatprep.subr.mxu0 0.0
    %1057 = vmatpush1.msra.mxu0 %v1019
    %1058 = vmatprep.subr.mxu0 0.0
    %1059 = vmatpush2.msra.mxu0 0.0
    %1060 = vmatprep.subr.mxu0 0.0
    %1061 = vmatpush2.msra.mxu0 0.0
    %1062 = vmatprep.subr.mxu0 0.0
    %1063 = vmatpush2.msra.mxu0 0.0
    %1064 = vmatprep.subr.mxu0 0.0
    %1065 = vmatpush2.msra.mxu0 0.0
    %1066 = vmatprep.subr.mxu0 0.0
    %1067 = vmatpush2.msra.mxu0 0.0
    %1068 = vmatprep.subr.mxu0 0.0
    %1069 = vmatpush2.msra.mxu0 0.0
    %1070 = vmatprep.subr.mxu0 0.0
    %1071 = vmatpush2.msra.mxu0 0.0
    %1072 = vmatprep.subr.mxu0 0.0
    %1073 = vmatpush2.msra.mxu0 0.0
    %1074 = vmatprep.subr.mxu0 0.0
    %1075 = vmatpush2.msra.mxu0 0.0
    %1076 = vmatprep.subr.mxu0 0.0
    %1077 = vmatpush2.msra.mxu0 0.0
    %1078 = vmatprep.subr.mxu0 0.0
    %1079 = vmatpush2.msra.mxu0 0.0
    %1080 = vmatprep.subr.mxu0 0.0
    %1081 = vmatpush2.msra.mxu0 0.0
    %1082 = vmatprep.subr.mxu0 0.0
    %1083 = vmatpush2.msra.mxu0 0.0
    %1084 = vmatprep.subr.mxu0 0.0
    %1085 = vmatpush2.msra.mxu0 0.0
    %1086 = vmatprep.subr.mxu0 0.0
    %1087 = vmatpush2.msra.mxu0 0.0
    %1088 = vmatprep.subr.mxu0 0.0
    %1089 = vmatpush2.msra.mxu0 0.0
    %1090 = vmatprep.mubr.f32.mxu0 0.0
    %1091 = vmatmul.mubr.f32.gmra.mxu0 %v1024
    %v1092 = vpop.f32.mrf.mxu0
    %v1093 = vadd.f32 0.0, %v1092
    %v1094 = vpop.f32.mrf.mxu0
    %1095 = vdwg.mxu0
    %v1096 = vmax.f32 %v1093, 0.0
    %v1097 = vld [vmem:[%s4] sm:$0x3]
    %vm1098 = vcmask 15360
    %v1100 = vsel %vm1098, %v1096, 0
    %v1103 = vsel %vm371, %v1097, 0
    %1105 = vmatprep.subr.mxu0 0.0
    %1106 = vmatpush1.msra.mxu0 0.0
    %1107 = vmatprep.subr.mxu0 0.0
    %1108 = vmatpush1.msra.mxu0 0.0
    %1109 = vmatprep.subr.mxu0 0.0
    %1110 = vmatpush1.msra.mxu0 0.0
    %1111 = vmatprep.subr.mxu0 0.0
    %1112 = vmatpush1.msra.mxu0 0.0
    %1113 = vmatprep.subr.mxu0 0.0
    %1114 = vmatpush1.msra.mxu0 0.0
    %1115 = vmatprep.subr.mxu0 0.0
    %1116 = vmatpush1.msra.mxu0 0.0
    %1117 = vmatprep.subr.mxu0 0.0
    %1118 = vmatpush1.msra.mxu0 0.0
    %1119 = vmatprep.subr.mxu0 0.0
    %1120 = vmatpush1.msra.mxu0 0.0
    %1121 = vmatprep.subr.mxu0 0.0
    %1122 = vmatpush1.msra.mxu0 0.0
    %1123 = vmatprep.subr.mxu0 0.0
    %1124 = vmatpush1.msra.mxu0 0.0
    %1125 = vmatprep.subr.mxu0 0.0
    %1126 = vmatpush1.msra.mxu0 0.0
    %1127 = vmatprep.subr.mxu0 0.0
    %1128 = vmatpush1.msra.mxu0 0.0
    %1129 = vmatprep.subr.mxu0 0.0
    %1130 = vmatpush1.msra.mxu0 0.0
    %1131 = vmatprep.subr.mxu0 0.0
    %1132 = vmatpush1.msra.mxu0 0.0
    %1133 = vmatprep.subr.mxu0 0.0
    %1134 = vmatpush1.msra.mxu0 0.0
    %1135 = vmatprep.subr.mxu0 0.0
    %1136 = vmatpush1.msra.mxu0 %v1103
    %1137 = vmatprep.subr.mxu0 0.0
    %1138 = vmatpush2.msra.mxu0 0.0
    %1139 = vmatprep.subr.mxu0 0.0
    %1140 = vmatpush2.msra.mxu0 0.0
    %1141 = vmatprep.subr.mxu0 0.0
    %1142 = vmatpush2.msra.mxu0 0.0
    %1143 = vmatprep.subr.mxu0 0.0
    %1144 = vmatpush2.msra.mxu0 0.0
    %1145 = vmatprep.subr.mxu0 0.0
    %1146 = vmatpush2.msra.mxu0 0.0
    %1147 = vmatprep.subr.mxu0 0.0
    %1148 = vmatpush2.msra.mxu0 0.0
    %1149 = vmatprep.subr.mxu0 0.0
    %1150 = vmatpush2.msra.mxu0 0.0
    %1151 = vmatprep.subr.mxu0 0.0
    %1152 = vmatpush2.msra.mxu0 0.0
    %1153 = vmatprep.subr.mxu0 0.0
    %1154 = vmatpush2.msra.mxu0 0.0
    %1155 = vmatprep.subr.mxu0 0.0
    %1156 = vmatpush2.msra.mxu0 0.0
    %1157 = vmatprep.subr.mxu0 0.0
    %1158 = vmatpush2.msra.mxu0 0.0
    %1159 = vmatprep.subr.mxu0 0.0
    %1160 = vmatpush2.msra.mxu0 0.0
    %1161 = vmatprep.subr.mxu0 0.0
    %1162 = vmatpush2.msra.mxu0 0.0
    %1163 = vmatprep.subr.mxu0 0.0
    %1164 = vmatpush2.msra.mxu0 0.0
    %1165 = vmatprep.subr.mxu0 0.0
    %1166 = vmatpush2.msra.mxu0 0.0
    %1167 = vmatprep.subr.mxu0 0.0
    %1168 = vmatpush2.msra.mxu0 0.0
    %1169 = vmatprep.mubr.f32.mxu0 0.0
    %1170 = vmatmul.mubr.f32.gmra.mxu0 %v1100
    %v1171 = vpop.f32.mrf.mxu0
    %v1172 = vadd.f32 0.0, %v1171
    %v1173 = vpop.f32.mrf.mxu0
    %1174 = vdwg.mxu0
    %v1176 = vrot.slane %v1172, 2
    %v1178 = vadd.f32 %v1172, %v1176
    %v1179 = vxor.u32 %v1178, 2147483648
    %v1180 = vmul.f32 %v1179, 1.442695
    %v1181 = vpow.pop %v1180
    %v1182 = vadd.f32 %v1181, 1.0
    %v1183 = vrcp.pop %v1182
    %v1184 = vmul.f32 1.0, %v1183
    %v1187 = vunpack.c.l.s4 1966171168
    %v1188 = vunpack.c.0.s8 %v1187
    %v1189 = vlaneseq
    %v1190 = vshrl.u32 %v1189, 7
    %v1191 = vsub.s32 %v1188, %v1190
    %v1192 = vrot.slane %v1184, %v1191
    %v1193 = vcombine.high %v1192, %v1192
    %v1195 = vunpack.c.l.s4 1966171168
    %v1196 = vunpack.c.0.s8 %v1195
    %v1197 = vlaneseq
    %v1198 = vshrl.u32 %v1197, 7
    %v1199 = vsub.s32 %v1196, %v1198
    %v1200 = vrot.slane %v1192, %v1199
    %v1202 = vunpack.c.l.s4 1966171168
    %v1203 = vunpack.c.0.s8 %v1202
    %v1204 = vlaneseq
    %v1205 = vshrl.u32 %v1204, 7
    %v1206 = vsub.s32 %v1203, %v1205
    %v1207 = vrot.slane %v1193, %v1206
    %v1208 = vlaneseq
    %v1209 = vshrl.u32 %v1208, 7
    %v1210 = vsub.s32 0, %v1209
    %v1211 = vrot.slane %v1200, %v1210
    %v1212 = vlaneseq
    %v1213 = vshrl.u32 %v1212, 7
    %v1214 = vsub.s32 0, %v1213
    %v1215 = vrot.slane %v1207, %v1214
    %v1218 = vmul.f32 %v664, %v1211
    %v1219 = vmul.f32 %v665, %v1211
    %v1220 = vmul.f32 %v666, %v1211
    %v1221 = vmul.f32 %v667, %v1211
    %v1222 = vmul.f32 %v668, %v1211
    %v1223 = vmul.f32 %v669, %v1211
    %v1224 = vmul.f32 %v670, %v1211
    %v1225 = vmul.f32 %v671, %v1211
    %v1226 = vmul.f32 %v672, %v1211
    %v1227 = vmul.f32 %v673, %v1211
    %v1228 = vmul.f32 %v674, %v1211
    %v1229 = vmul.f32 %v675, %v1211
    %v1230 = vmul.f32 %v676, %v1211
    %v1231 = vmul.f32 %v677, %v1211
    %v1232 = vmul.f32 %v678, %v1211
    %v1233 = vmul.f32 %v679, %v1211
    %v1234 = vmul.f32 %v680, %v1211
    %v1235 = vmul.f32 %v681, %v1211
    %v1236 = vmul.f32 %v682, %v1211
    %v1237 = vmul.f32 %v683, %v1211
    %v1238 = vmul.f32 %v684, %v1211
    %v1239 = vmul.f32 %v685, %v1211
    %v1240 = vmul.f32 %v686, %v1211
    %v1241 = vmul.f32 %v687, %v1211
    %v1242 = vmul.f32 %v688, %v1211
    %v1243 = vmul.f32 %v689, %v1211
    %v1244 = vmul.f32 %v690, %v1211
    %v1245 = vmul.f32 %v691, %v1211
    %v1246 = vmul.f32 %v692, %v1211
    %v1247 = vmul.f32 %v693, %v1211
    %v1248 = vmul.f32 %v694, %v1211
    %v1249 = vmul.f32 %v695, %v1211
    %v1250 = vmul.f32 %v696, %v1215
    %v1251 = vmul.f32 %v697, %v1215
    %v1252 = vmul.f32 %v698, %v1215
    %v1253 = vmul.f32 %v699, %v1215
    %v1254 = vmul.f32 %v700, %v1215
    %v1255 = vmul.f32 %v701, %v1215
    %v1256 = vmul.f32 %v702, %v1215
    %v1257 = vmul.f32 %v703, %v1215
    %v1258 = vmul.f32 %v704, %v1215
    %v1259 = vmul.f32 %v705, %v1215
    %v1260 = vmul.f32 %v706, %v1215
    %v1261 = vmul.f32 %v707, %v1215
    %v1262 = vmul.f32 %v708, %v1215
    %v1263 = vmul.f32 %v709, %v1215
    %v1264 = vmul.f32 %v710, %v1215
    %v1265 = vmul.f32 %v711, %v1215
    %v1266 = vmul.f32 %v712, %v1215
    %v1267 = vmul.f32 %v713, %v1215
    %v1268 = vmul.f32 %v714, %v1215
    %v1269 = vmul.f32 %v715, %v1215
    %v1270 = vmul.f32 %v716, %v1215
    %v1271 = vmul.f32 %v717, %v1215
    %v1272 = vmul.f32 %v718, %v1215
    %v1273 = vmul.f32 %v719, %v1215
    %v1274 = vmul.f32 %v720, %v1215
    %v1275 = vmul.f32 %v721, %v1215
    %v1276 = vmul.f32 %v722, %v1215
    %v1277 = vmul.f32 %v723, %v1215
    %v1278 = vmul.f32 %v724, %v1215
    %v1279 = vmul.f32 %v725, %v1215
    %v1280 = vmul.f32 %v726, %v1215
    %v1281 = vmul.f32 %v727, %v1215
    %v1282 = vsel %vm728, %v1218, 0.0
    %1283 = vadd.xlane.f32.xlu0 %v1282
    %v1284 = vpop.xlane.xlu0 %1283
    %v1285 = vsel %vm728, %v1219, 0.0
    %1286 = vadd.xlane.f32.xlu0 %v1285
    %v1287 = vpop.xlane.xlu0 %1286
    %v1288 = vsel %vm728, %v1220, 0.0
    %1289 = vadd.xlane.f32.xlu0 %v1288
    %v1290 = vpop.xlane.xlu0 %1289
    %v1291 = vsel %vm728, %v1221, 0.0
    %1292 = vadd.xlane.f32.xlu0 %v1291
    %v1293 = vpop.xlane.xlu0 %1292
    %v1294 = vsel %vm728, %v1222, 0.0
    %1295 = vadd.xlane.f32.xlu0 %v1294
    %v1296 = vpop.xlane.xlu0 %1295
    %v1297 = vsel %vm728, %v1223, 0.0
    %1298 = vadd.xlane.f32.xlu0 %v1297
    %v1299 = vpop.xlane.xlu0 %1298
    %v1300 = vsel %vm728, %v1224, 0.0
    %1301 = vadd.xlane.f32.xlu0 %v1300
    %v1302 = vpop.xlane.xlu0 %1301
    %v1303 = vsel %vm728, %v1225, 0.0
    %1304 = vadd.xlane.f32.xlu0 %v1303
    %v1305 = vpop.xlane.xlu0 %1304
    %v1306 = vsel %vm728, %v1226, 0.0
    %1307 = vadd.xlane.f32.xlu0 %v1306
    %v1308 = vpop.xlane.xlu0 %1307
    %v1309 = vsel %vm728, %v1227, 0.0
    %1310 = vadd.xlane.f32.xlu0 %v1309
    %v1311 = vpop.xlane.xlu0 %1310
    %v1312 = vsel %vm728, %v1228, 0.0
    %1313 = vadd.xlane.f32.xlu0 %v1312
    %v1314 = vpop.xlane.xlu0 %1313
    %v1315 = vsel %vm728, %v1229, 0.0
    %1316 = vadd.xlane.f32.xlu0 %v1315
    %v1317 = vpop.xlane.xlu0 %1316
    %v1318 = vsel %vm728, %v1230, 0.0
    %1319 = vadd.xlane.f32.xlu0 %v1318
    %v1320 = vpop.xlane.xlu0 %1319
    %v1321 = vsel %vm728, %v1231, 0.0
    %1322 = vadd.xlane.f32.xlu0 %v1321
    %v1323 = vpop.xlane.xlu0 %1322
    %v1324 = vsel %vm728, %v1232, 0.0
    %1325 = vadd.xlane.f32.xlu0 %v1324
    %v1326 = vpop.xlane.xlu0 %1325
    %v1327 = vsel %vm728, %v1233, 0.0
    %1328 = vadd.xlane.f32.xlu0 %v1327
    %v1329 = vpop.xlane.xlu0 %1328
    %v1330 = vsel %vm728, %v1234, 0.0
    %1331 = vadd.xlane.f32.xlu0 %v1330
    %v1332 = vpop.xlane.xlu0 %1331
    %v1333 = vsel %vm728, %v1235, 0.0
    %1334 = vadd.xlane.f32.xlu0 %v1333
    %v1335 = vpop.xlane.xlu0 %1334
    %v1336 = vsel %vm728, %v1236, 0.0
    %1337 = vadd.xlane.f32.xlu0 %v1336
    %v1338 = vpop.xlane.xlu0 %1337
    %v1339 = vsel %vm728, %v1237, 0.0
    %1340 = vadd.xlane.f32.xlu0 %v1339
    %v1341 = vpop.xlane.xlu0 %1340
    %v1342 = vsel %vm728, %v1238, 0.0
    %1343 = vadd.xlane.f32.xlu0 %v1342
    %v1344 = vpop.xlane.xlu0 %1343
    %v1345 = vsel %vm728, %v1239, 0.0
    %1346 = vadd.xlane.f32.xlu0 %v1345
    %v1347 = vpop.xlane.xlu0 %1346
    %v1348 = vsel %vm728, %v1240, 0.0
    %1349 = vadd.xlane.f32.xlu0 %v1348
    %v1350 = vpop.xlane.xlu0 %1349
    %v1351 = vsel %vm728, %v1241, 0.0
    %1352 = vadd.xlane.f32.xlu0 %v1351
    %v1353 = vpop.xlane.xlu0 %1352
    %v1354 = vsel %vm728, %v1242, 0.0
    %1355 = vadd.xlane.f32.xlu0 %v1354
    %v1356 = vpop.xlane.xlu0 %1355
    %v1357 = vsel %vm728, %v1243, 0.0
    %1358 = vadd.xlane.f32.xlu0 %v1357
    %v1359 = vpop.xlane.xlu0 %1358
    %v1360 = vsel %vm728, %v1244, 0.0
    %1361 = vadd.xlane.f32.xlu0 %v1360
    %v1362 = vpop.xlane.xlu0 %1361
    %v1363 = vsel %vm728, %v1245, 0.0
    %1364 = vadd.xlane.f32.xlu0 %v1363
    %v1365 = vpop.xlane.xlu0 %1364
    %v1366 = vsel %vm728, %v1246, 0.0
    %1367 = vadd.xlane.f32.xlu0 %v1366
    %v1368 = vpop.xlane.xlu0 %1367
    %v1369 = vsel %vm728, %v1247, 0.0
    %1370 = vadd.xlane.f32.xlu0 %v1369
    %v1371 = vpop.xlane.xlu0 %1370
    %v1372 = vsel %vm728, %v1248, 0.0
    %1373 = vadd.xlane.f32.xlu0 %v1372
    %v1374 = vpop.xlane.xlu0 %1373
    %v1375 = vsel %vm728, %v1249, 0.0
    %1376 = vadd.xlane.f32.xlu0 %v1375
    %v1377 = vpop.xlane.xlu0 %1376
    %v1378 = vsel %vm728, %v1250, 0.0
    %1379 = vadd.xlane.f32.xlu0 %v1378
    %v1380 = vpop.xlane.xlu0 %1379
    %v1381 = vsel %vm728, %v1251, 0.0
    %1382 = vadd.xlane.f32.xlu0 %v1381
    %v1383 = vpop.xlane.xlu0 %1382
    %v1384 = vsel %vm728, %v1252, 0.0
    %1385 = vadd.xlane.f32.xlu0 %v1384
    %v1386 = vpop.xlane.xlu0 %1385
    %v1387 = vsel %vm728, %v1253, 0.0
    %1388 = vadd.xlane.f32.xlu0 %v1387
    %v1389 = vpop.xlane.xlu0 %1388
    %v1390 = vsel %vm728, %v1254, 0.0
    %1391 = vadd.xlane.f32.xlu0 %v1390
    %v1392 = vpop.xlane.xlu0 %1391
    %v1393 = vsel %vm728, %v1255, 0.0
    %1394 = vadd.xlane.f32.xlu0 %v1393
    %v1395 = vpop.xlane.xlu0 %1394
    %v1396 = vsel %vm728, %v1256, 0.0
    %1397 = vadd.xlane.f32.xlu0 %v1396
    %v1398 = vpop.xlane.xlu0 %1397
    %v1399 = vsel %vm728, %v1257, 0.0
    %1400 = vadd.xlane.f32.xlu0 %v1399
    %v1401 = vpop.xlane.xlu0 %1400
    %v1402 = vsel %vm728, %v1258, 0.0
    %1403 = vadd.xlane.f32.xlu0 %v1402
    %v1404 = vpop.xlane.xlu0 %1403
    %v1405 = vsel %vm728, %v1259, 0.0
    %1406 = vadd.xlane.f32.xlu0 %v1405
    %v1407 = vpop.xlane.xlu0 %1406
    %v1408 = vsel %vm728, %v1260, 0.0
    %1409 = vadd.xlane.f32.xlu0 %v1408
    %v1410 = vpop.xlane.xlu0 %1409
    %v1411 = vsel %vm728, %v1261, 0.0
    %1412 = vadd.xlane.f32.xlu0 %v1411
    %v1413 = vpop.xlane.xlu0 %1412
    %v1414 = vsel %vm728, %v1262, 0.0
    %1415 = vadd.xlane.f32.xlu0 %v1414
    %v1416 = vpop.xlane.xlu0 %1415
    %v1417 = vsel %vm728, %v1263, 0.0
    %1418 = vadd.xlane.f32.xlu0 %v1417
    %v1419 = vpop.xlane.xlu0 %1418
    %v1420 = vsel %vm728, %v1264, 0.0
    %1421 = vadd.xlane.f32.xlu0 %v1420
    %v1422 = vpop.xlane.xlu0 %1421
    %v1423 = vsel %vm728, %v1265, 0.0
    %1424 = vadd.xlane.f32.xlu0 %v1423
    %v1425 = vpop.xlane.xlu0 %1424
    %v1426 = vsel %vm728, %v1266, 0.0
    %1427 = vadd.xlane.f32.xlu0 %v1426
    %v1428 = vpop.xlane.xlu0 %1427
    %v1429 = vsel %vm728, %v1267, 0.0
    %1430 = vadd.xlane.f32.xlu0 %v1429
    %v1431 = vpop.xlane.xlu0 %1430
    %v1432 = vsel %vm728, %v1268, 0.0
    %1433 = vadd.xlane.f32.xlu0 %v1432
    %v1434 = vpop.xlane.xlu0 %1433
    %v1435 = vsel %vm728, %v1269, 0.0
    %1436 = vadd.xlane.f32.xlu0 %v1435
    %v1437 = vpop.xlane.xlu0 %1436
    %v1438 = vsel %vm728, %v1270, 0.0
    %1439 = vadd.xlane.f32.xlu0 %v1438
    %v1440 = vpop.xlane.xlu0 %1439
    %v1441 = vsel %vm728, %v1271, 0.0
    %1442 = vadd.xlane.f32.xlu0 %v1441
    %v1443 = vpop.xlane.xlu0 %1442
    %v1444 = vsel %vm728, %v1272, 0.0
    %1445 = vadd.xlane.f32.xlu0 %v1444
    %v1446 = vpop.xlane.xlu0 %1445
    %v1447 = vsel %vm728, %v1273, 0.0
    %1448 = vadd.xlane.f32.xlu0 %v1447
    %v1449 = vpop.xlane.xlu0 %1448
    %v1450 = vsel %vm728, %v1274, 0.0
    %1451 = vadd.xlane.f32.xlu0 %v1450
    %v1452 = vpop.xlane.xlu0 %1451
    %v1453 = vsel %vm728, %v1275, 0.0
    %1454 = vadd.xlane.f32.xlu0 %v1453
    %v1455 = vpop.xlane.xlu0 %1454
    %v1456 = vsel %vm728, %v1276, 0.0
    %1457 = vadd.xlane.f32.xlu0 %v1456
    %v1458 = vpop.xlane.xlu0 %1457
    %v1459 = vsel %vm728, %v1277, 0.0
    %1460 = vadd.xlane.f32.xlu0 %v1459
    %v1461 = vpop.xlane.xlu0 %1460
    %v1462 = vsel %vm728, %v1278, 0.0
    %1463 = vadd.xlane.f32.xlu0 %v1462
    %v1464 = vpop.xlane.xlu0 %1463
    %v1465 = vsel %vm728, %v1279, 0.0
    %1466 = vadd.xlane.f32.xlu0 %v1465
    %v1467 = vpop.xlane.xlu0 %1466
    %v1468 = vsel %vm728, %v1280, 0.0
    %1469 = vadd.xlane.f32.xlu0 %v1468
    %v1470 = vpop.xlane.xlu0 %1469
    %v1471 = vsel %vm728, %v1281, 0.0
    %1472 = vadd.xlane.f32.xlu0 %v1471
    %v1473 = vpop.xlane.xlu0 %1472
    %v1474 = vrcp.pop 32.0
    %v1475 = vmul.f32 %v1284, %v1474
    %v1476 = vmul.f32 %v1287, %v1474
    %v1477 = vmul.f32 %v1290, %v1474
    %v1478 = vmul.f32 %v1293, %v1474
    %v1479 = vmul.f32 %v1296, %v1474
    %v1480 = vmul.f32 %v1299, %v1474
    %v1481 = vmul.f32 %v1302, %v1474
    %v1482 = vmul.f32 %v1305, %v1474
    %v1483 = vmul.f32 %v1308, %v1474
    %v1484 = vmul.f32 %v1311, %v1474
    %v1485 = vmul.f32 %v1314, %v1474
    %v1486 = vmul.f32 %v1317, %v1474
    %v1487 = vmul.f32 %v1320, %v1474
    %v1488 = vmul.f32 %v1323, %v1474
    %v1489 = vmul.f32 %v1326, %v1474
    %v1490 = vmul.f32 %v1329, %v1474
    %v1491 = vmul.f32 %v1332, %v1474
    %v1492 = vmul.f32 %v1335, %v1474
    %v1493 = vmul.f32 %v1338, %v1474
    %v1494 = vmul.f32 %v1341, %v1474
    %v1495 = vmul.f32 %v1344, %v1474
    %v1496 = vmul.f32 %v1347, %v1474
    %v1497 = vmul.f32 %v1350, %v1474
    %v1498 = vmul.f32 %v1353, %v1474
    %v1499 = vmul.f32 %v1356, %v1474
    %v1500 = vmul.f32 %v1359, %v1474
    %v1501 = vmul.f32 %v1362, %v1474
    %v1502 = vmul.f32 %v1365, %v1474
    %v1503 = vmul.f32 %v1368, %v1474
    %v1504 = vmul.f32 %v1371, %v1474
    %v1505 = vmul.f32 %v1374, %v1474
    %v1506 = vmul.f32 %v1377, %v1474
    %v1507 = vmul.f32 %v1380, %v1474
    %v1508 = vmul.f32 %v1383, %v1474
    %v1509 = vmul.f32 %v1386, %v1474
    %v1510 = vmul.f32 %v1389, %v1474
    %v1511 = vmul.f32 %v1392, %v1474
    %v1512 = vmul.f32 %v1395, %v1474
    %v1513 = vmul.f32 %v1398, %v1474
    %v1514 = vmul.f32 %v1401, %v1474
    %v1515 = vmul.f32 %v1404, %v1474
    %v1516 = vmul.f32 %v1407, %v1474
    %v1517 = vmul.f32 %v1410, %v1474
    %v1518 = vmul.f32 %v1413, %v1474
    %v1519 = vmul.f32 %v1416, %v1474
    %v1520 = vmul.f32 %v1419, %v1474
    %v1521 = vmul.f32 %v1422, %v1474
    %v1522 = vmul.f32 %v1425, %v1474
    %v1523 = vmul.f32 %v1428, %v1474
    %v1524 = vmul.f32 %v1431, %v1474
    %v1525 = vmul.f32 %v1434, %v1474
    %v1526 = vmul.f32 %v1437, %v1474
    %v1527 = vmul.f32 %v1440, %v1474
    %v1528 = vmul.f32 %v1443, %v1474
    %v1529 = vmul.f32 %v1446, %v1474
    %v1530 = vmul.f32 %v1449, %v1474
    %v1531 = vmul.f32 %v1452, %v1474
    %v1532 = vmul.f32 %v1455, %v1474
    %v1533 = vmul.f32 %v1458, %v1474
    %v1534 = vmul.f32 %v1461, %v1474
    %v1535 = vmul.f32 %v1464, %v1474
    %v1536 = vmul.f32 %v1467, %v1474
    %v1537 = vmul.f32 %v1470, %v1474
    %v1538 = vmul.f32 %v1473, %v1474
    %v1539 = vsel %vm728, %v1218, -inf
    %1540 = vmax.xlane.f32.xlu0 %v1539
    %v1541 = vpop.xlane.xlu0 %1540
    %v1542 = vsel %vm728, %v1219, -inf
    %1543 = vmax.xlane.f32.xlu0 %v1542
    %v1544 = vpop.xlane.xlu0 %1543
    %v1545 = vsel %vm728, %v1220, -inf
    %1546 = vmax.xlane.f32.xlu0 %v1545
    %v1547 = vpop.xlane.xlu0 %1546
    %v1548 = vsel %vm728, %v1221, -inf
    %1549 = vmax.xlane.f32.xlu0 %v1548
    %v1550 = vpop.xlane.xlu0 %1549
    %v1551 = vsel %vm728, %v1222, -inf
    %1552 = vmax.xlane.f32.xlu0 %v1551
    %v1553 = vpop.xlane.xlu0 %1552
    %v1554 = vsel %vm728, %v1223, -inf
    %1555 = vmax.xlane.f32.xlu0 %v1554
    %v1556 = vpop.xlane.xlu0 %1555
    %v1557 = vsel %vm728, %v1224, -inf
    %1558 = vmax.xlane.f32.xlu0 %v1557
    %v1559 = vpop.xlane.xlu0 %1558
    %v1560 = vsel %vm728, %v1225, -inf
    %1561 = vmax.xlane.f32.xlu0 %v1560
    %v1562 = vpop.xlane.xlu0 %1561
    %v1563 = vsel %vm728, %v1226, -inf
    %1564 = vmax.xlane.f32.xlu0 %v1563
    %v1565 = vpop.xlane.xlu0 %1564
    %v1566 = vsel %vm728, %v1227, -inf
    %1567 = vmax.xlane.f32.xlu0 %v1566
    %v1568 = vpop.xlane.xlu0 %1567
    %v1569 = vsel %vm728, %v1228, -inf
    %1570 = vmax.xlane.f32.xlu0 %v1569
    %v1571 = vpop.xlane.xlu0 %1570
    %v1572 = vsel %vm728, %v1229, -inf
    %1573 = vmax.xlane.f32.xlu0 %v1572
    %v1574 = vpop.xlane.xlu0 %1573
    %v1575 = vsel %vm728, %v1230, -inf
    %1576 = vmax.xlane.f32.xlu0 %v1575
    %v1577 = vpop.xlane.xlu0 %1576
    %v1578 = vsel %vm728, %v1231, -inf
    %1579 = vmax.xlane.f32.xlu0 %v1578
    %v1580 = vpop.xlane.xlu0 %1579
    %v1581 = vsel %vm728, %v1232, -inf
    %1582 = vmax.xlane.f32.xlu0 %v1581
    %v1583 = vpop.xlane.xlu0 %1582
    %v1584 = vsel %vm728, %v1233, -inf
    %1585 = vmax.xlane.f32.xlu0 %v1584
    %v1586 = vpop.xlane.xlu0 %1585
    %v1587 = vsel %vm728, %v1234, -inf
    %1588 = vmax.xlane.f32.xlu0 %v1587
    %v1589 = vpop.xlane.xlu0 %1588
    %v1590 = vsel %vm728, %v1235, -inf
    %1591 = vmax.xlane.f32.xlu0 %v1590
    %v1592 = vpop.xlane.xlu0 %1591
    %v1593 = vsel %vm728, %v1236, -inf
    %1594 = vmax.xlane.f32.xlu0 %v1593
    %v1595 = vpop.xlane.xlu0 %1594
    %v1596 = vsel %vm728, %v1237, -inf
    %1597 = vmax.xlane.f32.xlu0 %v1596
    %v1598 = vpop.xlane.xlu0 %1597
    %v1599 = vsel %vm728, %v1238, -inf
    %1600 = vmax.xlane.f32.xlu0 %v1599
    %v1601 = vpop.xlane.xlu0 %1600
    %v1602 = vsel %vm728, %v1239, -inf
    %1603 = vmax.xlane.f32.xlu0 %v1602
    %v1604 = vpop.xlane.xlu0 %1603
    %v1605 = vsel %vm728, %v1240, -inf
    %1606 = vmax.xlane.f32.xlu0 %v1605
    %v1607 = vpop.xlane.xlu0 %1606
    %v1608 = vsel %vm728, %v1241, -inf
    %1609 = vmax.xlane.f32.xlu0 %v1608
    %v1610 = vpop.xlane.xlu0 %1609
    %v1611 = vsel %vm728, %v1242, -inf
    %1612 = vmax.xlane.f32.xlu0 %v1611
    %v1613 = vpop.xlane.xlu0 %1612
    %v1614 = vsel %vm728, %v1243, -inf
    %1615 = vmax.xlane.f32.xlu0 %v1614
    %v1616 = vpop.xlane.xlu0 %1615
    %v1617 = vsel %vm728, %v1244, -inf
    %1618 = vmax.xlane.f32.xlu0 %v1617
    %v1619 = vpop.xlane.xlu0 %1618
    %v1620 = vsel %vm728, %v1245, -inf
    %1621 = vmax.xlane.f32.xlu0 %v1620
    %v1622 = vpop.xlane.xlu0 %1621
    %v1623 = vsel %vm728, %v1246, -inf
    %1624 = vmax.xlane.f32.xlu0 %v1623
    %v1625 = vpop.xlane.xlu0 %1624
    %v1626 = vsel %vm728, %v1247, -inf
    %1627 = vmax.xlane.f32.xlu0 %v1626
    %v1628 = vpop.xlane.xlu0 %1627
    %v1629 = vsel %vm728, %v1248, -inf
    %1630 = vmax.xlane.f32.xlu0 %v1629
    %v1631 = vpop.xlane.xlu0 %1630
    %v1632 = vsel %vm728, %v1249, -inf
    %1633 = vmax.xlane.f32.xlu0 %v1632
    %v1634 = vpop.xlane.xlu0 %1633
    %v1635 = vsel %vm728, %v1250, -inf
    %1636 = vmax.xlane.f32.xlu0 %v1635
    %v1637 = vpop.xlane.xlu0 %1636
    %v1638 = vsel %vm728, %v1251, -inf
    %1639 = vmax.xlane.f32.xlu0 %v1638
    %v1640 = vpop.xlane.xlu0 %1639
    %v1641 = vsel %vm728, %v1252, -inf
    %1642 = vmax.xlane.f32.xlu0 %v1641
    %v1643 = vpop.xlane.xlu0 %1642
    %v1644 = vsel %vm728, %v1253, -inf
    %1645 = vmax.xlane.f32.xlu0 %v1644
    %v1646 = vpop.xlane.xlu0 %1645
    %v1647 = vsel %vm728, %v1254, -inf
    %1648 = vmax.xlane.f32.xlu0 %v1647
    %v1649 = vpop.xlane.xlu0 %1648
    %v1650 = vsel %vm728, %v1255, -inf
    %1651 = vmax.xlane.f32.xlu0 %v1650
    %v1652 = vpop.xlane.xlu0 %1651
    %v1653 = vsel %vm728, %v1256, -inf
    %1654 = vmax.xlane.f32.xlu0 %v1653
    %v1655 = vpop.xlane.xlu0 %1654
    %v1656 = vsel %vm728, %v1257, -inf
    %1657 = vmax.xlane.f32.xlu0 %v1656
    %v1658 = vpop.xlane.xlu0 %1657
    %v1659 = vsel %vm728, %v1258, -inf
    %1660 = vmax.xlane.f32.xlu0 %v1659
    %v1661 = vpop.xlane.xlu0 %1660
    %v1662 = vsel %vm728, %v1259, -inf
    %1663 = vmax.xlane.f32.xlu0 %v1662
    %v1664 = vpop.xlane.xlu0 %1663
    %v1665 = vsel %vm728, %v1260, -inf
    %1666 = vmax.xlane.f32.xlu0 %v1665
    %v1667 = vpop.xlane.xlu0 %1666
    %v1668 = vsel %vm728, %v1261, -inf
    %1669 = vmax.xlane.f32.xlu0 %v1668
    %v1670 = vpop.xlane.xlu0 %1669
    %v1671 = vsel %vm728, %v1262, -inf
    %1672 = vmax.xlane.f32.xlu0 %v1671
    %v1673 = vpop.xlane.xlu0 %1672
    %v1674 = vsel %vm728, %v1263, -inf
    %1675 = vmax.xlane.f32.xlu0 %v1674
    %v1676 = vpop.xlane.xlu0 %1675
    %v1677 = vsel %vm728, %v1264, -inf
    %1678 = vmax.xlane.f32.xlu0 %v1677
    %v1679 = vpop.xlane.xlu0 %1678
    %v1680 = vsel %vm728, %v1265, -inf
    %1681 = vmax.xlane.f32.xlu0 %v1680
    %v1682 = vpop.xlane.xlu0 %1681
    %v1683 = vsel %vm728, %v1266, -inf
    %1684 = vmax.xlane.f32.xlu0 %v1683
    %v1685 = vpop.xlane.xlu0 %1684
    %v1686 = vsel %vm728, %v1267, -inf
    %1687 = vmax.xlane.f32.xlu0 %v1686
    %v1688 = vpop.xlane.xlu0 %1687
    %v1689 = vsel %vm728, %v1268, -inf
    %1690 = vmax.xlane.f32.xlu0 %v1689
    %v1691 = vpop.xlane.xlu0 %1690
    %v1692 = vsel %vm728, %v1269, -inf
    %1693 = vmax.xlane.f32.xlu0 %v1692
    %v1694 = vpop.xlane.xlu0 %1693
    %v1695 = vsel %vm728, %v1270, -inf
    %1696 = vmax.xlane.f32.xlu0 %v1695
    %v1697 = vpop.xlane.xlu0 %1696
    %v1698 = vsel %vm728, %v1271, -inf
    %1699 = vmax.xlane.f32.xlu0 %v1698
    %v1700 = vpop.xlane.xlu0 %1699
    %v1701 = vsel %vm728, %v1272, -inf
    %1702 = vmax.xlane.f32.xlu0 %v1701
    %v1703 = vpop.xlane.xlu0 %1702
    %v1704 = vsel %vm728, %v1273, -inf
    %1705 = vmax.xlane.f32.xlu0 %v1704
    %v1706 = vpop.xlane.xlu0 %1705
    %v1707 = vsel %vm728, %v1274, -inf
    %1708 = vmax.xlane.f32.xlu0 %v1707
    %v1709 = vpop.xlane.xlu0 %1708
    %v1710 = vsel %vm728, %v1275, -inf
    %1711 = vmax.xlane.f32.xlu0 %v1710
    %v1712 = vpop.xlane.xlu0 %1711
    %v1713 = vsel %vm728, %v1276, -inf
    %1714 = vmax.xlane.f32.xlu0 %v1713
    %v1715 = vpop.xlane.xlu0 %1714
    %v1716 = vsel %vm728, %v1277, -inf
    %1717 = vmax.xlane.f32.xlu0 %v1716
    %v1718 = vpop.xlane.xlu0 %1717
    %v1719 = vsel %vm728, %v1278, -inf
    %1720 = vmax.xlane.f32.xlu0 %v1719
    %v1721 = vpop.xlane.xlu0 %1720
    %v1722 = vsel %vm728, %v1279, -inf
    %1723 = vmax.xlane.f32.xlu0 %v1722
    %v1724 = vpop.xlane.xlu0 %1723
    %v1725 = vsel %vm728, %v1280, -inf
    %1726 = vmax.xlane.f32.xlu0 %v1725
    %v1727 = vpop.xlane.xlu0 %1726
    %v1728 = vsel %vm728, %v1281, -inf
    %1729 = vmax.xlane.f32.xlu0 %v1728
    %v1730 = vpop.xlane.xlu0 %1729
    %v1795 = vlaneseq
    %v1796 = vand.u32 %v1795, 127
    %v1797 = vlaneseq
    %v1798 = vshrl.u32 %v1797, 7
    %v1799 = vsub.s32 %v1796, %v1798
    %v1800 = vrot.slane %v1475, %v1799
    %v1801 = vadd.s32 %v1796, 4294967288
    %v1802 = vlaneseq
    %v1803 = vshrl.u32 %v1802, 7
    %v1804 = vsub.s32 %v1801, %v1803
    %v1805 = vrot.slane %v1476, %v1804
    %vm1806 = vcmask 130112
    %v1807 = vsel %vm1806, %v1805, %v1800
    %v1808 = vlaneseq
    %v1809 = vshrl.u32 %v1808, 7
    %v1810 = vsub.s32 %v1796, %v1809
    %v1811 = vrot.slane %v1477, %v1810
    %v1812 = vlaneseq
    %v1813 = vshrl.u32 %v1812, 7
    %v1814 = vsub.s32 %v1801, %v1813
    %v1815 = vrot.slane %v1478, %v1814
    %v1816 = vsel %vm1806, %v1815, %v1811
    %v1817 = vlaneseq
    %v1818 = vshrl.u32 %v1817, 7
    %v1819 = vsub.s32 %v1796, %v1818
    %v1820 = vrot.slane %v1479, %v1819
    %v1821 = vlaneseq
    %v1822 = vshrl.u32 %v1821, 7
    %v1823 = vsub.s32 %v1801, %v1822
    %v1824 = vrot.slane %v1480, %v1823
    %v1825 = vsel %vm1806, %v1824, %v1820
    %v1826 = vlaneseq
    %v1827 = vshrl.u32 %v1826, 7
    %v1828 = vsub.s32 %v1796, %v1827
    %v1829 = vrot.slane %v1481, %v1828
    %v1830 = vlaneseq
    %v1831 = vshrl.u32 %v1830, 7
    %v1832 = vsub.s32 %v1801, %v1831
    %v1833 = vrot.slane %v1482, %v1832
    %v1834 = vsel %vm1806, %v1833, %v1829
    %v1835 = vlaneseq
    %v1836 = vshrl.u32 %v1835, 7
    %v1837 = vsub.s32 %v1796, %v1836
    %v1838 = vrot.slane %v1483, %v1837
    %v1839 = vlaneseq
    %v1840 = vshrl.u32 %v1839, 7
    %v1841 = vsub.s32 %v1801, %v1840
    %v1842 = vrot.slane %v1484, %v1841
    %v1843 = vsel %vm1806, %v1842, %v1838
    %v1844 = vlaneseq
    %v1845 = vshrl.u32 %v1844, 7
    %v1846 = vsub.s32 %v1796, %v1845
    %v1847 = vrot.slane %v1485, %v1846
    %v1848 = vlaneseq
    %v1849 = vshrl.u32 %v1848, 7
    %v1850 = vsub.s32 %v1801, %v1849
    %v1851 = vrot.slane %v1486, %v1850
    %v1852 = vsel %vm1806, %v1851, %v1847
    %v1853 = vlaneseq
    %v1854 = vshrl.u32 %v1853, 7
    %v1855 = vsub.s32 %v1796, %v1854
    %v1856 = vrot.slane %v1487, %v1855
    %v1857 = vlaneseq
    %v1858 = vshrl.u32 %v1857, 7
    %v1859 = vsub.s32 %v1801, %v1858
    %v1860 = vrot.slane %v1488, %v1859
    %v1861 = vsel %vm1806, %v1860, %v1856
    %v1862 = vlaneseq
    %v1863 = vshrl.u32 %v1862, 7
    %v1864 = vsub.s32 %v1796, %v1863
    %v1865 = vrot.slane %v1489, %v1864
    %v1866 = vlaneseq
    %v1867 = vshrl.u32 %v1866, 7
    %v1868 = vsub.s32 %v1801, %v1867
    %v1869 = vrot.slane %v1490, %v1868
    %v1870 = vsel %vm1806, %v1869, %v1865
    %v1871 = vlaneseq
    %v1872 = vshrl.u32 %v1871, 7
    %v1873 = vsub.s32 %v1796, %v1872
    %v1874 = vrot.slane %v1491, %v1873
    %v1875 = vlaneseq
    %v1876 = vshrl.u32 %v1875, 7
    %v1877 = vsub.s32 %v1801, %v1876
    %v1878 = vrot.slane %v1492, %v1877
    %v1879 = vsel %vm1806, %v1878, %v1874
    %v1880 = vlaneseq
    %v1881 = vshrl.u32 %v1880, 7
    %v1882 = vsub.s32 %v1796, %v1881
    %v1883 = vrot.slane %v1493, %v1882
    %v1884 = vlaneseq
    %v1885 = vshrl.u32 %v1884, 7
    %v1886 = vsub.s32 %v1801, %v1885
    %v1887 = vrot.slane %v1494, %v1886
    %v1888 = vsel %vm1806, %v1887, %v1883
    %v1889 = vlaneseq
    %v1890 = vshrl.u32 %v1889, 7
    %v1891 = vsub.s32 %v1796, %v1890
    %v1892 = vrot.slane %v1495, %v1891
    %v1893 = vlaneseq
    %v1894 = vshrl.u32 %v1893, 7
    %v1895 = vsub.s32 %v1801, %v1894
    %v1896 = vrot.slane %v1496, %v1895
    %v1897 = vsel %vm1806, %v1896, %v1892
    %v1898 = vlaneseq
    %v1899 = vshrl.u32 %v1898, 7
    %v1900 = vsub.s32 %v1796, %v1899
    %v1901 = vrot.slane %v1497, %v1900
    %v1902 = vlaneseq
    %v1903 = vshrl.u32 %v1902, 7
    %v1904 = vsub.s32 %v1801, %v1903
    %v1905 = vrot.slane %v1498, %v1904
    %v1906 = vsel %vm1806, %v1905, %v1901
    %v1907 = vlaneseq
    %v1908 = vshrl.u32 %v1907, 7
    %v1909 = vsub.s32 %v1796, %v1908
    %v1910 = vrot.slane %v1499, %v1909
    %v1911 = vlaneseq
    %v1912 = vshrl.u32 %v1911, 7
    %v1913 = vsub.s32 %v1801, %v1912
    %v1914 = vrot.slane %v1500, %v1913
    %v1915 = vsel %vm1806, %v1914, %v1910
    %v1916 = vlaneseq
    %v1917 = vshrl.u32 %v1916, 7
    %v1918 = vsub.s32 %v1796, %v1917
    %v1919 = vrot.slane %v1501, %v1918
    %v1920 = vlaneseq
    %v1921 = vshrl.u32 %v1920, 7
    %v1922 = vsub.s32 %v1801, %v1921
    %v1923 = vrot.slane %v1502, %v1922
    %v1924 = vsel %vm1806, %v1923, %v1919
    %v1925 = vlaneseq
    %v1926 = vshrl.u32 %v1925, 7
    %v1927 = vsub.s32 %v1796, %v1926
    %v1928 = vrot.slane %v1503, %v1927
    %v1929 = vlaneseq
    %v1930 = vshrl.u32 %v1929, 7
    %v1931 = vsub.s32 %v1801, %v1930
    %v1932 = vrot.slane %v1504, %v1931
    %v1933 = vsel %vm1806, %v1932, %v1928
    %v1934 = vlaneseq
    %v1935 = vshrl.u32 %v1934, 7
    %v1936 = vsub.s32 %v1796, %v1935
    %v1937 = vrot.slane %v1505, %v1936
    %v1938 = vlaneseq
    %v1939 = vshrl.u32 %v1938, 7
    %v1940 = vsub.s32 %v1801, %v1939
    %v1941 = vrot.slane %v1506, %v1940
    %v1942 = vsel %vm1806, %v1941, %v1937
    %v1943 = vlaneseq
    %v1944 = vshrl.u32 %v1943, 7
    %v1945 = vsub.s32 %v1796, %v1944
    %v1946 = vrot.slane %v1507, %v1945
    %v1947 = vlaneseq
    %v1948 = vshrl.u32 %v1947, 7
    %v1949 = vsub.s32 %v1801, %v1948
    %v1950 = vrot.slane %v1508, %v1949
    %v1951 = vsel %vm1806, %v1950, %v1946
    %v1952 = vlaneseq
    %v1953 = vshrl.u32 %v1952, 7
    %v1954 = vsub.s32 %v1796, %v1953
    %v1955 = vrot.slane %v1509, %v1954
    %v1956 = vlaneseq
    %v1957 = vshrl.u32 %v1956, 7
    %v1958 = vsub.s32 %v1801, %v1957
    %v1959 = vrot.slane %v1510, %v1958
    %v1960 = vsel %vm1806, %v1959, %v1955
    %v1961 = vlaneseq
    %v1962 = vshrl.u32 %v1961, 7
    %v1963 = vsub.s32 %v1796, %v1962
    %v1964 = vrot.slane %v1511, %v1963
    %v1965 = vlaneseq
    %v1966 = vshrl.u32 %v1965, 7
    %v1967 = vsub.s32 %v1801, %v1966
    %v1968 = vrot.slane %v1512, %v1967
    %v1969 = vsel %vm1806, %v1968, %v1964
    %v1970 = vlaneseq
    %v1971 = vshrl.u32 %v1970, 7
    %v1972 = vsub.s32 %v1796, %v1971
    %v1973 = vrot.slane %v1513, %v1972
    %v1974 = vlaneseq
    %v1975 = vshrl.u32 %v1974, 7
    %v1976 = vsub.s32 %v1801, %v1975
    %v1977 = vrot.slane %v1514, %v1976
    %v1978 = vsel %vm1806, %v1977, %v1973
    %v1979 = vlaneseq
    %v1980 = vshrl.u32 %v1979, 7
    %v1981 = vsub.s32 %v1796, %v1980
    %v1982 = vrot.slane %v1515, %v1981
    %v1983 = vlaneseq
    %v1984 = vshrl.u32 %v1983, 7
    %v1985 = vsub.s32 %v1801, %v1984
    %v1986 = vrot.slane %v1516, %v1985
    %v1987 = vsel %vm1806, %v1986, %v1982
    %v1988 = vlaneseq
    %v1989 = vshrl.u32 %v1988, 7
    %v1990 = vsub.s32 %v1796, %v1989
    %v1991 = vrot.slane %v1517, %v1990
    %v1992 = vlaneseq
    %v1993 = vshrl.u32 %v1992, 7
    %v1994 = vsub.s32 %v1801, %v1993
    %v1995 = vrot.slane %v1518, %v1994
    %v1996 = vsel %vm1806, %v1995, %v1991
    %v1997 = vlaneseq
    %v1998 = vshrl.u32 %v1997, 7
    %v1999 = vsub.s32 %v1796, %v1998
    %v2000 = vrot.slane %v1519, %v1999
    %v2001 = vlaneseq
    %v2002 = vshrl.u32 %v2001, 7
    %v2003 = vsub.s32 %v1801, %v2002
    %v2004 = vrot.slane %v1520, %v2003
    %v2005 = vsel %vm1806, %v2004, %v2000
    %v2006 = vlaneseq
    %v2007 = vshrl.u32 %v2006, 7
    %v2008 = vsub.s32 %v1796, %v2007
    %v2009 = vrot.slane %v1521, %v2008
    %v2010 = vlaneseq
    %v2011 = vshrl.u32 %v2010, 7
    %v2012 = vsub.s32 %v1801, %v2011
    %v2013 = vrot.slane %v1522, %v2012
    %v2014 = vsel %vm1806, %v2013, %v2009
    %v2015 = vlaneseq
    %v2016 = vshrl.u32 %v2015, 7
    %v2017 = vsub.s32 %v1796, %v2016
    %v2018 = vrot.slane %v1523, %v2017
    %v2019 = vlaneseq
    %v2020 = vshrl.u32 %v2019, 7
    %v2021 = vsub.s32 %v1801, %v2020
    %v2022 = vrot.slane %v1524, %v2021
    %v2023 = vsel %vm1806, %v2022, %v2018
    %v2024 = vlaneseq
    %v2025 = vshrl.u32 %v2024, 7
    %v2026 = vsub.s32 %v1796, %v2025
    %v2027 = vrot.slane %v1525, %v2026
    %v2028 = vlaneseq
    %v2029 = vshrl.u32 %v2028, 7
    %v2030 = vsub.s32 %v1801, %v2029
    %v2031 = vrot.slane %v1526, %v2030
    %v2032 = vsel %vm1806, %v2031, %v2027
    %v2033 = vlaneseq
    %v2034 = vshrl.u32 %v2033, 7
    %v2035 = vsub.s32 %v1796, %v2034
    %v2036 = vrot.slane %v1527, %v2035
    %v2037 = vlaneseq
    %v2038 = vshrl.u32 %v2037, 7
    %v2039 = vsub.s32 %v1801, %v2038
    %v2040 = vrot.slane %v1528, %v2039
    %v2041 = vsel %vm1806, %v2040, %v2036
    %v2042 = vlaneseq
    %v2043 = vshrl.u32 %v2042, 7
    %v2044 = vsub.s32 %v1796, %v2043
    %v2045 = vrot.slane %v1529, %v2044
    %v2046 = vlaneseq
    %v2047 = vshrl.u32 %v2046, 7
    %v2048 = vsub.s32 %v1801, %v2047
    %v2049 = vrot.slane %v1530, %v2048
    %v2050 = vsel %vm1806, %v2049, %v2045
    %v2051 = vlaneseq
    %v2052 = vshrl.u32 %v2051, 7
    %v2053 = vsub.s32 %v1796, %v2052
    %v2054 = vrot.slane %v1531, %v2053
    %v2055 = vlaneseq
    %v2056 = vshrl.u32 %v2055, 7
    %v2057 = vsub.s32 %v1801, %v2056
    %v2058 = vrot.slane %v1532, %v2057
    %v2059 = vsel %vm1806, %v2058, %v2054
    %v2060 = vlaneseq
    %v2061 = vshrl.u32 %v2060, 7
    %v2062 = vsub.s32 %v1796, %v2061
    %v2063 = vrot.slane %v1533, %v2062
    %v2064 = vlaneseq
    %v2065 = vshrl.u32 %v2064, 7
    %v2066 = vsub.s32 %v1801, %v2065
    %v2067 = vrot.slane %v1534, %v2066
    %v2068 = vsel %vm1806, %v2067, %v2063
    %v2069 = vlaneseq
    %v2070 = vshrl.u32 %v2069, 7
    %v2071 = vsub.s32 %v1796, %v2070
    %v2072 = vrot.slane %v1535, %v2071
    %v2073 = vlaneseq
    %v2074 = vshrl.u32 %v2073, 7
    %v2075 = vsub.s32 %v1801, %v2074
    %v2076 = vrot.slane %v1536, %v2075
    %v2077 = vsel %vm1806, %v2076, %v2072
    %v2078 = vlaneseq
    %v2079 = vshrl.u32 %v2078, 7
    %v2080 = vsub.s32 %v1796, %v2079
    %v2081 = vrot.slane %v1537, %v2080
    %v2082 = vlaneseq
    %v2083 = vshrl.u32 %v2082, 7
    %v2084 = vsub.s32 %v1801, %v2083
    %v2085 = vrot.slane %v1538, %v2084
    %v2086 = vsel %vm1806, %v2085, %v2081
    %vm2087 = vcmask 1044484
    %v2088 = vsel %vm2087, %v1816, %v1807
    %vm2089 = vcmask 1045509
    %v2090 = vsel %vm2089, %v1825, %v2088
    %vm2091 = vcmask 1046534
    %v2092 = vsel %vm2091, %v1834, %v2090
    %vm2093 = vcmask 1047559
    %v2094 = vsel %vm2093, %v1843, %v2092
    %v2095 = vsel %vm1010, %v1861, %v1852
    %vm2096 = vcmask 1042434
    %v2097 = vsel %vm2096, %v1870, %v2095
    %v2098 = vsel %vm1015, %v1879, %v2097
    %v2099 = vsel %vm2087, %v1888, %v2098
    %v2100 = vsel %vm2089, %v1897, %v2099
    %v2101 = vsel %vm2091, %v1906, %v2100
    %v2102 = vsel %vm2093, %v1915, %v2101
    %v2103 = vsel %vm1010, %v1933, %v1924
    %v2104 = vsel %vm2096, %v1942, %v2103
    %v2105 = vsel %vm2087, %v1960, %v1951
    %v2106 = vsel %vm2089, %v1969, %v2105
    %v2107 = vsel %vm2091, %v1978, %v2106
    %v2108 = vsel %vm2093, %v1987, %v2107
    %v2109 = vsel %vm1010, %v2005, %v1996
    %v2110 = vsel %vm2096, %v2014, %v2109
    %v2111 = vsel %vm1015, %v2023, %v2110
    %v2112 = vsel %vm2087, %v2032, %v2111
    %v2113 = vsel %vm2089, %v2041, %v2112
    %v2114 = vsel %vm2091, %v2050, %v2113
    %v2115 = vsel %vm2093, %v2059, %v2114
    %v2116 = vsel %vm1010, %v2077, %v2068
    %v2117 = vsel %vm2096, %v2086, %v2116
    %vm2124 = vcmask 1042432
    %v2125 = vsel %vm2124, 0.0, %v2094
    %v2126 = vsel %vm2124, 0.0, %v2108
    %v2127 = vsel %vm2124, %v2104, 0.0
    %v2128 = vsel %vm2124, %v2117, 0.0
    %v2193 = vlaneseq
    %v2194 = vshrl.u32 %v2193, 7
    %v2195 = vsub.s32 %v1796, %v2194
    %v2196 = vrot.slane %v1541, %v2195
    %v2197 = vlaneseq
    %v2198 = vshrl.u32 %v2197, 7
    %v2199 = vsub.s32 %v1801, %v2198
    %v2200 = vrot.slane %v1544, %v2199
    %v2201 = vsel %vm1806, %v2200, %v2196
    %v2202 = vlaneseq
    %v2203 = vshrl.u32 %v2202, 7
    %v2204 = vsub.s32 %v1796, %v2203
    %v2205 = vrot.slane %v1547, %v2204
    %v2206 = vlaneseq
    %v2207 = vshrl.u32 %v2206, 7
    %v2208 = vsub.s32 %v1801, %v2207
    %v2209 = vrot.slane %v1550, %v2208
    %v2210 = vsel %vm1806, %v2209, %v2205
    %v2211 = vlaneseq
    %v2212 = vshrl.u32 %v2211, 7
    %v2213 = vsub.s32 %v1796, %v2212
    %v2214 = vrot.slane %v1553, %v2213
    %v2215 = vlaneseq
    %v2216 = vshrl.u32 %v2215, 7
    %v2217 = vsub.s32 %v1801, %v2216
    %v2218 = vrot.slane %v1556, %v2217
    %v2219 = vsel %vm1806, %v2218, %v2214
    %v2220 = vlaneseq
    %v2221 = vshrl.u32 %v2220, 7
    %v2222 = vsub.s32 %v1796, %v2221
    %v2223 = vrot.slane %v1559, %v2222
    %v2224 = vlaneseq
    %v2225 = vshrl.u32 %v2224, 7
    %v2226 = vsub.s32 %v1801, %v2225
    %v2227 = vrot.slane %v1562, %v2226
    %v2228 = vsel %vm1806, %v2227, %v2223
    %v2229 = vlaneseq
    %v2230 = vshrl.u32 %v2229, 7
    %v2231 = vsub.s32 %v1796, %v2230
    %v2232 = vrot.slane %v1565, %v2231
    %v2233 = vlaneseq
    %v2234 = vshrl.u32 %v2233, 7
    %v2235 = vsub.s32 %v1801, %v2234
    %v2236 = vrot.slane %v1568, %v2235
    %v2237 = vsel %vm1806, %v2236, %v2232
    %v2238 = vlaneseq
    %v2239 = vshrl.u32 %v2238, 7
    %v2240 = vsub.s32 %v1796, %v2239
    %v2241 = vrot.slane %v1571, %v2240
    %v2242 = vlaneseq
    %v2243 = vshrl.u32 %v2242, 7
    %v2244 = vsub.s32 %v1801, %v2243
    %v2245 = vrot.slane %v1574, %v2244
    %v2246 = vsel %vm1806, %v2245, %v2241
    %v2247 = vlaneseq
    %v2248 = vshrl.u32 %v2247, 7
    %v2249 = vsub.s32 %v1796, %v2248
    %v2250 = vrot.slane %v1577, %v2249
    %v2251 = vlaneseq
    %v2252 = vshrl.u32 %v2251, 7
    %v2253 = vsub.s32 %v1801, %v2252
    %v2254 = vrot.slane %v1580, %v2253
    %v2255 = vsel %vm1806, %v2254, %v2250
    %v2256 = vlaneseq
    %v2257 = vshrl.u32 %v2256, 7
    %v2258 = vsub.s32 %v1796, %v2257
    %v2259 = vrot.slane %v1583, %v2258
    %v2260 = vlaneseq
    %v2261 = vshrl.u32 %v2260, 7
    %v2262 = vsub.s32 %v1801, %v2261
    %v2263 = vrot.slane %v1586, %v2262
    %v2264 = vsel %vm1806, %v2263, %v2259
    %v2265 = vlaneseq
    %v2266 = vshrl.u32 %v2265, 7
    %v2267 = vsub.s32 %v1796, %v2266
    %v2268 = vrot.slane %v1589, %v2267
    %v2269 = vlaneseq
    %v2270 = vshrl.u32 %v2269, 7
    %v2271 = vsub.s32 %v1801, %v2270
    %v2272 = vrot.slane %v1592, %v2271
    %v2273 = vsel %vm1806, %v2272, %v2268
    %v2274 = vlaneseq
    %v2275 = vshrl.u32 %v2274, 7
    %v2276 = vsub.s32 %v1796, %v2275
    %v2277 = vrot.slane %v1595, %v2276
    %v2278 = vlaneseq
    %v2279 = vshrl.u32 %v2278, 7
    %v2280 = vsub.s32 %v1801, %v2279
    %v2281 = vrot.slane %v1598, %v2280
    %v2282 = vsel %vm1806, %v2281, %v2277
    %v2283 = vlaneseq
    %v2284 = vshrl.u32 %v2283, 7
    %v2285 = vsub.s32 %v1796, %v2284
    %v2286 = vrot.slane %v1601, %v2285
    %v2287 = vlaneseq
    %v2288 = vshrl.u32 %v2287, 7
    %v2289 = vsub.s32 %v1801, %v2288
    %v2290 = vrot.slane %v1604, %v2289
    %v2291 = vsel %vm1806, %v2290, %v2286
    %v2292 = vlaneseq
    %v2293 = vshrl.u32 %v2292, 7
    %v2294 = vsub.s32 %v1796, %v2293
    %v2295 = vrot.slane %v1607, %v2294
    %v2296 = vlaneseq
    %v2297 = vshrl.u32 %v2296, 7
    %v2298 = vsub.s32 %v1801, %v2297
    %v2299 = vrot.slane %v1610, %v2298
    %v2300 = vsel %vm1806, %v2299, %v2295
    %v2301 = vlaneseq
    %v2302 = vshrl.u32 %v2301, 7
    %v2303 = vsub.s32 %v1796, %v2302
    %v2304 = vrot.slane %v1613, %v2303
    %v2305 = vlaneseq
    %v2306 = vshrl.u32 %v2305, 7
    %v2307 = vsub.s32 %v1801, %v2306
    %v2308 = vrot.slane %v1616, %v2307
    %v2309 = vsel %vm1806, %v2308, %v2304
    %v2310 = vlaneseq
    %v2311 = vshrl.u32 %v2310, 7
    %v2312 = vsub.s32 %v1796, %v2311
    %v2313 = vrot.slane %v1619, %v2312
    %v2314 = vlaneseq
    %v2315 = vshrl.u32 %v2314, 7
    %v2316 = vsub.s32 %v1801, %v2315
    %v2317 = vrot.slane %v1622, %v2316
    %v2318 = vsel %vm1806, %v2317, %v2313
    %v2319 = vlaneseq
    %v2320 = vshrl.u32 %v2319, 7
    %v2321 = vsub.s32 %v1796, %v2320
    %v2322 = vrot.slane %v1625, %v2321
    %v2323 = vlaneseq
    %v2324 = vshrl.u32 %v2323, 7
    %v2325 = vsub.s32 %v1801, %v2324
    %v2326 = vrot.slane %v1628, %v2325
    %v2327 = vsel %vm1806, %v2326, %v2322
    %v2328 = vlaneseq
    %v2329 = vshrl.u32 %v2328, 7
    %v2330 = vsub.s32 %v1796, %v2329
    %v2331 = vrot.slane %v1631, %v2330
    %v2332 = vlaneseq
    %v2333 = vshrl.u32 %v2332, 7
    %v2334 = vsub.s32 %v1801, %v2333
    %v2335 = vrot.slane %v1634, %v2334
    %v2336 = vsel %vm1806, %v2335, %v2331
    %v2337 = vlaneseq
    %v2338 = vshrl.u32 %v2337, 7
    %v2339 = vsub.s32 %v1796, %v2338
    %v2340 = vrot.slane %v1637, %v2339
    %v2341 = vlaneseq
    %v2342 = vshrl.u32 %v2341, 7
    %v2343 = vsub.s32 %v1801, %v2342
    %v2344 = vrot.slane %v1640, %v2343
    %v2345 = vsel %vm1806, %v2344, %v2340
    %v2346 = vlaneseq
    %v2347 = vshrl.u32 %v2346, 7
    %v2348 = vsub.s32 %v1796, %v2347
    %v2349 = vrot.slane %v1643, %v2348
    %v2350 = vlaneseq
    %v2351 = vshrl.u32 %v2350, 7
    %v2352 = vsub.s32 %v1801, %v2351
    %v2353 = vrot.slane %v1646, %v2352
    %v2354 = vsel %vm1806, %v2353, %v2349
    %v2355 = vlaneseq
    %v2356 = vshrl.u32 %v2355, 7
    %v2357 = vsub.s32 %v1796, %v2356
    %v2358 = vrot.slane %v1649, %v2357
    %v2359 = vlaneseq
    %v2360 = vshrl.u32 %v2359, 7
    %v2361 = vsub.s32 %v1801, %v2360
    %v2362 = vrot.slane %v1652, %v2361
    %v2363 = vsel %vm1806, %v2362, %v2358
    %v2364 = vlaneseq
    %v2365 = vshrl.u32 %v2364, 7
    %v2366 = vsub.s32 %v1796, %v2365
    %v2367 = vrot.slane %v1655, %v2366
    %v2368 = vlaneseq
    %v2369 = vshrl.u32 %v2368, 7
    %v2370 = vsub.s32 %v1801, %v2369
    %v2371 = vrot.slane %v1658, %v2370
    %v2372 = vsel %vm1806, %v2371, %v2367
    %v2373 = vlaneseq
    %v2374 = vshrl.u32 %v2373, 7
    %v2375 = vsub.s32 %v1796, %v2374
    %v2376 = vrot.slane %v1661, %v2375
    %v2377 = vlaneseq
    %v2378 = vshrl.u32 %v2377, 7
    %v2379 = vsub.s32 %v1801, %v2378
    %v2380 = vrot.slane %v1664, %v2379
    %v2381 = vsel %vm1806, %v2380, %v2376
    %v2382 = vlaneseq
    %v2383 = vshrl.u32 %v2382, 7
    %v2384 = vsub.s32 %v1796, %v2383
    %v2385 = vrot.slane %v1667, %v2384
    %v2386 = vlaneseq
    %v2387 = vshrl.u32 %v2386, 7
    %v2388 = vsub.s32 %v1801, %v2387
    %v2389 = vrot.slane %v1670, %v2388
    %v2390 = vsel %vm1806, %v2389, %v2385
    %v2391 = vlaneseq
    %v2392 = vshrl.u32 %v2391, 7
    %v2393 = vsub.s32 %v1796, %v2392
    %v2394 = vrot.slane %v1673, %v2393
    %v2395 = vlaneseq
    %v2396 = vshrl.u32 %v2395, 7
    %v2397 = vsub.s32 %v1801, %v2396
    %v2398 = vrot.slane %v1676, %v2397
    %v2399 = vsel %vm1806, %v2398, %v2394
    %v2400 = vlaneseq
    %v2401 = vshrl.u32 %v2400, 7
    %v2402 = vsub.s32 %v1796, %v2401
    %v2403 = vrot.slane %v1679, %v2402
    %v2404 = vlaneseq
    %v2405 = vshrl.u32 %v2404, 7
    %v2406 = vsub.s32 %v1801, %v2405
    %v2407 = vrot.slane %v1682, %v2406
    %v2408 = vsel %vm1806, %v2407, %v2403
    %v2409 = vlaneseq
    %v2410 = vshrl.u32 %v2409, 7
    %v2411 = vsub.s32 %v1796, %v2410
    %v2412 = vrot.slane %v1685, %v2411
    %v2413 = vlaneseq
    %v2414 = vshrl.u32 %v2413, 7
    %v2415 = vsub.s32 %v1801, %v2414
    %v2416 = vrot.slane %v1688, %v2415
    %v2417 = vsel %vm1806, %v2416, %v2412
    %v2418 = vlaneseq
    %v2419 = vshrl.u32 %v2418, 7
    %v2420 = vsub.s32 %v1796, %v2419
    %v2421 = vrot.slane %v1691, %v2420
    %v2422 = vlaneseq
    %v2423 = vshrl.u32 %v2422, 7
    %v2424 = vsub.s32 %v1801, %v2423
    %v2425 = vrot.slane %v1694, %v2424
    %v2426 = vsel %vm1806, %v2425, %v2421
    %v2427 = vlaneseq
    %v2428 = vshrl.u32 %v2427, 7
    %v2429 = vsub.s32 %v1796, %v2428
    %v2430 = vrot.slane %v1697, %v2429
    %v2431 = vlaneseq
    %v2432 = vshrl.u32 %v2431, 7
    %v2433 = vsub.s32 %v1801, %v2432
    %v2434 = vrot.slane %v1700, %v2433
    %v2435 = vsel %vm1806, %v2434, %v2430
    %v2436 = vlaneseq
    %v2437 = vshrl.u32 %v2436, 7
    %v2438 = vsub.s32 %v1796, %v2437
    %v2439 = vrot.slane %v1703, %v2438
    %v2440 = vlaneseq
    %v2441 = vshrl.u32 %v2440, 7
    %v2442 = vsub.s32 %v1801, %v2441
    %v2443 = vrot.slane %v1706, %v2442
    %v2444 = vsel %vm1806, %v2443, %v2439
    %v2445 = vlaneseq
    %v2446 = vshrl.u32 %v2445, 7
    %v2447 = vsub.s32 %v1796, %v2446
    %v2448 = vrot.slane %v1709, %v2447
    %v2449 = vlaneseq
    %v2450 = vshrl.u32 %v2449, 7
    %v2451 = vsub.s32 %v1801, %v2450
    %v2452 = vrot.slane %v1712, %v2451
    %v2453 = vsel %vm1806, %v2452, %v2448
    %v2454 = vlaneseq
    %v2455 = vshrl.u32 %v2454, 7
    %v2456 = vsub.s32 %v1796, %v2455
    %v2457 = vrot.slane %v1715, %v2456
    %v2458 = vlaneseq
    %v2459 = vshrl.u32 %v2458, 7
    %v2460 = vsub.s32 %v1801, %v2459
    %v2461 = vrot.slane %v1718, %v2460
    %v2462 = vsel %vm1806, %v2461, %v2457
    %v2463 = vlaneseq
    %v2464 = vshrl.u32 %v2463, 7
    %v2465 = vsub.s32 %v1796, %v2464
    %v2466 = vrot.slane %v1721, %v2465
    %v2467 = vlaneseq
    %v2468 = vshrl.u32 %v2467, 7
    %v2469 = vsub.s32 %v1801, %v2468
    %v2470 = vrot.slane %v1724, %v2469
    %v2471 = vsel %vm1806, %v2470, %v2466
    %v2472 = vlaneseq
    %v2473 = vshrl.u32 %v2472, 7
    %v2474 = vsub.s32 %v1796, %v2473
    %v2475 = vrot.slane %v1727, %v2474
    %v2476 = vlaneseq
    %v2477 = vshrl.u32 %v2476, 7
    %v2478 = vsub.s32 %v1801, %v2477
    %v2479 = vrot.slane %v1730, %v2478
    %v2480 = vsel %vm1806, %v2479, %v2475
    %v2481 = vsel %vm2087, %v2210, %v2201
    %v2482 = vsel %vm2089, %v2219, %v2481
    %v2483 = vsel %vm2091, %v2228, %v2482
    %v2484 = vsel %vm2093, %v2237, %v2483
    %v2485 = vsel %vm1010, %v2255, %v2246
    %v2486 = vsel %vm2096, %v2264, %v2485
    %v2487 = vsel %vm1015, %v2273, %v2486
    %v2488 = vsel %vm2087, %v2282, %v2487
    %v2489 = vsel %vm2089, %v2291, %v2488
    %v2490 = vsel %vm2091, %v2300, %v2489
    %v2491 = vsel %vm2093, %v2309, %v2490
    %v2492 = vsel %vm1010, %v2327, %v2318
    %v2493 = vsel %vm2096, %v2336, %v2492
    %v2494 = vsel %vm2087, %v2354, %v2345
    %v2495 = vsel %vm2089, %v2363, %v2494
    %v2496 = vsel %vm2091, %v2372, %v2495
    %v2497 = vsel %vm2093, %v2381, %v2496
    %v2498 = vsel %vm1010, %v2399, %v2390
    %v2499 = vsel %vm2096, %v2408, %v2498
    %v2500 = vsel %vm1015, %v2417, %v2499
    %v2501 = vsel %vm2087, %v2426, %v2500
    %v2502 = vsel %vm2089, %v2435, %v2501
    %v2503 = vsel %vm2091, %v2444, %v2502
    %v2504 = vsel %vm2093, %v2453, %v2503
    %v2505 = vsel %vm1010, %v2471, %v2462
    %v2506 = vsel %vm2096, %v2480, %v2505
    %v2511 = vsel %vm2124, 0.0, %v2484
    %v2512 = vsel %vm2124, 0.0, %v2497
    %v2513 = vsel %vm2124, %v2493, 0.0
    %v2514 = vsel %vm2124, %v2506, 0.0
    %vm2519 = vcmask 1046528
    %v2520 = vrot.slane %v2125, 1
    %v2521 = vrot.slane %v2102, 1
    %v2522 = vsel %vm2519, %v2520, %v2521
    %v2523 = vrot.slane %v2127, 1
    %v2524 = vsel %vm2519, %v2521, %v2523
    %v2525 = vrot.slane %v2126, 1
    %v2526 = vrot.slane %v2115, 1
    %v2527 = vsel %vm2519, %v2525, %v2526
    %v2528 = vrot.slane %v2128, 1
    %v2529 = vsel %vm2519, %v2526, %v2528
    %2530 = vrot.lane.b32.xlu0 %v2522, 16
    %v2531 = vpop.permute.xlu0 %2530
    %2532 = vrot.lane.b32.xlu0 %v2524, 16
    %v2533 = vpop.permute.xlu0 %2532
    %2534 = vrot.lane.b32.xlu0 %v2527, 16
    %v2535 = vpop.permute.xlu0 %2534
    %2536 = vrot.lane.b32.xlu0 %v2529, 16
    %v2537 = vpop.permute.xlu0 %2536
    %vm2542 = vcmask 1045504
    %v2543 = vrot.slane %v2125, 2
    %v2544 = vrot.slane %v2102, 2
    %v2545 = vsel %vm2542, %v2543, %v2544
    %v2546 = vrot.slane %v2127, 2
    %v2547 = vsel %vm2542, %v2544, %v2546
    %v2548 = vrot.slane %v2126, 2
    %v2549 = vrot.slane %v2115, 2
    %v2550 = vsel %vm2542, %v2548, %v2549
    %v2551 = vrot.slane %v2128, 2
    %v2552 = vsel %vm2542, %v2549, %v2551
    %2553 = vrot.lane.b32.xlu0 %v2545, 32
    %v2554 = vpop.permute.xlu0 %2553
    %2555 = vrot.lane.b32.xlu0 %v2547, 32
    %v2556 = vpop.permute.xlu0 %2555
    %2557 = vrot.lane.b32.xlu0 %v2550, 32
    %v2558 = vpop.permute.xlu0 %2557
    %2559 = vrot.lane.b32.xlu0 %v2552, 32
    %v2560 = vpop.permute.xlu0 %2559
    %vm2565 = vcmask 1044480
    %v2566 = vrot.slane %v2125, 3
    %v2567 = vrot.slane %v2102, 3
    %v2568 = vsel %vm2565, %v2566, %v2567
    %v2569 = vrot.slane %v2127, 3
    %v2570 = vsel %vm2565, %v2567, %v2569
    %v2571 = vrot.slane %v2126, 3
    %v2572 = vrot.slane %v2115, 3
    %v2573 = vsel %vm2565, %v2571, %v2572
    %v2574 = vrot.slane %v2128, 3
    %v2575 = vsel %vm2565, %v2572, %v2574
    %2576 = vrot.lane.b32.xlu0 %v2568, 48
    %v2577 = vpop.permute.xlu0 %2576
    %2578 = vrot.lane.b32.xlu0 %v2570, 48
    %v2579 = vpop.permute.xlu0 %2578
    %2580 = vrot.lane.b32.xlu0 %v2573, 48
    %v2581 = vpop.permute.xlu0 %2580
    %2582 = vrot.lane.b32.xlu0 %v2575, 48
    %v2583 = vpop.permute.xlu0 %2582
    %vm2588 = vcmask 1043456
    %v2589 = vrot.slane %v2125, 4
    %v2590 = vrot.slane %v2102, 4
    %v2591 = vsel %vm2588, %v2589, %v2590
    %v2592 = vrot.slane %v2127, 4
    %v2593 = vsel %vm2588, %v2590, %v2592
    %v2594 = vrot.slane %v2126, 4
    %v2595 = vrot.slane %v2115, 4
    %v2596 = vsel %vm2588, %v2594, %v2595
    %v2597 = vrot.slane %v2128, 4
    %v2598 = vsel %vm2588, %v2595, %v2597
    %2599 = vrot.lane.b32.xlu0 %v2591, 64
    %v2600 = vpop.permute.xlu0 %2599
    %2601 = vrot.lane.b32.xlu0 %v2593, 64
    %v2602 = vpop.permute.xlu0 %2601
    %2603 = vrot.lane.b32.xlu0 %v2596, 64
    %v2604 = vpop.permute.xlu0 %2603
    %2605 = vrot.lane.b32.xlu0 %v2598, 64
    %v2606 = vpop.permute.xlu0 %2605
    %v2611 = vrot.slane %v2125, 5
    %v2612 = vrot.slane %v2102, 5
    %v2613 = vsel %vm2124, %v2611, %v2612
    %v2614 = vrot.slane %v2127, 5
    %v2615 = vsel %vm2124, %v2612, %v2614
    %v2616 = vrot.slane %v2126, 5
    %v2617 = vrot.slane %v2115, 5
    %v2618 = vsel %vm2124, %v2616, %v2617
    %v2619 = vrot.slane %v2128, 5
    %v2620 = vsel %vm2124, %v2617, %v2619
    %2621 = vrot.lane.b32.xlu0 %v2613, 80
    %v2622 = vpop.permute.xlu0 %2621
    %2623 = vrot.lane.b32.xlu0 %v2615, 80
    %v2624 = vpop.permute.xlu0 %2623
    %2625 = vrot.lane.b32.xlu0 %v2618, 80
    %v2626 = vpop.permute.xlu0 %2625
    %2627 = vrot.lane.b32.xlu0 %v2620, 80
    %v2628 = vpop.permute.xlu0 %2627
    %v2633 = vrot.slane %v2125, 6
    %v2634 = vrot.slane %v2102, 6
    %v2635 = vsel %vm371, %v2633, %v2634
    %v2636 = vrot.slane %v2127, 6
    %v2637 = vsel %vm371, %v2634, %v2636
    %v2638 = vrot.slane %v2126, 6
    %v2639 = vrot.slane %v2115, 6
    %v2640 = vsel %vm371, %v2638, %v2639
    %v2641 = vrot.slane %v2128, 6
    %v2642 = vsel %vm371, %v2639, %v2641
    %2643 = vrot.lane.b32.xlu0 %v2635, 96
    %v2644 = vpop.permute.xlu0 %2643
    %2645 = vrot.lane.b32.xlu0 %v2637, 96
    %v2646 = vpop.permute.xlu0 %2645
    %2647 = vrot.lane.b32.xlu0 %v2640, 96
    %v2648 = vpop.permute.xlu0 %2647
    %2649 = vrot.lane.b32.xlu0 %v2642, 96
    %v2650 = vpop.permute.xlu0 %2649
    %2657 = vrot.lane.b32.xlu0 %v2511, 112
    %v2658 = vpop.permute.xlu0 %2657
    %2659 = vrot.lane.b32.xlu0 %v2491, 112
    %v2660 = vpop.permute.xlu0 %2659
    %2661 = vrot.lane.b32.xlu0 %v2512, 112
    %v2662 = vpop.permute.xlu0 %2661
    %2663 = vrot.lane.b32.xlu0 %v2504, 112
    %v2664 = vpop.permute.xlu0 %2663
    %v2671 = vrot.slane %v2511, 1
    %v2672 = vrot.slane %v2491, 1
    %v2673 = vsel %vm2519, %v2671, %v2672
    %v2674 = vrot.slane %v2513, 1
    %v2675 = vsel %vm2519, %v2672, %v2674
    %v2676 = vrot.slane %v2512, 1
    %v2677 = vrot.slane %v2504, 1
    %v2678 = vsel %vm2519, %v2676, %v2677
    %v2679 = vrot.slane %v2514, 1
    %v2680 = vsel %vm2519, %v2677, %v2679
    %v2685 = vrot.slane %v2511, 2
    %v2686 = vrot.slane %v2491, 2
    %v2687 = vsel %vm2542, %v2685, %v2686
    %v2688 = vrot.slane %v2513, 2
    %v2689 = vsel %vm2542, %v2686, %v2688
    %v2690 = vrot.slane %v2512, 2
    %v2691 = vrot.slane %v2504, 2
    %v2692 = vsel %vm2542, %v2690, %v2691
    %v2693 = vrot.slane %v2514, 2
    %v2694 = vsel %vm2542, %v2691, %v2693
    %2695 = vrot.lane.b32.xlu0 %v2687, 16
    %v2696 = vpop.permute.xlu0 %2695
    %2697 = vrot.lane.b32.xlu0 %v2689, 16
    %v2698 = vpop.permute.xlu0 %2697
    %2699 = vrot.lane.b32.xlu0 %v2692, 16
    %v2700 = vpop.permute.xlu0 %2699
    %2701 = vrot.lane.b32.xlu0 %v2694, 16
    %v2702 = vpop.permute.xlu0 %2701
    %v2707 = vrot.slane %v2511, 3
    %v2708 = vrot.slane %v2491, 3
    %v2709 = vsel %vm2565, %v2707, %v2708
    %v2710 = vrot.slane %v2513, 3
    %v2711 = vsel %vm2565, %v2708, %v2710
    %v2712 = vrot.slane %v2512, 3
    %v2713 = vrot.slane %v2504, 3
    %v2714 = vsel %vm2565, %v2712, %v2713
    %v2715 = vrot.slane %v2514, 3
    %v2716 = vsel %vm2565, %v2713, %v2715
    %2717 = vrot.lane.b32.xlu0 %v2709, 32
    %v2718 = vpop.permute.xlu0 %2717
    %2719 = vrot.lane.b32.xlu0 %v2711, 32
    %v2720 = vpop.permute.xlu0 %2719
    %2721 = vrot.lane.b32.xlu0 %v2714, 32
    %v2722 = vpop.permute.xlu0 %2721
    %2723 = vrot.lane.b32.xlu0 %v2716, 32
    %v2724 = vpop.permute.xlu0 %2723
    %v2729 = vrot.slane %v2511, 4
    %v2730 = vrot.slane %v2491, 4
    %v2731 = vsel %vm2588, %v2729, %v2730
    %v2732 = vrot.slane %v2513, 4
    %v2733 = vsel %vm2588, %v2730, %v2732
    %v2734 = vrot.slane %v2512, 4
    %v2735 = vrot.slane %v2504, 4
    %v2736 = vsel %vm2588, %v2734, %v2735
    %v2737 = vrot.slane %v2514, 4
    %v2738 = vsel %vm2588, %v2735, %v2737
    %2739 = vrot.lane.b32.xlu0 %v2731, 48
    %v2740 = vpop.permute.xlu0 %2739
    %2741 = vrot.lane.b32.xlu0 %v2733, 48
    %v2742 = vpop.permute.xlu0 %2741
    %2743 = vrot.lane.b32.xlu0 %v2736, 48
    %v2744 = vpop.permute.xlu0 %2743
    %2745 = vrot.lane.b32.xlu0 %v2738, 48
    %v2746 = vpop.permute.xlu0 %2745
    %v2751 = vrot.slane %v2511, 5
    %v2752 = vrot.slane %v2491, 5
    %v2753 = vsel %vm2124, %v2751, %v2752
    %v2754 = vrot.slane %v2513, 5
    %v2755 = vsel %vm2124, %v2752, %v2754
    %v2756 = vrot.slane %v2512, 5
    %v2757 = vrot.slane %v2504, 5
    %v2758 = vsel %vm2124, %v2756, %v2757
    %v2759 = vrot.slane %v2514, 5
    %v2760 = vsel %vm2124, %v2757, %v2759
    %2761 = vrot.lane.b32.xlu0 %v2753, 64
    %v2762 = vpop.permute.xlu0 %2761
    %2763 = vrot.lane.b32.xlu0 %v2755, 64
    %v2764 = vpop.permute.xlu0 %2763
    %2765 = vrot.lane.b32.xlu0 %v2758, 64
    %v2766 = vpop.permute.xlu0 %2765
    %2767 = vrot.lane.b32.xlu0 %v2760, 64
    %v2768 = vpop.permute.xlu0 %2767
    %v2773 = vrot.slane %v2511, 6
    %v2774 = vrot.slane %v2491, 6
    %v2775 = vsel %vm371, %v2773, %v2774
    %v2776 = vrot.slane %v2513, 6
    %v2777 = vsel %vm371, %v2774, %v2776
    %v2778 = vrot.slane %v2512, 6
    %v2779 = vrot.slane %v2504, 6
    %v2780 = vsel %vm371, %v2778, %v2779
    %v2781 = vrot.slane %v2514, 6
    %v2782 = vsel %vm371, %v2779, %v2781
    %2783 = vrot.lane.b32.xlu0 %v2775, 80
    %v2784 = vpop.permute.xlu0 %2783
    %2785 = vrot.lane.b32.xlu0 %v2777, 80
    %v2786 = vpop.permute.xlu0 %2785
    %2787 = vrot.lane.b32.xlu0 %v2780, 80
    %v2788 = vpop.permute.xlu0 %2787
    %2789 = vrot.lane.b32.xlu0 %v2782, 80
    %v2790 = vpop.permute.xlu0 %2789
    %vm2795 = vcmask 130048
    %v2796 = vsel %vm2795, %v2125, %v2531
    %v2797 = vsel %vm2795, %v2102, %v2533
    %v2798 = vsel %vm2795, %v2126, %v2535
    %v2799 = vsel %vm2795, %v2115, %v2537
    %v2800 = vsel %vm728, %v2796, %v2554
    %v2801 = vsel %vm728, %v2797, %v2556
    %v2802 = vsel %vm728, %v2798, %v2558
    %v2803 = vsel %vm728, %v2799, %v2560
    %vm2804 = vcmask 392192
    %v2805 = vsel %vm2804, %v2800, %v2577
    %v2806 = vsel %vm2804, %v2801, %v2579
    %v2807 = vsel %vm2804, %v2802, %v2581
    %v2808 = vsel %vm2804, %v2803, %v2583
    %vm2809 = vcmask 523264
    %v2810 = vsel %vm2809, %v2805, %v2600
    %v2811 = vsel %vm2809, %v2806, %v2602
    %v2812 = vsel %vm2809, %v2807, %v2604
    %v2813 = vsel %vm2809, %v2808, %v2606
    %vm2814 = vcmask 654336
    %v2815 = vsel %vm2814, %v2810, %v2622
    %v2816 = vsel %vm2814, %v2811, %v2624
    %v2817 = vsel %vm2814, %v2812, %v2626
    %v2818 = vsel %vm2814, %v2813, %v2628
    %vm2819 = vcmask 785408
    %v2820 = vsel %vm2819, %v2815, %v2644
    %v2821 = vsel %vm2819, %v2816, %v2646
    %v2822 = vsel %vm2819, %v2817, %v2648
    %v2823 = vsel %vm2819, %v2818, %v2650
    %vm2824 = vcmask 916480
    %v2825 = vsel %vm2824, %v2820, %v2658
    %v2826 = vsel %vm2824, %v2821, %v2660
    %v2827 = vsel %vm2824, %v2822, %v2662
    %v2828 = vsel %vm2824, %v2823, %v2664
    %v2829 = vsel %vm2795, %v2673, %v2696
    %v2830 = vsel %vm2795, %v2675, %v2698
    %v2831 = vsel %vm2795, %v2678, %v2700
    %v2832 = vsel %vm2795, %v2680, %v2702
    %v2833 = vsel %vm728, %v2829, %v2718
    %v2834 = vsel %vm728, %v2830, %v2720
    %v2835 = vsel %vm728, %v2831, %v2722
    %v2836 = vsel %vm728, %v2832, %v2724
    %v2837 = vsel %vm2804, %v2833, %v2740
    %v2838 = vsel %vm2804, %v2834, %v2742
    %v2839 = vsel %vm2804, %v2835, %v2744
    %v2840 = vsel %vm2804, %v2836, %v2746
    %v2841 = vsel %vm2809, %v2837, %v2762
    %v2842 = vsel %vm2809, %v2838, %v2764
    %v2843 = vsel %vm2809, %v2839, %v2766
    %v2844 = vsel %vm2809, %v2840, %v2768
    %v2845 = vsel %vm2814, %v2841, %v2784
    %v2846 = vsel %vm2814, %v2842, %v2786
    %v2847 = vsel %vm2814, %v2843, %v2788
    %v2848 = vsel %vm2814, %v2844, %v2790
    %v2849 = vld [vmem:[%s5] sm:$0xff]
    %v2850 = vld [vmem:[%s5 + $0x8] sm:$0xff]
    %v2851 = vld [vmem:[%s5 + $0x10] sm:$0xff]
    %v2852 = vld [vmem:[%s5 + $0x18] sm:$0xff]
    %v2853 = vld [vmem:[%s5 + $0x20] sm:$0xff]
    %v2854 = vld [vmem:[%s5 + $0x28] sm:$0xff]
    %v2855 = vld [vmem:[%s5 + $0x30] sm:$0xff]
    %v2856 = vld [vmem:[%s5 + $0x38] sm:$0xff]
    %v2857 = vld [vmem:[%s5 + $0x40] sm:$0xff]
    %v2858 = vld [vmem:[%s5 + $0x48] sm:$0xff]
    %v2859 = vld [vmem:[%s5 + $0x50] sm:$0xff]
    %v2860 = vld [vmem:[%s5 + $0x58] sm:$0xff]
    %v2861 = vld [vmem:[%s5 + $0x60] sm:$0xff]
    %v2862 = vld [vmem:[%s5 + $0x68] sm:$0xff]
    %v2863 = vld [vmem:[%s5 + $0x70] sm:$0xff]
    %v2864 = vld [vmem:[%s5 + $0x78] sm:$0xff]
    %v2865 = vld [vmem:[%s5 + $0x80] sm:$0xff]
    %v2866 = vld [vmem:[%s5 + $0x88] sm:$0xff]
    %v2867 = vld [vmem:[%s5 + $0x90] sm:$0xff]
    %v2868 = vld [vmem:[%s5 + $0x98] sm:$0xff]
    %v2869 = vld [vmem:[%s5 + $0xa0] sm:$0xff]
    %v2870 = vld [vmem:[%s5 + $0xa8] sm:$0xff]
    %v2871 = vld [vmem:[%s5 + $0xb0] sm:$0xff]
    %v2872 = vld [vmem:[%s5 + $0xb8] sm:$0xff]
    %v2873 = vld [vmem:[%s5 + $0xc0] sm:$0xff]
    %v2874 = vld [vmem:[%s5 + $0xc8] sm:$0xff]
    %v2875 = vld [vmem:[%s5 + $0xd0] sm:$0xff]
    %v2876 = vld [vmem:[%s5 + $0xd8] sm:$0xff]
    %v2878 = vsel %vm2819, %v2845, 0
    %v2881 = vsel %vm2819, %v2846, 0
    %v2884 = vsel %vm2819, %v2847, 0
    %v2887 = vsel %vm2819, %v2848, 0
    %2889 = vmatprep.subr.mxu0 0.0
    %2890 = vmatpush1.msra.mxu0 %v2864
    %2891 = vmatprep.subr.mxu0 0.0
    %2892 = vmatpush1.msra.mxu0 %v2863
    %2893 = vmatprep.subr.mxu0 0.0
    %2894 = vmatpush1.msra.mxu0 %v2862
    %2895 = vmatprep.subr.mxu0 0.0
    %2896 = vmatpush1.msra.mxu0 %v2861
    %2897 = vmatprep.subr.mxu0 0.0
    %2898 = vmatpush1.msra.mxu0 %v2860
    %2899 = vmatprep.subr.mxu0 0.0
    %2900 = vmatpush1.msra.mxu0 %v2859
    %2901 = vmatprep.subr.mxu0 0.0
    %2902 = vmatpush1.msra.mxu0 %v2858
    %2903 = vmatprep.subr.mxu0 0.0
    %2904 = vmatpush1.msra.mxu0 %v2857
    %2905 = vmatprep.subr.mxu0 0.0
    %2906 = vmatpush1.msra.mxu0 %v2856
    %2907 = vmatprep.subr.mxu0 0.0
    %2908 = vmatpush1.msra.mxu0 %v2855
    %2909 = vmatprep.subr.mxu0 0.0
    %2910 = vmatpush1.msra.mxu0 %v2854
    %2911 = vmatprep.subr.mxu0 0.0
    %2912 = vmatpush1.msra.mxu0 %v2853
    %2913 = vmatprep.subr.mxu0 0.0
    %2914 = vmatpush1.msra.mxu0 %v2852
    %2915 = vmatprep.subr.mxu0 0.0
    %2916 = vmatpush1.msra.mxu0 %v2851
    %2917 = vmatprep.subr.mxu0 0.0
    %2918 = vmatpush1.msra.mxu0 %v2850
    %2919 = vmatprep.subr.mxu0 0.0
    %2920 = vmatpush1.msra.mxu0 %v2849
    %2921 = vmatprep.subr.mxu0 0.0
    %2922 = vmatpush2.msra.mxu0 0.0
    %2923 = vmatprep.subr.mxu0 0.0
    %2924 = vmatpush2.msra.mxu0 0.0
    %2925 = vmatprep.subr.mxu0 0.0
    %2926 = vmatpush2.msra.mxu0 0.0
    %2927 = vmatprep.subr.mxu0 0.0
    %2928 = vmatpush2.msra.mxu0 0.0
    %2929 = vmatprep.subr.mxu0 0.0
    %2930 = vmatpush2.msra.mxu0 %v2876
    %2931 = vmatprep.subr.mxu0 0.0
    %2932 = vmatpush2.msra.mxu0 %v2875
    %2933 = vmatprep.subr.mxu0 0.0
    %2934 = vmatpush2.msra.mxu0 %v2874
    %2935 = vmatprep.subr.mxu0 0.0
    %2936 = vmatpush2.msra.mxu0 %v2873
    %2937 = vmatprep.subr.mxu0 0.0
    %2938 = vmatpush2.msra.mxu0 %v2872
    %2939 = vmatprep.subr.mxu0 0.0
    %2940 = vmatpush2.msra.mxu0 %v2871
    %2941 = vmatprep.subr.mxu0 0.0
    %2942 = vmatpush2.msra.mxu0 %v2870
    %2943 = vmatprep.subr.mxu0 0.0
    %2944 = vmatpush2.msra.mxu0 %v2869
    %2945 = vmatprep.subr.mxu0 0.0
    %2946 = vmatpush2.msra.mxu0 %v2868
    %2947 = vmatprep.subr.mxu0 0.0
    %2948 = vmatpush2.msra.mxu0 %v2867
    %2949 = vmatprep.subr.mxu0 0.0
    %2950 = vmatpush2.msra.mxu0 %v2866
    %2951 = vmatprep.subr.mxu0 0.0
    %2952 = vmatpush2.msra.mxu0 %v2865
    %2953 = vmatprep.mubr.f32.mxu0 %v2878
    %2954 = vmatmul.mubr.f32.gmra.mxu0 %v2825
    %v2955 = vpop.f32.mrf.mxu0
    %v2956 = vadd.f32 0.0, %v2955
    %v2957 = vpop.f32.mrf.mxu0
    %2958 = vmatprep.mubr.f32.mxu0 %v2881
    %2959 = vmatmul.mubr.f32.gmra.mxu0 %v2826
    %v2960 = vpop.f32.mrf.mxu0
    %v2961 = vadd.f32 0.0, %v2960
    %v2962 = vpop.f32.mrf.mxu0
    %2963 = vmatprep.mubr.f32.mxu0 %v2884
    %2964 = vmatmul.mubr.f32.gmra.mxu0 %v2827
    %v2965 = vpop.f32.mrf.mxu0
    %v2966 = vadd.f32 0.0, %v2965
    %v2967 = vpop.f32.mrf.mxu0
    %2968 = vmatprep.mubr.f32.mxu0 %v2887
    %2969 = vmatmul.mubr.f32.gmra.mxu0 %v2828
    %v2970 = vpop.f32.mrf.mxu0
    %v2971 = vadd.f32 0.0, %v2970
    %v2972 = vpop.f32.mrf.mxu0
    %2973 = vdwg.mxu0
    %v2974 = vxor.u32 %v2956, 2147483648
    %v2975 = vxor.u32 %v2961, 2147483648
    %v2976 = vxor.u32 %v2966, 2147483648
    %v2977 = vxor.u32 %v2971, 2147483648
    %v2978 = vmul.f32 %v2974, 1.442695
    %v2979 = vpow.pop %v2978
    %v2980 = vmul.f32 %v2975, 1.442695
    %v2981 = vpow.pop %v2980
    %v2982 = vmul.f32 %v2976, 1.442695
    %v2983 = vpow.pop %v2982
    %v2984 = vmul.f32 %v2977, 1.442695
    %v2985 = vpow.pop %v2984
    %v2986 = vadd.f32 %v2979, 1.0
    %v2987 = vadd.f32 %v2981, 1.0
    %v2988 = vadd.f32 %v2983, 1.0
    %v2989 = vadd.f32 %v2985, 1.0
    %v2990 = vrcp.pop %v2986
    %v2991 = vmul.f32 1.0, %v2990
    %v2992 = vrcp.pop %v2987
    %v2993 = vmul.f32 1.0, %v2992
    %v2994 = vrcp.pop %v2988
    %v2995 = vmul.f32 1.0, %v2994
    %v2996 = vrcp.pop %v2989
    %v2997 = vmul.f32 1.0, %v2996
    %v2998 = vlaneseq
    %v2999 = vshrl.u32 %v2998, 7
    %v3000 = vsub.s32 0, %v2999
    %v3001 = vrot.slane %v2991, %v3000
    %3003 = vbcast.lane.b32.xlu0 %v3001, 256
    %v3004 = vpop.permute.xlu0 %3003
    %s3006 = sor.u32 256, 8
    %3007 = vbcast.lane.b32.xlu0 %v3001, %s3006
    %v3008 = vpop.permute.xlu0 %3007
    %v3009 = vlaneseq
    %v3010 = vshrl.u32 %v3009, 7
    %v3011 = vsub.s32 1, %v3010
    %v3012 = vrot.slane %v2991, %v3011
    %3014 = vbcast.lane.b32.xlu0 %v3012, 256
    %v3015 = vpop.permute.xlu0 %3014
    %s3017 = sor.u32 256, 8
    %3018 = vbcast.lane.b32.xlu0 %v3012, %s3017
    %v3019 = vpop.permute.xlu0 %3018
    %v3020 = vlaneseq
    %v3021 = vshrl.u32 %v3020, 7
    %v3022 = vsub.s32 2, %v3021
    %v3023 = vrot.slane %v2991, %v3022
    %3025 = vbcast.lane.b32.xlu0 %v3023, 256
    %v3026 = vpop.permute.xlu0 %3025
    %s3028 = sor.u32 256, 8
    %3029 = vbcast.lane.b32.xlu0 %v3023, %s3028
    %v3030 = vpop.permute.xlu0 %3029
    %v3031 = vlaneseq
    %v3032 = vshrl.u32 %v3031, 7
    %v3033 = vsub.s32 3, %v3032
    %v3034 = vrot.slane %v2991, %v3033
    %3036 = vbcast.lane.b32.xlu0 %v3034, 256
    %v3037 = vpop.permute.xlu0 %3036
    %s3039 = sor.u32 256, 8
    %3040 = vbcast.lane.b32.xlu0 %v3034, %s3039
    %v3041 = vpop.permute.xlu0 %3040
    %v3042 = vlaneseq
    %v3043 = vshrl.u32 %v3042, 7
    %v3044 = vsub.s32 4, %v3043
    %v3045 = vrot.slane %v2991, %v3044
    %3047 = vbcast.lane.b32.xlu0 %v3045, 256
    %v3048 = vpop.permute.xlu0 %3047
    %s3050 = sor.u32 256, 8
    %3051 = vbcast.lane.b32.xlu0 %v3045, %s3050
    %v3052 = vpop.permute.xlu0 %3051
    %v3053 = vlaneseq
    %v3054 = vshrl.u32 %v3053, 7
    %v3055 = vsub.s32 5, %v3054
    %v3056 = vrot.slane %v2991, %v3055
    %3058 = vbcast.lane.b32.xlu0 %v3056, 256
    %v3059 = vpop.permute.xlu0 %3058
    %s3061 = sor.u32 256, 8
    %3062 = vbcast.lane.b32.xlu0 %v3056, %s3061
    %v3063 = vpop.permute.xlu0 %3062
    %v3064 = vlaneseq
    %v3065 = vshrl.u32 %v3064, 7
    %v3066 = vsub.s32 6, %v3065
    %v3067 = vrot.slane %v2991, %v3066
    %3069 = vbcast.lane.b32.xlu0 %v3067, 256
    %v3070 = vpop.permute.xlu0 %3069
    %s3072 = sor.u32 256, 8
    %3073 = vbcast.lane.b32.xlu0 %v3067, %s3072
    %v3074 = vpop.permute.xlu0 %3073
    %v3075 = vlaneseq
    %v3076 = vshrl.u32 %v3075, 7
    %v3077 = vsub.s32 7, %v3076
    %v3078 = vrot.slane %v2991, %v3077
    %3080 = vbcast.lane.b32.xlu0 %v3078, 256
    %v3081 = vpop.permute.xlu0 %3080
    %s3083 = sor.u32 256, 8
    %3084 = vbcast.lane.b32.xlu0 %v3078, %s3083
    %v3085 = vpop.permute.xlu0 %3084
    %v3086 = vlaneseq
    %v3087 = vshrl.u32 %v3086, 7
    %v3088 = vsub.s32 0, %v3087
    %v3089 = vrot.slane %v2993, %v3088
    %3091 = vbcast.lane.b32.xlu0 %v3089, 256
    %v3092 = vpop.permute.xlu0 %3091
    %s3094 = sor.u32 256, 8
    %3095 = vbcast.lane.b32.xlu0 %v3089, %s3094
    %v3096 = vpop.permute.xlu0 %3095
    %v3097 = vlaneseq
    %v3098 = vshrl.u32 %v3097, 7
    %v3099 = vsub.s32 1, %v3098
    %v3100 = vrot.slane %v2993, %v3099
    %3102 = vbcast.lane.b32.xlu0 %v3100, 256
    %v3103 = vpop.permute.xlu0 %3102
    %s3105 = sor.u32 256, 8
    %3106 = vbcast.lane.b32.xlu0 %v3100, %s3105
    %v3107 = vpop.permute.xlu0 %3106
    %v3108 = vlaneseq
    %v3109 = vshrl.u32 %v3108, 7
    %v3110 = vsub.s32 2, %v3109
    %v3111 = vrot.slane %v2993, %v3110
    %3113 = vbcast.lane.b32.xlu0 %v3111, 256
    %v3114 = vpop.permute.xlu0 %3113
    %s3116 = sor.u32 256, 8
    %3117 = vbcast.lane.b32.xlu0 %v3111, %s3116
    %v3118 = vpop.permute.xlu0 %3117
    %v3119 = vlaneseq
    %v3120 = vshrl.u32 %v3119, 7
    %v3121 = vsub.s32 3, %v3120
    %v3122 = vrot.slane %v2993, %v3121
    %3124 = vbcast.lane.b32.xlu0 %v3122, 256
    %v3125 = vpop.permute.xlu0 %3124
    %s3127 = sor.u32 256, 8
    %3128 = vbcast.lane.b32.xlu0 %v3122, %s3127
    %v3129 = vpop.permute.xlu0 %3128
    %v3130 = vlaneseq
    %v3131 = vshrl.u32 %v3130, 7
    %v3132 = vsub.s32 4, %v3131
    %v3133 = vrot.slane %v2993, %v3132
    %3135 = vbcast.lane.b32.xlu0 %v3133, 256
    %v3136 = vpop.permute.xlu0 %3135
    %s3138 = sor.u32 256, 8
    %3139 = vbcast.lane.b32.xlu0 %v3133, %s3138
    %v3140 = vpop.permute.xlu0 %3139
    %v3141 = vlaneseq
    %v3142 = vshrl.u32 %v3141, 7
    %v3143 = vsub.s32 5, %v3142
    %v3144 = vrot.slane %v2993, %v3143
    %3146 = vbcast.lane.b32.xlu0 %v3144, 256
    %v3147 = vpop.permute.xlu0 %3146
    %s3149 = sor.u32 256, 8
    %3150 = vbcast.lane.b32.xlu0 %v3144, %s3149
    %v3151 = vpop.permute.xlu0 %3150
    %v3152 = vlaneseq
    %v3153 = vshrl.u32 %v3152, 7
    %v3154 = vsub.s32 6, %v3153
    %v3155 = vrot.slane %v2993, %v3154
    %3157 = vbcast.lane.b32.xlu0 %v3155, 256
    %v3158 = vpop.permute.xlu0 %3157
    %s3160 = sor.u32 256, 8
    %3161 = vbcast.lane.b32.xlu0 %v3155, %s3160
    %v3162 = vpop.permute.xlu0 %3161
    %v3163 = vlaneseq
    %v3164 = vshrl.u32 %v3163, 7
    %v3165 = vsub.s32 7, %v3164
    %v3166 = vrot.slane %v2993, %v3165
    %3168 = vbcast.lane.b32.xlu0 %v3166, 256
    %v3169 = vpop.permute.xlu0 %3168
    %s3171 = sor.u32 256, 8
    %3172 = vbcast.lane.b32.xlu0 %v3166, %s3171
    %v3173 = vpop.permute.xlu0 %3172
    %v3174 = vlaneseq
    %v3175 = vshrl.u32 %v3174, 7
    %v3176 = vsub.s32 0, %v3175
    %v3177 = vrot.slane %v2995, %v3176
    %3179 = vbcast.lane.b32.xlu0 %v3177, 256
    %v3180 = vpop.permute.xlu0 %3179
    %s3182 = sor.u32 256, 8
    %3183 = vbcast.lane.b32.xlu0 %v3177, %s3182
    %v3184 = vpop.permute.xlu0 %3183
    %v3185 = vlaneseq
    %v3186 = vshrl.u32 %v3185, 7
    %v3187 = vsub.s32 1, %v3186
    %v3188 = vrot.slane %v2995, %v3187
    %3190 = vbcast.lane.b32.xlu0 %v3188, 256
    %v3191 = vpop.permute.xlu0 %3190
    %s3193 = sor.u32 256, 8
    %3194 = vbcast.lane.b32.xlu0 %v3188, %s3193
    %v3195 = vpop.permute.xlu0 %3194
    %v3196 = vlaneseq
    %v3197 = vshrl.u32 %v3196, 7
    %v3198 = vsub.s32 2, %v3197
    %v3199 = vrot.slane %v2995, %v3198
    %3201 = vbcast.lane.b32.xlu0 %v3199, 256
    %v3202 = vpop.permute.xlu0 %3201
    %s3204 = sor.u32 256, 8
    %3205 = vbcast.lane.b32.xlu0 %v3199, %s3204
    %v3206 = vpop.permute.xlu0 %3205
    %v3207 = vlaneseq
    %v3208 = vshrl.u32 %v3207, 7
    %v3209 = vsub.s32 3, %v3208
    %v3210 = vrot.slane %v2995, %v3209
    %3212 = vbcast.lane.b32.xlu0 %v3210, 256
    %v3213 = vpop.permute.xlu0 %3212
    %s3215 = sor.u32 256, 8
    %3216 = vbcast.lane.b32.xlu0 %v3210, %s3215
    %v3217 = vpop.permute.xlu0 %3216
    %v3218 = vlaneseq
    %v3219 = vshrl.u32 %v3218, 7
    %v3220 = vsub.s32 4, %v3219
    %v3221 = vrot.slane %v2995, %v3220
    %3223 = vbcast.lane.b32.xlu0 %v3221, 256
    %v3224 = vpop.permute.xlu0 %3223
    %s3226 = sor.u32 256, 8
    %3227 = vbcast.lane.b32.xlu0 %v3221, %s3226
    %v3228 = vpop.permute.xlu0 %3227
    %v3229 = vlaneseq
    %v3230 = vshrl.u32 %v3229, 7
    %v3231 = vsub.s32 5, %v3230
    %v3232 = vrot.slane %v2995, %v3231
    %3234 = vbcast.lane.b32.xlu0 %v3232, 256
    %v3235 = vpop.permute.xlu0 %3234
    %s3237 = sor.u32 256, 8
    %3238 = vbcast.lane.b32.xlu0 %v3232, %s3237
    %v3239 = vpop.permute.xlu0 %3238
    %v3240 = vlaneseq
    %v3241 = vshrl.u32 %v3240, 7
    %v3242 = vsub.s32 6, %v3241
    %v3243 = vrot.slane %v2995, %v3242
    %3245 = vbcast.lane.b32.xlu0 %v3243, 256
    %v3246 = vpop.permute.xlu0 %3245
    %s3248 = sor.u32 256, 8
    %3249 = vbcast.lane.b32.xlu0 %v3243, %s3248
    %v3250 = vpop.permute.xlu0 %3249
    %v3251 = vlaneseq
    %v3252 = vshrl.u32 %v3251, 7
    %v3253 = vsub.s32 7, %v3252
    %v3254 = vrot.slane %v2995, %v3253
    %3256 = vbcast.lane.b32.xlu0 %v3254, 256
    %v3257 = vpop.permute.xlu0 %3256
    %s3259 = sor.u32 256, 8
    %3260 = vbcast.lane.b32.xlu0 %v3254, %s3259
    %v3261 = vpop.permute.xlu0 %3260
    %v3262 = vlaneseq
    %v3263 = vshrl.u32 %v3262, 7
    %v3264 = vsub.s32 0, %v3263
    %v3265 = vrot.slane %v2997, %v3264
    %3267 = vbcast.lane.b32.xlu0 %v3265, 256
    %v3268 = vpop.permute.xlu0 %3267
    %s3270 = sor.u32 256, 8
    %3271 = vbcast.lane.b32.xlu0 %v3265, %s3270
    %v3272 = vpop.permute.xlu0 %3271
    %v3273 = vlaneseq
    %v3274 = vshrl.u32 %v3273, 7
    %v3275 = vsub.s32 1, %v3274
    %v3276 = vrot.slane %v2997, %v3275
    %3278 = vbcast.lane.b32.xlu0 %v3276, 256
    %v3279 = vpop.permute.xlu0 %3278
    %s3281 = sor.u32 256, 8
    %3282 = vbcast.lane.b32.xlu0 %v3276, %s3281
    %v3283 = vpop.permute.xlu0 %3282
    %v3284 = vlaneseq
    %v3285 = vshrl.u32 %v3284, 7
    %v3286 = vsub.s32 2, %v3285
    %v3287 = vrot.slane %v2997, %v3286
    %3289 = vbcast.lane.b32.xlu0 %v3287, 256
    %v3290 = vpop.permute.xlu0 %3289
    %s3292 = sor.u32 256, 8
    %3293 = vbcast.lane.b32.xlu0 %v3287, %s3292
    %v3294 = vpop.permute.xlu0 %3293
    %v3295 = vlaneseq
    %v3296 = vshrl.u32 %v3295, 7
    %v3297 = vsub.s32 3, %v3296
    %v3298 = vrot.slane %v2997, %v3297
    %3300 = vbcast.lane.b32.xlu0 %v3298, 256
    %v3301 = vpop.permute.xlu0 %3300
    %s3303 = sor.u32 256, 8
    %3304 = vbcast.lane.b32.xlu0 %v3298, %s3303
    %v3305 = vpop.permute.xlu0 %3304
    %v3306 = vlaneseq
    %v3307 = vshrl.u32 %v3306, 7
    %v3308 = vsub.s32 4, %v3307
    %v3309 = vrot.slane %v2997, %v3308
    %3311 = vbcast.lane.b32.xlu0 %v3309, 256
    %v3312 = vpop.permute.xlu0 %3311
    %s3314 = sor.u32 256, 8
    %3315 = vbcast.lane.b32.xlu0 %v3309, %s3314
    %v3316 = vpop.permute.xlu0 %3315
    %v3317 = vlaneseq
    %v3318 = vshrl.u32 %v3317, 7
    %v3319 = vsub.s32 5, %v3318
    %v3320 = vrot.slane %v2997, %v3319
    %3322 = vbcast.lane.b32.xlu0 %v3320, 256
    %v3323 = vpop.permute.xlu0 %3322
    %s3325 = sor.u32 256, 8
    %3326 = vbcast.lane.b32.xlu0 %v3320, %s3325
    %v3327 = vpop.permute.xlu0 %3326
    %v3328 = vlaneseq
    %v3329 = vshrl.u32 %v3328, 7
    %v3330 = vsub.s32 6, %v3329
    %v3331 = vrot.slane %v2997, %v3330
    %3333 = vbcast.lane.b32.xlu0 %v3331, 256
    %v3334 = vpop.permute.xlu0 %3333
    %s3336 = sor.u32 256, 8
    %3337 = vbcast.lane.b32.xlu0 %v3331, %s3336
    %v3338 = vpop.permute.xlu0 %3337
    %v3339 = vlaneseq
    %v3340 = vshrl.u32 %v3339, 7
    %v3341 = vsub.s32 7, %v3340
    %v3342 = vrot.slane %v2997, %v3341
    %3344 = vbcast.lane.b32.xlu0 %v3342, 256
    %v3345 = vpop.permute.xlu0 %3344
    %s3347 = sor.u32 256, 8
    %3348 = vbcast.lane.b32.xlu0 %v3342, %s3347
    %v3349 = vpop.permute.xlu0 %3348
    %v3350 = vmul.f32 %v1218, %v3004
    %v3351 = vmul.f32 %v1219, %v3008
    %v3352 = vmul.f32 %v1220, %v3015
    %v3353 = vmul.f32 %v1221, %v3019
    %v3354 = vmul.f32 %v1222, %v3026
    %v3355 = vmul.f32 %v1223, %v3030
    %v3356 = vmul.f32 %v1224, %v3037
    %v3357 = vmul.f32 %v1225, %v3041
    %v3358 = vmul.f32 %v1226, %v3048
    %v3359 = vmul.f32 %v1227, %v3052
    %v3360 = vmul.f32 %v1228, %v3059
    %v3361 = vmul.f32 %v1229, %v3063
    %v3362 = vmul.f32 %v1230, %v3070
    %v3363 = vmul.f32 %v1231, %v3074
    %v3364 = vmul.f32 %v1232, %v3081
    %v3365 = vmul.f32 %v1233, %v3085
    %v3366 = vmul.f32 %v1234, %v3092
    %v3367 = vmul.f32 %v1235, %v3096
    %v3368 = vmul.f32 %v1236, %v3103
    %v3369 = vmul.f32 %v1237, %v3107
    %v3370 = vmul.f32 %v1238, %v3114
    %v3371 = vmul.f32 %v1239, %v3118
    %v3372 = vmul.f32 %v1240, %v3125
    %v3373 = vmul.f32 %v1241, %v3129
    %v3374 = vmul.f32 %v1242, %v3136
    %v3375 = vmul.f32 %v1243, %v3140
    %v3376 = vmul.f32 %v1244, %v3147
    %v3377 = vmul.f32 %v1245, %v3151
    %v3378 = vmul.f32 %v1246, %v3158
    %v3379 = vmul.f32 %v1247, %v3162
    %v3380 = vmul.f32 %v1248, %v3169
    %v3381 = vmul.f32 %v1249, %v3173
    %v3382 = vmul.f32 %v1250, %v3180
    %v3383 = vmul.f32 %v1251, %v3184
    %v3384 = vmul.f32 %v1252, %v3191
    %v3385 = vmul.f32 %v1253, %v3195
    %v3386 = vmul.f32 %v1254, %v3202
    %v3387 = vmul.f32 %v1255, %v3206
    %v3388 = vmul.f32 %v1256, %v3213
    %v3389 = vmul.f32 %v1257, %v3217
    %v3390 = vmul.f32 %v1258, %v3224
    %v3391 = vmul.f32 %v1259, %v3228
    %v3392 = vmul.f32 %v1260, %v3235
    %v3393 = vmul.f32 %v1261, %v3239
    %v3394 = vmul.f32 %v1262, %v3246
    %v3395 = vmul.f32 %v1263, %v3250
    %v3396 = vmul.f32 %v1264, %v3257
    %v3397 = vmul.f32 %v1265, %v3261
    %v3398 = vmul.f32 %v1266, %v3268
    %v3399 = vmul.f32 %v1267, %v3272
    %v3400 = vmul.f32 %v1268, %v3279
    %v3401 = vmul.f32 %v1269, %v3283
    %v3402 = vmul.f32 %v1270, %v3290
    %v3403 = vmul.f32 %v1271, %v3294
    %v3404 = vmul.f32 %v1272, %v3301
    %v3405 = vmul.f32 %v1273, %v3305
    %v3406 = vmul.f32 %v1274, %v3312
    %v3407 = vmul.f32 %v1275, %v3316
    %v3408 = vmul.f32 %v1276, %v3323
    %v3409 = vmul.f32 %v1277, %v3327
    %v3410 = vmul.f32 %v1278, %v3334
    %v3411 = vmul.f32 %v1279, %v3338
    %v3412 = vmul.f32 %v1280, %v3345
    %v3413 = vmul.f32 %v1281, %v3349
    %v3414 = vld [vmem:[%s2 + $0x1] sm:$0x1]
    %v3415 = vlaneseq
    %v3416 = vshrl.u32 %v3415, 7
    %v3417 = vsub.s32 0, %v3416
    %v3418 = vrot.slane %v3414, %v3417
    %v3419 = vmul.f32 %v3350, %v3418
    %v3420 = vmul.f32 %v3351, %v3418
    %v3421 = vmul.f32 %v3352, %v3418
    %v3422 = vmul.f32 %v3353, %v3418
    %v3423 = vmul.f32 %v3354, %v3418
    %v3424 = vmul.f32 %v3355, %v3418
    %v3425 = vmul.f32 %v3356, %v3418
    %v3426 = vmul.f32 %v3357, %v3418
    %v3427 = vmul.f32 %v3358, %v3418
    %v3428 = vmul.f32 %v3359, %v3418
    %v3429 = vmul.f32 %v3360, %v3418
    %v3430 = vmul.f32 %v3361, %v3418
    %v3431 = vmul.f32 %v3362, %v3418
    %v3432 = vmul.f32 %v3363, %v3418
    %v3433 = vmul.f32 %v3364, %v3418
    %v3434 = vmul.f32 %v3365, %v3418
    %v3435 = vmul.f32 %v3366, %v3418
    %v3436 = vmul.f32 %v3367, %v3418
    %v3437 = vmul.f32 %v3368, %v3418
    %v3438 = vmul.f32 %v3369, %v3418
    %v3439 = vmul.f32 %v3370, %v3418
    %v3440 = vmul.f32 %v3371, %v3418
    %v3441 = vmul.f32 %v3372, %v3418
    %v3442 = vmul.f32 %v3373, %v3418
    %v3443 = vmul.f32 %v3374, %v3418
    %v3444 = vmul.f32 %v3375, %v3418
    %v3445 = vmul.f32 %v3376, %v3418
    %v3446 = vmul.f32 %v3377, %v3418
    %v3447 = vmul.f32 %v3378, %v3418
    %v3448 = vmul.f32 %v3379, %v3418
    %v3449 = vmul.f32 %v3380, %v3418
    %v3450 = vmul.f32 %v3381, %v3418
    %v3451 = vmul.f32 %v3382, %v3418
    %v3452 = vmul.f32 %v3383, %v3418
    %v3453 = vmul.f32 %v3384, %v3418
    %v3454 = vmul.f32 %v3385, %v3418
    %v3455 = vmul.f32 %v3386, %v3418
    %v3456 = vmul.f32 %v3387, %v3418
    %v3457 = vmul.f32 %v3388, %v3418
    %v3458 = vmul.f32 %v3389, %v3418
    %v3459 = vmul.f32 %v3390, %v3418
    %v3460 = vmul.f32 %v3391, %v3418
    %v3461 = vmul.f32 %v3392, %v3418
    %v3462 = vmul.f32 %v3393, %v3418
    %v3463 = vmul.f32 %v3394, %v3418
    %v3464 = vmul.f32 %v3395, %v3418
    %v3465 = vmul.f32 %v3396, %v3418
    %v3466 = vmul.f32 %v3397, %v3418
    %v3467 = vmul.f32 %v3398, %v3418
    %v3468 = vmul.f32 %v3399, %v3418
    %v3469 = vmul.f32 %v3400, %v3418
    %v3470 = vmul.f32 %v3401, %v3418
    %v3471 = vmul.f32 %v3402, %v3418
    %v3472 = vmul.f32 %v3403, %v3418
    %v3473 = vmul.f32 %v3404, %v3418
    %v3474 = vmul.f32 %v3405, %v3418
    %v3475 = vmul.f32 %v3406, %v3418
    %v3476 = vmul.f32 %v3407, %v3418
    %v3477 = vmul.f32 %v3408, %v3418
    %v3478 = vmul.f32 %v3409, %v3418
    %v3479 = vmul.f32 %v3410, %v3418
    %v3480 = vmul.f32 %v3411, %v3418
    %v3481 = vmul.f32 %v3412, %v3418
    %v3482 = vmul.f32 %v3413, %v3418
    %v3483 = vld [vmem:[%s2 + $0x2] sm:$0x1]
    %v3484 = vlaneseq
    %v3485 = vshrl.u32 %v3484, 7
    %v3486 = vsub.s32 0, %v3485
    %v3487 = vrot.slane %v3483, %v3486
    %v3488 = vadd.f32 %v3419, %v3487
    %v3489 = vadd.f32 %v3420, %v3487
    %v3490 = vadd.f32 %v3421, %v3487
    %v3491 = vadd.f32 %v3422, %v3487
    %v3492 = vadd.f32 %v3423, %v3487
    %v3493 = vadd.f32 %v3424, %v3487
    %v3494 = vadd.f32 %v3425, %v3487
    %v3495 = vadd.f32 %v3426, %v3487
    %v3496 = vadd.f32 %v3427, %v3487
    %v3497 = vadd.f32 %v3428, %v3487
    %v3498 = vadd.f32 %v3429, %v3487
    %v3499 = vadd.f32 %v3430, %v3487
    %v3500 = vadd.f32 %v3431, %v3487
    %v3501 = vadd.f32 %v3432, %v3487
    %v3502 = vadd.f32 %v3433, %v3487
    %v3503 = vadd.f32 %v3434, %v3487
    %v3504 = vadd.f32 %v3435, %v3487
    %v3505 = vadd.f32 %v3436, %v3487
    %v3506 = vadd.f32 %v3437, %v3487
    %v3507 = vadd.f32 %v3438, %v3487
    %v3508 = vadd.f32 %v3439, %v3487
    %v3509 = vadd.f32 %v3440, %v3487
    %v3510 = vadd.f32 %v3441, %v3487
    %v3511 = vadd.f32 %v3442, %v3487
    %v3512 = vadd.f32 %v3443, %v3487
    %v3513 = vadd.f32 %v3444, %v3487
    %v3514 = vadd.f32 %v3445, %v3487
    %v3515 = vadd.f32 %v3446, %v3487
    %v3516 = vadd.f32 %v3447, %v3487
    %v3517 = vadd.f32 %v3448, %v3487
    %v3518 = vadd.f32 %v3449, %v3487
    %v3519 = vadd.f32 %v3450, %v3487
    %v3520 = vadd.f32 %v3451, %v3487
    %v3521 = vadd.f32 %v3452, %v3487
    %v3522 = vadd.f32 %v3453, %v3487
    %v3523 = vadd.f32 %v3454, %v3487
    %v3524 = vadd.f32 %v3455, %v3487
    %v3525 = vadd.f32 %v3456, %v3487
    %v3526 = vadd.f32 %v3457, %v3487
    %v3527 = vadd.f32 %v3458, %v3487
    %v3528 = vadd.f32 %v3459, %v3487
    %v3529 = vadd.f32 %v3460, %v3487
    %v3530 = vadd.f32 %v3461, %v3487
    %v3531 = vadd.f32 %v3462, %v3487
    %v3532 = vadd.f32 %v3463, %v3487
    %v3533 = vadd.f32 %v3464, %v3487
    %v3534 = vadd.f32 %v3465, %v3487
    %v3535 = vadd.f32 %v3466, %v3487
    %v3536 = vadd.f32 %v3467, %v3487
    %v3537 = vadd.f32 %v3468, %v3487
    %v3538 = vadd.f32 %v3469, %v3487
    %v3539 = vadd.f32 %v3470, %v3487
    %v3540 = vadd.f32 %v3471, %v3487
    %v3541 = vadd.f32 %v3472, %v3487
    %v3542 = vadd.f32 %v3473, %v3487
    %v3543 = vadd.f32 %v3474, %v3487
    %v3544 = vadd.f32 %v3475, %v3487
    %v3545 = vadd.f32 %v3476, %v3487
    %v3546 = vadd.f32 %v3477, %v3487
    %v3547 = vadd.f32 %v3478, %v3487
    %v3548 = vadd.f32 %v3479, %v3487
    %v3549 = vadd.f32 %v3480, %v3487
    %v3550 = vadd.f32 %v3481, %v3487
    %v3551 = vadd.f32 %v3482, %v3487
    %v3552 = vmax.f32 %v3488, 0.0
    %v3553 = vmax.f32 %v3489, 0.0
    %v3554 = vmax.f32 %v3490, 0.0
    %v3555 = vmax.f32 %v3491, 0.0
    %v3556 = vmax.f32 %v3492, 0.0
    %v3557 = vmax.f32 %v3493, 0.0
    %v3558 = vmax.f32 %v3494, 0.0
    %v3559 = vmax.f32 %v3495, 0.0
    %v3560 = vmax.f32 %v3496, 0.0
    %v3561 = vmax.f32 %v3497, 0.0
    %v3562 = vmax.f32 %v3498, 0.0
    %v3563 = vmax.f32 %v3499, 0.0
    %v3564 = vmax.f32 %v3500, 0.0
    %v3565 = vmax.f32 %v3501, 0.0
    %v3566 = vmax.f32 %v3502, 0.0
    %v3567 = vmax.f32 %v3503, 0.0
    %v3568 = vmax.f32 %v3504, 0.0
    %v3569 = vmax.f32 %v3505, 0.0
    %v3570 = vmax.f32 %v3506, 0.0
    %v3571 = vmax.f32 %v3507, 0.0
    %v3572 = vmax.f32 %v3508, 0.0
    %v3573 = vmax.f32 %v3509, 0.0
    %v3574 = vmax.f32 %v3510, 0.0
    %v3575 = vmax.f32 %v3511, 0.0
    %v3576 = vmax.f32 %v3512, 0.0
    %v3577 = vmax.f32 %v3513, 0.0
    %v3578 = vmax.f32 %v3514, 0.0
    %v3579 = vmax.f32 %v3515, 0.0
    %v3580 = vmax.f32 %v3516, 0.0
    %v3581 = vmax.f32 %v3517, 0.0
    %v3582 = vmax.f32 %v3518, 0.0
    %v3583 = vmax.f32 %v3519, 0.0
    %v3584 = vmax.f32 %v3520, 0.0
    %v3585 = vmax.f32 %v3521, 0.0
    %v3586 = vmax.f32 %v3522, 0.0
    %v3587 = vmax.f32 %v3523, 0.0
    %v3588 = vmax.f32 %v3524, 0.0
    %v3589 = vmax.f32 %v3525, 0.0
    %v3590 = vmax.f32 %v3526, 0.0
    %v3591 = vmax.f32 %v3527, 0.0
    %v3592 = vmax.f32 %v3528, 0.0
    %v3593 = vmax.f32 %v3529, 0.0
    %v3594 = vmax.f32 %v3530, 0.0
    %v3595 = vmax.f32 %v3531, 0.0
    %v3596 = vmax.f32 %v3532, 0.0
    %v3597 = vmax.f32 %v3533, 0.0
    %v3598 = vmax.f32 %v3534, 0.0
    %v3599 = vmax.f32 %v3535, 0.0
    %v3600 = vmax.f32 %v3536, 0.0
    %v3601 = vmax.f32 %v3537, 0.0
    %v3602 = vmax.f32 %v3538, 0.0
    %v3603 = vmax.f32 %v3539, 0.0
    %v3604 = vmax.f32 %v3540, 0.0
    %v3605 = vmax.f32 %v3541, 0.0
    %v3606 = vmax.f32 %v3542, 0.0
    %v3607 = vmax.f32 %v3543, 0.0
    %v3608 = vmax.f32 %v3544, 0.0
    %v3609 = vmax.f32 %v3545, 0.0
    %v3610 = vmax.f32 %v3546, 0.0
    %v3611 = vmax.f32 %v3547, 0.0
    %v3612 = vmax.f32 %v3548, 0.0
    %v3613 = vmax.f32 %v3549, 0.0
    %v3614 = vmax.f32 %v3550, 0.0
    %v3615 = vmax.f32 %v3551, 0.0
    %3616 = vst.msk [vmem:[#allocation2] sm:$0xff] %vm728, %v3552
    %3617 = vst.msk [vmem:[#allocation2 + $0x8] sm:$0xff] %vm728, %v3553
    %3618 = vst.msk [vmem:[#allocation2 + $0x10] sm:$0xff] %vm728, %v3554
    %3619 = vst.msk [vmem:[#allocation2 + $0x18] sm:$0xff] %vm728, %v3555
    %3620 = vst.msk [vmem:[#allocation2 + $0x20] sm:$0xff] %vm728, %v3556
    %3621 = vst.msk [vmem:[#allocation2 + $0x28] sm:$0xff] %vm728, %v3557
    %3622 = vst.msk [vmem:[#allocation2 + $0x30] sm:$0xff] %vm728, %v3558
    %3623 = vst.msk [vmem:[#allocation2 + $0x38] sm:$0xff] %vm728, %v3559
    %3624 = vst.msk [vmem:[#allocation2 + $0x40] sm:$0xff] %vm728, %v3560
    %3625 = vst.msk [vmem:[#allocation2 + $0x48] sm:$0xff] %vm728, %v3561
    %3626 = vst.msk [vmem:[#allocation2 + $0x50] sm:$0xff] %vm728, %v3562
    %3627 = vst.msk [vmem:[#allocation2 + $0x58] sm:$0xff] %vm728, %v3563
    %3628 = vst.msk [vmem:[#allocation2 + $0x60] sm:$0xff] %vm728, %v3564
    %3629 = vst.msk [vmem:[#allocation2 + $0x68] sm:$0xff] %vm728, %v3565
    %3630 = vst.msk [vmem:[#allocation2 + $0x70] sm:$0xff] %vm728, %v3566
    %3631 = vst.msk [vmem:[#allocation2 + $0x78] sm:$0xff] %vm728, %v3567
    %3632 = vst.msk [vmem:[#allocation2 + $0x80] sm:$0xff] %vm728, %v3568
    %3633 = vst.msk [vmem:[#allocation2 + $0x88] sm:$0xff] %vm728, %v3569
    %3634 = vst.msk [vmem:[#allocation2 + $0x90] sm:$0xff] %vm728, %v3570
    %3635 = vst.msk [vmem:[#allocation2 + $0x98] sm:$0xff] %vm728, %v3571
    %3636 = vst.msk [vmem:[#allocation2 + $0xa0] sm:$0xff] %vm728, %v3572
    %3637 = vst.msk [vmem:[#allocation2 + $0xa8] sm:$0xff] %vm728, %v3573
    %3638 = vst.msk [vmem:[#allocation2 + $0xb0] sm:$0xff] %vm728, %v3574
    %3639 = vst.msk [vmem:[#allocation2 + $0xb8] sm:$0xff] %vm728, %v3575
    %3640 = vst.msk [vmem:[#allocation2 + $0xc0] sm:$0xff] %vm728, %v3576
    %3641 = vst.msk [vmem:[#allocation2 + $0xc8] sm:$0xff] %vm728, %v3577
    %3642 = vst.msk [vmem:[#allocation2 + $0xd0] sm:$0xff] %vm728, %v3578
    %3643 = vst.msk [vmem:[#allocation2 + $0xd8] sm:$0xff] %vm728, %v3579
    %3644 = vst.msk [vmem:[#allocation2 + $0xe0] sm:$0xff] %vm728, %v3580
    %3645 = vst.msk [vmem:[#allocation2 + $0xe8] sm:$0xff] %vm728, %v3581
    %3646 = vst.msk [vmem:[#allocation2 + $0xf0] sm:$0xff] %vm728, %v3582
    %3647 = vst.msk [vmem:[#allocation2 + $0xf8] sm:$0xff] %vm728, %v3583
    %3648 = vst.msk [vmem:[#allocation2 + $0x100] sm:$0xff] %vm728, %v3584
    %3649 = vst.msk [vmem:[#allocation2 + $0x108] sm:$0xff] %vm728, %v3585
    %3650 = vst.msk [vmem:[#allocation2 + $0x110] sm:$0xff] %vm728, %v3586
    %3651 = vst.msk [vmem:[#allocation2 + $0x118] sm:$0xff] %vm728, %v3587
    %3652 = vst.msk [vmem:[#allocation2 + $0x120] sm:$0xff] %vm728, %v3588
    %3653 = vst.msk [vmem:[#allocation2 + $0x128] sm:$0xff] %vm728, %v3589
    %3654 = vst.msk [vmem:[#allocation2 + $0x130] sm:$0xff] %vm728, %v3590
    %3655 = vst.msk [vmem:[#allocation2 + $0x138] sm:$0xff] %vm728, %v3591
    %3656 = vst.msk [vmem:[#allocation2 + $0x140] sm:$0xff] %vm728, %v3592
    %3657 = vst.msk [vmem:[#allocation2 + $0x148] sm:$0xff] %vm728, %v3593
    %3658 = vst.msk [vmem:[#allocation2 + $0x150] sm:$0xff] %vm728, %v3594
    %3659 = vst.msk [vmem:[#allocation2 + $0x158] sm:$0xff] %vm728, %v3595
    %3660 = vst.msk [vmem:[#allocation2 + $0x160] sm:$0xff] %vm728, %v3596
    %3661 = vst.msk [vmem:[#allocation2 + $0x168] sm:$0xff] %vm728, %v3597
    %3662 = vst.msk [vmem:[#allocation2 + $0x170] sm:$0xff] %vm728, %v3598
    %3663 = vst.msk [vmem:[#allocation2 + $0x178] sm:$0xff] %vm728, %v3599
    %3664 = vst.msk [vmem:[#allocation2 + $0x180] sm:$0xff] %vm728, %v3600
    %3665 = vst.msk [vmem:[#allocation2 + $0x188] sm:$0xff] %vm728, %v3601
    %3666 = vst.msk [vmem:[#allocation2 + $0x190] sm:$0xff] %vm728, %v3602
    %3667 = vst.msk [vmem:[#allocation2 + $0x198] sm:$0xff] %vm728, %v3603
    %3668 = vst.msk [vmem:[#allocation2 + $0x1a0] sm:$0xff] %vm728, %v3604
    %3669 = vst.msk [vmem:[#allocation2 + $0x1a8] sm:$0xff] %vm728, %v3605
    %3670 = vst.msk [vmem:[#allocation2 + $0x1b0] sm:$0xff] %vm728, %v3606
    %3671 = vst.msk [vmem:[#allocation2 + $0x1b8] sm:$0xff] %vm728, %v3607
    %3672 = vst.msk [vmem:[#allocation2 + $0x1c0] sm:$0xff] %vm728, %v3608
    %3673 = vst.msk [vmem:[#allocation2 + $0x1c8] sm:$0xff] %vm728, %v3609
    %3674 = vst.msk [vmem:[#allocation2 + $0x1d0] sm:$0xff] %vm728, %v3610
    %3675 = vst.msk [vmem:[#allocation2 + $0x1d8] sm:$0xff] %vm728, %v3611
    %3676 = vst.msk [vmem:[#allocation2 + $0x1e0] sm:$0xff] %vm728, %v3612
    %3677 = vst.msk [vmem:[#allocation2 + $0x1e8] sm:$0xff] %vm728, %v3613
    %3678 = vst.msk [vmem:[#allocation2 + $0x1f0] sm:$0xff] %vm728, %v3614
    %3679 = vst.msk [vmem:[#allocation2 + $0x1f8] sm:$0xff] %vm728, %v3615
    // Predicated region
    $region26: #{_pallas_forward.1} parent=1 // pred_check
      _
    $region27: #{_pallas_forward.1} parent=1 // pred_check_branch
      %3681 = sbr.rel (0) target = $region29
    $region28: #{_pallas_forward.1} parent=1 // pred_region
      %s3683 = ssub.s32 8192, 8192
      %3684 = vsyncadd [#allocation3], %s3683
      %s3685 = sshll.u32 [#allocation2], 4
      %s3686 = int_to_ptr.vmem [resolvable:$true] %s3685
      %3691 = dma.vmem_to_hbm [thread:$0]  %s3686, 8192, %s6, [#allocation3], 128, 128, 8
    $region29: #{_pallas_forward.1} parent=1 // pred_fallthru
      _
    // Predicated region
    $region30: #{_pallas_forward.1} parent=1 // pred_check
      _
    $region31: #{_pallas_forward.1} parent=1 // pred_check_branch
      %3693 = sbr.rel (0) target = $region33
    $region32: #{_pallas_forward.1} parent=1 // pred_region
      %3694 = dma.done [#allocation3], 8192
    $region33: #{_pallas_forward.1} parent=1 // pred_fallthru
      _
    %3695 = vsyncpa [#allocation3], 1

</llo_original>
